<compile_context>
chip_gen: v5e
topology: v5e:2x2
jax: 0.10.0
libtpu: 0.0.40
codegen_flags: <defaults>
</compile_context>

<pallas_src>
import math
import functools

import jax
import jax.numpy as jnp
from jax.experimental import pallas as pl
from jax.experimental.pallas import tpu as pltpu

_SQRT_2_OVER_PI = math.sqrt(2.0 / math.pi)


def _gelu_new(x):
    # identical to HuggingFace gelu_new.
    return 0.5 * x * (1.0 + jnp.tanh(_SQRT_2_OVER_PI * (x + 0.044715 * x * x * x)))


def _layer_norm(v, g, b, eps=1e-5):
    mu = jnp.mean(v, axis=-1, keepdims=True)
    var = jnp.mean((v - mu) ** 2, axis=-1, keepdims=True)
    return (v - mu) * jax.lax.rsqrt(var + eps) * g + b


# ----------------------------- kernel -----------------------------

def _block_kernel(n_head, with_scores, scores_dtype,
                  x_ref, amask_ref,
                  ln1g_ref, ln1b_ref,
                  wq_ref, bq_ref, wkv_ref, bkv_ref,
                  wo_ref, bo_ref,
                  ln2g_ref, ln2b_ref,
                  wfc_ref, bfc_ref, wfp_ref, bfp_ref,
                  *refs):
    if with_scores:
        out_ref, scores_ref = refs[0], refs[1]
        k_cache, v_cache, q_scr, ctx_scr = refs[2:]
    else:
        out_ref, scores_ref = refs[0], None
        k_cache, v_cache, q_scr, ctx_scr = refs[1:]

    f32 = jnp.float32
    bf16 = jnp.bfloat16

    H = n_head
    S = x_ref.shape[1]
    D = x_ref.shape[2]
    dk = D // H
    tq = amask_ref.shape[0]          # q-tile rows
    qi = pl.program_id(1)

    # --- once per batch element: full-sequence K / V caches ----------------
    # The q grid axis is "arbitrary" (sequential per core), so qi==0 runs
    # before every other q-tile of the same batch element.
    @pl.when(qi == 0)
    def _():
        nx_all = _layer_norm(x_ref[0], ln1g_ref[...], ln1b_ref[...])   # (S,D)
        kv = jnp.dot(nx_all.astype(bf16), wkv_ref[...],
                     preferred_element_type=f32) + bkv_ref[...]        # (S,2D)
        for h in range(H):                                             # static
            k_cache[h] = kv[:, h * dk:(h + 1) * dk].astype(bf16)
            v_cache[h] = kv[:, D + h * dk:D + (h + 1) * dk].astype(bf16)

    # --------------------------- per q-tile --------------------------------
    row0 = pl.multiple_of(qi * tq, tq)
    x_q = x_ref[0, pl.ds(row0, tq), :]                                 # (tq,D)

    # ln_1 + Q projection (single lane-dense matmul, N = D)
    nx_q = _layer_norm(x_q, ln1g_ref[...], ln1b_ref[...])
    q2d = jnp.dot(nx_q.astype(bf16), wq_ref[...],
                  preferred_element_type=f32) + bq_ref[...]            # (tq,D)
    for h in range(H):
        q_scr[h] = q2d[:, h * dk:(h + 1) * dk].astype(bf16)

    # attention scores for this q-tile against the cached full-sequence K
    s = jnp.einsum("hqd,hkd->hqk", q_scr[...], k_cache[...],
                   preferred_element_type=f32)                         # (H,tq,S)
    s = s * (1.0 / math.sqrt(dk)) + amask_ref[...][None, :, :]

    m = jnp.max(s, axis=-1, keepdims=True)
    e = jnp.exp(s - m)
    p = e * pl.reciprocal(jnp.sum(e, axis=-1, keepdims=True), approx=True)

    if with_scores:
        scores_ref[0] = p.astype(scores_dtype)                         # (H,tq,S)

    # TODO(synk): attention-prob / MLP dropout omitted (eval-mode identity).
    ctx = jnp.einsum("hqk,hkd->hqd", p.astype(bf16), v_cache[...],
                     preferred_element_type=f32)                       # (H,tq,dk)

    # merge heads -> (tq, D) slab, then ONE output projection with K = D
    for h in range(H):
        ctx_scr[:, h * dk:(h + 1) * dk] = ctx[h].astype(bf16)
    a = jnp.dot(ctx_scr[...], wo_ref[...],
                preferred_element_type=f32) + bo_ref[...]
    x1 = x_q + a

    # ---------------------------- ln_2 + MLP --------------------------------
    n2 = _layer_norm(x1, ln2g_ref[...], ln2b_ref[...])
    hdn = _gelu_new(jnp.dot(n2.astype(bf16), wfc_ref[...],
                            preferred_element_type=f32) + bfc_ref[...])
    m_out = jnp.dot(hdn.astype(bf16), wfp_ref[...],
                    preferred_element_type=f32) + bfp_ref[...]
    out_ref[0] = x1 + m_out


# ----------------------------- wrapper -----------------------------

def _pick_tile(S, target):
    """Largest q-tile <= target that divides S and is a multiple of 8."""
    if S <= target:
        return S
    t = (min(target, S) // 8) * 8
    while t >= 8:
        if S % t == 0:
            return t
        t -= 8
    return S


def gpt2_transformer_block(x, mask, params, n_head, *,
                           with_scores=True, q_tile=128,
                           scores_dtype=jnp.bfloat16):
    B, S, D = x.shape
    assert D % n_head == 0, "d_model must be divisible by n_head"
    dk = D // n_head
    f32, bf16 = jnp.float32, jnp.bfloat16

    tq = _pick_tile(S, q_tile)
    nq = S // tq

    # --- pre-pack params (bf16 MXU operands, f32 biases / LN params) -------
    w_qkv = params["w_qkv"]                           # (D, 3D)
    b_qkv = params["b_qkv"]                           # (1, 3D)
    wq = w_qkv[:, :D].astype(bf16)                    # (D, D)
    bq = b_qkv[:, :D].astype(f32)                     # (1, D)
    wkv = w_qkv[:, D:].astype(bf16)                   # (D, 2D)
    bkv = b_qkv[:, D:].astype(f32)                    # (1, 2D)
    wo = params["w_attn_proj"].astype(bf16)           # (D, D)
    bo = params["b_attn_proj"].astype(f32)            # (1, D)
    wfc = params["w_fc"].astype(bf16)                 # (D, F)
    bfc = params["b_fc"].astype(f32)                  # (1, F)
    wfp = params["w_mlp_proj"].astype(bf16)           # (F, D)
    bfp = params["b_mlp_proj"].astype(f32)            # (1, D)
    ln1g, ln1b = params["ln1_g"].astype(f32), params["ln1_b"].astype(f32)
    ln2g, ln2b = params["ln2_g"].astype(f32), params["ln2_b"].astype(f32)

    x = x.astype(f32)
    amask = ((1.0 - mask) * (-10000.0)).astype(f32)   # precomputed additive mask

    # --- generation-aware VMEM budget (v7x 64MiB vs v5e/v6e 128MiB) --------
    try:
        vmem_cap = int(pltpu.get_tpu_info().vmem_capacity_bytes)
    except Exception:
        vmem_cap = 64 * 1024 * 1024
    vmem_limit = min(vmem_cap * 3 // 4, 100 * 1024 * 1024)

    args = (x, amask, ln1g, ln1b, wq, bq, wkv, bkv, wo, bo,
            ln2g, ln2b, wfc, bfc, wfp, bfp)

    out_shape = [jax.ShapeDtypeStruct((B, S, D), f32)]
    out_specs = [pl.BlockSpec((1, tq, D), lambda b, q: (b, q, 0))]
    if with_scores:
        out_shape.append(jax.ShapeDtypeStruct((B, n_head, S, S), scores_dtype))
        out_specs.append(pl.BlockSpec((1, n_head, tq, S),
                                      lambda b, q: (b, 0, q, 0)))

    scratch_shapes = [
        pltpu.VMEM((n_head, S, dk), bf16),   # K cache (full sequence)
        pltpu.VMEM((n_head, S, dk), bf16),   # V cache (full sequence)
        pltpu.VMEM((n_head, tq, dk), bf16),  # per-head Q for this tile
        pltpu.VMEM((tq, D), bf16),           # merged attention context
    ]

    kern = functools.partial(_block_kernel, n_head, with_scores, scores_dtype)

    def build(single_buffer_weights):
        def const_spec(arr):
            nd = arr.ndim
            kw = {"pipeline_mode": pl.Buffered(1)} if single_buffer_weights else {}
            return pl.BlockSpec(arr.shape, lambda b, q, _n=nd: (0,) * _n, **kw)

        in_specs = [
            # x: full sequence per batch element (constant over q -> resident;
            # also feeds the K/V cache pass at qi == 0)
            pl.BlockSpec((1, S, D), lambda b, q: (b, 0, 0)),
            # additive mask: streamed per q-tile
            pl.BlockSpec((tq, S), lambda b, q: (q, 0)),
        ]
        in_specs += [const_spec(a) for a in args[2:]]

        return pl.pallas_call(
            kern,
            grid=(B, nq),
            in_specs=in_specs,
            out_specs=out_specs,
            out_shape=out_shape,
            scratch_shapes=scratch_shapes,
            compiler_params=pltpu.CompilerParams(
                # q axis carries the per-batch K/V cache -> must be "arbitrary";
                # the batch axis shards across megacore.
                dimension_semantics=("parallel", "arbitrary"),
                vmem_limit_bytes=int(vmem_limit)),
        )

    try:
        res = build(True)(*args)        # single-buffered resident weights
    except Exception:
        res = build(False)(*args)       # fallback: default double-buffering

    if with_scores:
        return res[0], res[1]
    return res[0]


# --------------------- pure-JAX reference (for checking) ---------------------

def reference_block(x, mask, params, n_head):
    def layer_norm(v, g, b):
        mu = jnp.mean(v, axis=-1, keepdims=True)
        var = jnp.mean((v - mu) ** 2, axis=-1, keepdims=True)
        return (v - mu) / jnp.sqrt(var + 1e-5) * g + b

    B, S, D = x.shape
    dk = D // n_head
    nx = layer_norm(x, params["ln1_g"][0], params["ln1_b"][0])
    qkv = nx @ params["w_qkv"] + params["b_qkv"][0]
    q, k, v = jnp.split(qkv, 3, axis=-1)

    def split_heads(t):
        return t.reshape(B, S, n_head, dk).transpose(0, 2, 1, 3)

    q, k, v = split_heads(q), split_heads(k), split_heads(v)
    scores = jnp.einsum("bhqd,bhkd->bhqk", q, k) / math.sqrt(dk)
    scores = scores + (1.0 - mask)[None, None] * (-10000.0)
    probs = jax.nn.softmax(scores, axis=-1)
    out = jnp.einsum("bhqk,bhkd->bhqd", probs, v)
    out = out.transpose(0, 2, 1, 3).reshape(B, S, D)
    a = out @ params["w_attn_proj"] + params["b_attn_proj"][0]
    x1 = x + a
    n2 = layer_norm(x1, params["ln2_g"][0], params["ln2_b"][0])
    h = _gelu_new(n2 @ params["w_fc"] + params["b_fc"][0])
    m = h @ params["w_mlp_proj"] + params["b_mlp_proj"][0]
    return x1 + m, probs


# ----------------------------- main -----------------------------

if __name__ == "__main__":
    B, S, D, H, F = 2, 8, 32, 4, 64   # batch, seq, d_model, n_head, dim_feedforward

    key = jax.random.PRNGKey(0)
    keys = jax.random.split(key, 6)

    params = {
        # Conv1D weights: normal(std=0.02), biases zero
        "w_qkv": 0.02 * jax.random.normal(keys[0], (D, 3 * D), jnp.float32),
        "b_qkv": jnp.zeros((1, 3 * D), jnp.float32),
        "w_attn_proj": 0.02 * jax.random.normal(keys[1], (D, D), jnp.float32),
        "b_attn_proj": jnp.zeros((1, D), jnp.float32),
        "w_fc": 0.02 * jax.random.normal(keys[2], (D, F), jnp.float32),
        "b_fc": jnp.zeros((1, F), jnp.float32),
        "w_mlp_proj": 0.02 * jax.random.normal(keys[3], (F, D), jnp.float32),
        "b_mlp_proj": jnp.zeros((1, D), jnp.float32),
        # LayerNorm affine params
        "ln1_g": jnp.ones((1, D), jnp.float32),
        "ln1_b": jnp.zeros((1, D), jnp.float32),
        "ln2_g": jnp.ones((1, D), jnp.float32),
        "ln2_b": jnp.zeros((1, D), jnp.float32),
    }

    x = jax.random.normal(keys[4], (B, S, D), jnp.float32)
    # causal (look-ahead) mask: 1 = attend, 0 = blocked
    mask = jnp.tril(jnp.ones((S, S), jnp.float32))

    out, scores = gpt2_transformer_block(x, mask, params, n_head=H,
                                         with_scores=True)
    jax.block_until_ready((out, scores))

    ref_out, ref_scores = reference_block(x, mask, params, n_head=H)
    # bf16 MXU operands + bf16 probs output -> loose tolerances.
    assert jnp.allclose(out, ref_out, atol=2e-2, rtol=2e-2), \
        float(jnp.max(jnp.abs(out - ref_out)))
    assert jnp.allclose(scores.astype(jnp.float32), ref_scores,
                        atol=2e-2, rtol=2e-2), \
        float(jnp.max(jnp.abs(scores.astype(jnp.float32) - ref_scores)))

    # Scores-free fast path (skips the (B,H,S,S) probs writeback entirely).
    out_only = gpt2_transformer_block(x, mask, params, n_head=H,
                                      with_scores=False)
    jax.block_until_ready(out_only)
    assert jnp.allclose(out_only, out, atol=1e-5, rtol=1e-5)

    print("KERNEL_OK")
</pallas_src>

<mosaic_0001>
module attributes {stable_mosaic.version = 11 : i64} {
  func.func @_block_kernel(%arg0: i32, %arg1: i32, %arg2: memref<1x8x32xf32, #tpu.memory_space<vmem>>, %arg3: memref<8x8xf32, #tpu.memory_space<vmem>>, %arg4: memref<1x32xf32, #tpu.memory_space<vmem>>, %arg5: memref<1x32xf32, #tpu.memory_space<vmem>>, %arg6: memref<32x32xbf16, #tpu.memory_space<vmem>>, %arg7: memref<1x32xf32, #tpu.memory_space<vmem>>, %arg8: memref<32x64xbf16, #tpu.memory_space<vmem>>, %arg9: memref<1x64xf32, #tpu.memory_space<vmem>>, %arg10: memref<32x32xbf16, #tpu.memory_space<vmem>>, %arg11: memref<1x32xf32, #tpu.memory_space<vmem>>, %arg12: memref<1x32xf32, #tpu.memory_space<vmem>>, %arg13: memref<1x32xf32, #tpu.memory_space<vmem>>, %arg14: memref<32x64xbf16, #tpu.memory_space<vmem>>, %arg15: memref<1x64xf32, #tpu.memory_space<vmem>>, %arg16: memref<64x32xbf16, #tpu.memory_space<vmem>>, %arg17: memref<1x32xf32, #tpu.memory_space<vmem>>, %arg18: memref<1x8x32xf32, #tpu.memory_space<vmem>>, %arg19: memref<1x4x8x8xbf16, #tpu.memory_space<vmem>>, %arg20: memref<4x8x8xbf16, #tpu.memory_space<vmem>>, %arg21: memref<4x8x8xbf16, #tpu.memory_space<vmem>>, %arg22: memref<4x8x8xbf16, #tpu.memory_space<vmem>>, %arg23: memref<8x32xbf16, #tpu.memory_space<vmem>>) attributes {dimension_semantics = [#tpu.dimension_semantics<parallel>, #tpu.dimension_semantics<arbitrary>], iteration_bounds = array<i64: 2, 1>, scalar_prefetch = 0 : i64, scratch_operands = 4 : i64, tpu.core_type = #tpu.core_type<tc>, window_params = [{transform_indices = @transform_0, window_bounds = array<i64: 1, 8, 32>}, {transform_indices = @transform_1, window_bounds = array<i64: 8, 8>}, {pipeline_mode = #tpu.pipeline_mode<synchronous>, transform_indices = @transform_2, window_bounds = array<i64: 1, 32>}, {pipeline_mode = #tpu.pipeline_mode<synchronous>, transform_indices = @transform_3, window_bounds = array<i64: 1, 32>}, {pipeline_mode = #tpu.pipeline_mode<synchronous>, transform_indices = @transform_4, window_bounds = array<i64: 32, 32>}, {pipeline_mode = #tpu.pipeline_mode<synchronous>, transform_indices = @transform_5, window_bounds = array<i64: 1, 32>}, {pipeline_mode = #tpu.pipeline_mode<synchronous>, transform_indices = @transform_6, window_bounds = array<i64: 32, 64>}, {pipeline_mode = #tpu.pipeline_mode<synchronous>, transform_indices = @transform_7, window_bounds = array<i64: 1, 64>}, {pipeline_mode = #tpu.pipeline_mode<synchronous>, transform_indices = @transform_8, window_bounds = array<i64: 32, 32>}, {pipeline_mode = #tpu.pipeline_mode<synchronous>, transform_indices = @transform_9, window_bounds = array<i64: 1, 32>}, {pipeline_mode = #tpu.pipeline_mode<synchronous>, transform_indices = @transform_10, window_bounds = array<i64: 1, 32>}, {pipeline_mode = #tpu.pipeline_mode<synchronous>, transform_indices = @transform_11, window_bounds = array<i64: 1, 32>}, {pipeline_mode = #tpu.pipeline_mode<synchronous>, transform_indices = @transform_12, window_bounds = array<i64: 32, 64>}, {pipeline_mode = #tpu.pipeline_mode<synchronous>, transform_indices = @transform_13, window_bounds = array<i64: 1, 64>}, {pipeline_mode = #tpu.pipeline_mode<synchronous>, transform_indices = @transform_14, window_bounds = array<i64: 64, 32>}, {pipeline_mode = #tpu.pipeline_mode<synchronous>, transform_indices = @transform_15, window_bounds = array<i64: 1, 32>}, {transform_indices = @transform_16, window_bounds = array<i64: 1, 8, 32>}, {transform_indices = @transform_17, window_bounds = array<i64: 1, 4, 8, 8>}]} {
    %c0_i32 = arith.constant 0 : i32
    %0 = arith.cmpi eq, %arg1, %c0_i32 : i32
    %1 = arith.extui %0 : i1 to i32
    %c0_i32_0 = arith.constant 0 : i32
    %2 = arith.cmpi ne, %1, %c0_i32_0 : i32
    scf.if %2 {
      %c0_82 = arith.constant 0 : index
      %c0_83 = arith.constant 0 : index
      %c0_84 = arith.constant 0 : index
      %160 = vector.load %arg2[%c0_82, %c0_83, %c0_84] : memref<1x8x32xf32, #tpu.memory_space<vmem>>, vector<1x8x32xf32>
      %161 = vector.shape_cast %160 : vector<1x8x32xf32> to vector<8x32xf32>
      %c0_85 = arith.constant 0 : index
      %c0_86 = arith.constant 0 : index
      %162 = vector.load %arg4[%c0_85, %c0_86] : memref<1x32xf32, #tpu.memory_space<vmem>>, vector<1x32xf32>
      %c0_87 = arith.constant 0 : index
      %c0_88 = arith.constant 0 : index
      %163 = vector.load %arg5[%c0_87, %c0_88] : memref<1x32xf32, #tpu.memory_space<vmem>>, vector<1x32xf32>
      %cst_89 = arith.constant dense<0.000000e+00> : vector<8xf32>
      %164 = vector.multi_reduction <add>, %161, %cst_89 [1] : vector<8x32xf32> to vector<8xf32>
      %165 = vector.shape_cast %164 : vector<8xf32> to vector<8x1xf32>
      %cst_90 = arith.constant 3.200000e+01 : f32
      %166 = vector.broadcast %cst_90 : f32 to vector<8x1xf32>
      %167 = arith.divf %165, %166 : vector<8x1xf32>
      %168 = vector.broadcast %167 : vector<8x1xf32> to vector<8x32xf32>
      %169 = arith.subf %161, %168 : vector<8x32xf32>
      %170 = arith.mulf %169, %169 : vector<8x32xf32>
      %cst_91 = arith.constant dense<0.000000e+00> : vector<8xf32>
      %171 = vector.multi_reduction <add>, %170, %cst_91 [1] : vector<8x32xf32> to vector<8xf32>
      %172 = vector.shape_cast %171 : vector<8xf32> to vector<8x1xf32>
      %cst_92 = arith.constant 3.200000e+01 : f32
      %173 = vector.broadcast %cst_92 : f32 to vector<8x1xf32>
      %174 = arith.divf %172, %173 : vector<8x1xf32>
      %175 = vector.broadcast %167 : vector<8x1xf32> to vector<8x32xf32>
      %176 = arith.subf %161, %175 : vector<8x32xf32>
      %cst_93 = arith.constant 9.99999974E-6 : f32
      %177 = vector.broadcast %cst_93 : f32 to vector<8x1xf32>
      %178 = arith.addf %174, %177 : vector<8x1xf32>
      %179 = math.rsqrt %178 : vector<8x1xf32>
      %180 = vector.broadcast %179 : vector<8x1xf32> to vector<8x32xf32>
      %181 = arith.mulf %176, %180 : vector<8x32xf32>
      %182 = vector.broadcast %162 : vector<1x32xf32> to vector<8x32xf32>
      %183 = arith.mulf %181, %182 : vector<8x32xf32>
      %184 = vector.broadcast %163 : vector<1x32xf32> to vector<8x32xf32>
      %185 = arith.addf %183, %184 : vector<8x32xf32>
      %186 = arith.truncf %185 : vector<8x32xf32> to vector<8x32xbf16>
      %c0_94 = arith.constant 0 : index
      %c0_95 = arith.constant 0 : index
      %187 = vector.load %arg8[%c0_94, %c0_95] : memref<32x64xbf16, #tpu.memory_space<vmem>>, vector<32x64xbf16>
      %cst_96 = arith.constant dense<0.000000e+00> : vector<8x64xf32>
      %188 = tpu.matmul %186, %187, %cst_96 {dimension_numbers = #tpu.dot_dimension_numbers<[1], [0], [0], [1], [0, 0, 1, 1], [], []>} : vector<8x32xbf16>, vector<32x64xbf16>, vector<8x64xf32> -> vector<8x64xf32>
      %c0_97 = arith.constant 0 : index
      %c0_98 = arith.constant 0 : index
      %189 = vector.load %arg9[%c0_97, %c0_98] : memref<1x64xf32, #tpu.memory_space<vmem>>, vector<1x64xf32>
      %190 = vector.broadcast %189 : vector<1x64xf32> to vector<8x64xf32>
      %191 = arith.addf %188, %190 : vector<8x64xf32>
      %192 = vector.extract_strided_slice %191 {offsets = [0, 0], sizes = [8, 8], strides = [1, 1]} : vector<8x64xf32> to vector<8x8xf32>
      %193 = arith.truncf %192 : vector<8x8xf32> to vector<8x8xbf16>
      %c0_99 = arith.constant 0 : index
      %c0_100 = arith.constant 0 : index
      %c0_101 = arith.constant 0 : index
      %194 = vector.load %arg20[%c0_99, %c0_100, %c0_101] : memref<4x8x8xbf16, #tpu.memory_space<vmem>>, vector<1x8x8xbf16>
      %195 = vector.shape_cast %194 : vector<1x8x8xbf16> to vector<8x8xbf16>
      %196 = vector.shape_cast %193 : vector<8x8xbf16> to vector<1x8x8xbf16>
      tpu.vector_store %arg20[%c0_99, %c0_100, %c0_101], %196 {strides = array<i32>} : memref<4x8x8xbf16, #tpu.memory_space<vmem>>, vector<1x8x8xbf16>,
      %197 = vector.extract_strided_slice %191 {offsets = [0, 32], sizes = [8, 8], strides = [1, 1]} : vector<8x64xf32> to vector<8x8xf32>
      %198 = arith.truncf %197 : vector<8x8xf32> to vector<8x8xbf16>
      %c0_102 = arith.constant 0 : index
      %c0_103 = arith.constant 0 : index
      %c0_104 = arith.constant 0 : index
      %199 = vector.load %arg21[%c0_102, %c0_103, %c0_104] : memref<4x8x8xbf16, #tpu.memory_space<vmem>>, vector<1x8x8xbf16>
      %200 = vector.shape_cast %199 : vector<1x8x8xbf16> to vector<8x8xbf16>
      %201 = vector.shape_cast %198 : vector<8x8xbf16> to vector<1x8x8xbf16>
      tpu.vector_store %arg21[%c0_102, %c0_103, %c0_104], %201 {strides = array<i32>} : memref<4x8x8xbf16, #tpu.memory_space<vmem>>, vector<1x8x8xbf16>,
      %202 = vector.extract_strided_slice %191 {offsets = [0, 8], sizes = [8, 8], strides = [1, 1]} : vector<8x64xf32> to vector<8x8xf32>
      %203 = arith.truncf %202 : vector<8x8xf32> to vector<8x8xbf16>
      %c1_105 = arith.constant 1 : index
      %c0_106 = arith.constant 0 : index
      %c0_107 = arith.constant 0 : index
      %204 = vector.load %arg20[%c1_105, %c0_106, %c0_107] : memref<4x8x8xbf16, #tpu.memory_space<vmem>>, vector<1x8x8xbf16>
      %205 = vector.shape_cast %204 : vector<1x8x8xbf16> to vector<8x8xbf16>
      %206 = vector.shape_cast %203 : vector<8x8xbf16> to vector<1x8x8xbf16>
      tpu.vector_store %arg20[%c1_105, %c0_106, %c0_107], %206 {strides = array<i32>} : memref<4x8x8xbf16, #tpu.memory_space<vmem>>, vector<1x8x8xbf16>,
      %207 = vector.extract_strided_slice %191 {offsets = [0, 40], sizes = [8, 8], strides = [1, 1]} : vector<8x64xf32> to vector<8x8xf32>
      %208 = arith.truncf %207 : vector<8x8xf32> to vector<8x8xbf16>
      %c1_108 = arith.constant 1 : index
      %c0_109 = arith.constant 0 : index
      %c0_110 = arith.constant 0 : index
      %209 = vector.load %arg21[%c1_108, %c0_109, %c0_110] : memref<4x8x8xbf16, #tpu.memory_space<vmem>>, vector<1x8x8xbf16>
      %210 = vector.shape_cast %209 : vector<1x8x8xbf16> to vector<8x8xbf16>
      %211 = vector.shape_cast %208 : vector<8x8xbf16> to vector<1x8x8xbf16>
      tpu.vector_store %arg21[%c1_108, %c0_109, %c0_110], %211 {strides = array<i32>} : memref<4x8x8xbf16, #tpu.memory_space<vmem>>, vector<1x8x8xbf16>,
      %212 = vector.extract_strided_slice %191 {offsets = [0, 16], sizes = [8, 8], strides = [1, 1]} : vector<8x64xf32> to vector<8x8xf32>
      %213 = arith.truncf %212 : vector<8x8xf32> to vector<8x8xbf16>
      %c2_111 = arith.constant 2 : index
      %c0_112 = arith.constant 0 : index
      %c0_113 = arith.constant 0 : index
      %214 = vector.load %arg20[%c2_111, %c0_112, %c0_113] : memref<4x8x8xbf16, #tpu.memory_space<vmem>>, vector<1x8x8xbf16>
      %215 = vector.shape_cast %214 : vector<1x8x8xbf16> to vector<8x8xbf16>
      %216 = vector.shape_cast %213 : vector<8x8xbf16> to vector<1x8x8xbf16>
      tpu.vector_store %arg20[%c2_111, %c0_112, %c0_113], %216 {strides = array<i32>} : memref<4x8x8xbf16, #tpu.memory_space<vmem>>, vector<1x8x8xbf16>,
      %217 = vector.extract_strided_slice %191 {offsets = [0, 48], sizes = [8, 8], strides = [1, 1]} : vector<8x64xf32> to vector<8x8xf32>
      %218 = arith.truncf %217 : vector<8x8xf32> to vector<8x8xbf16>
      %c2_114 = arith.constant 2 : index
      %c0_115 = arith.constant 0 : index
      %c0_116 = arith.constant 0 : index
      %219 = vector.load %arg21[%c2_114, %c0_115, %c0_116] : memref<4x8x8xbf16, #tpu.memory_space<vmem>>, vector<1x8x8xbf16>
      %220 = vector.shape_cast %219 : vector<1x8x8xbf16> to vector<8x8xbf16>
      %221 = vector.shape_cast %218 : vector<8x8xbf16> to vector<1x8x8xbf16>
      tpu.vector_store %arg21[%c2_114, %c0_115, %c0_116], %221 {strides = array<i32>} : memref<4x8x8xbf16, #tpu.memory_space<vmem>>, vector<1x8x8xbf16>,
      %222 = vector.extract_strided_slice %191 {offsets = [0, 24], sizes = [8, 8], strides = [1, 1]} : vector<8x64xf32> to vector<8x8xf32>
      %223 = arith.truncf %222 : vector<8x8xf32> to vector<8x8xbf16>
      %c3_117 = arith.constant 3 : index
      %c0_118 = arith.constant 0 : index
      %c0_119 = arith.constant 0 : index
      %224 = vector.load %arg20[%c3_117, %c0_118, %c0_119] : memref<4x8x8xbf16, #tpu.memory_space<vmem>>, vector<1x8x8xbf16>
      %225 = vector.shape_cast %224 : vector<1x8x8xbf16> to vector<8x8xbf16>
      %226 = vector.shape_cast %223 : vector<8x8xbf16> to vector<1x8x8xbf16>
      tpu.vector_store %arg20[%c3_117, %c0_118, %c0_119], %226 {strides = array<i32>} : memref<4x8x8xbf16, #tpu.memory_space<vmem>>, vector<1x8x8xbf16>,
      %227 = vector.extract_strided_slice %191 {offsets = [0, 56], sizes = [8, 8], strides = [1, 1]} : vector<8x64xf32> to vector<8x8xf32>
      %228 = arith.truncf %227 : vector<8x8xf32> to vector<8x8xbf16>
      %c3_120 = arith.constant 3 : index
      %c0_121 = arith.constant 0 : index
      %c0_122 = arith.constant 0 : index
      %229 = vector.load %arg21[%c3_120, %c0_121, %c0_122] : memref<4x8x8xbf16, #tpu.memory_space<vmem>>, vector<1x8x8xbf16>
      %230 = vector.shape_cast %229 : vector<1x8x8xbf16> to vector<8x8xbf16>
      %231 = vector.shape_cast %228 : vector<8x8xbf16> to vector<1x8x8xbf16>
      tpu.vector_store %arg21[%c3_120, %c0_121, %c0_122], %231 {strides = array<i32>} : memref<4x8x8xbf16, #tpu.memory_space<vmem>>, vector<1x8x8xbf16>,
    } else {
    }
    %c8_i32 = arith.constant 8 : i32
    %3 = arith.muli %arg1, %c8_i32 : i32
    %4 = tpu.assume_multiple %3, 8 : i32
    %c0 = arith.constant 0 : index
    %5 = arith.index_cast %4 : i32 to index
    %c0_1 = arith.constant 0 : index
    %6 = vector.load %arg2[%c0, %5, %c0_1] : memref<1x8x32xf32, #tpu.memory_space<vmem>>, vector<1x8x32xf32>
    %7 = vector.shape_cast %6 : vector<1x8x32xf32> to vector<8x32xf32>
    %c0_2 = arith.constant 0 : index
    %c0_3 = arith.constant 0 : index
    %8 = vector.load %arg4[%c0_2, %c0_3] : memref<1x32xf32, #tpu.memory_space<vmem>>, vector<1x32xf32>
    %c0_4 = arith.constant 0 : index
    %c0_5 = arith.constant 0 : index
    %9 = vector.load %arg5[%c0_4, %c0_5] : memref<1x32xf32, #tpu.memory_space<vmem>>, vector<1x32xf32>
    %cst = arith.constant dense<0.000000e+00> : vector<8xf32>
    %10 = vector.multi_reduction <add>, %7, %cst [1] : vector<8x32xf32> to vector<8xf32>
    %11 = vector.shape_cast %10 : vector<8xf32> to vector<8x1xf32>
    %cst_6 = arith.constant 3.200000e+01 : f32
    %12 = vector.broadcast %cst_6 : f32 to vector<8x1xf32>
    %13 = arith.divf %11, %12 : vector<8x1xf32>
    %14 = vector.broadcast %13 : vector<8x1xf32> to vector<8x32xf32>
    %15 = arith.subf %7, %14 : vector<8x32xf32>
    %16 = arith.mulf %15, %15 : vector<8x32xf32>
    %cst_7 = arith.constant dense<0.000000e+00> : vector<8xf32>
    %17 = vector.multi_reduction <add>, %16, %cst_7 [1] : vector<8x32xf32> to vector<8xf32>
    %18 = vector.shape_cast %17 : vector<8xf32> to vector<8x1xf32>
    %cst_8 = arith.constant 3.200000e+01 : f32
    %19 = vector.broadcast %cst_8 : f32 to vector<8x1xf32>
    %20 = arith.divf %18, %19 : vector<8x1xf32>
    %21 = vector.broadcast %13 : vector<8x1xf32> to vector<8x32xf32>
    %22 = arith.subf %7, %21 : vector<8x32xf32>
    %cst_9 = arith.constant 9.99999974E-6 : f32
    %23 = vector.broadcast %cst_9 : f32 to vector<8x1xf32>
    %24 = arith.addf %20, %23 : vector<8x1xf32>
    %25 = math.rsqrt %24 : vector<8x1xf32>
    %26 = vector.broadcast %25 : vector<8x1xf32> to vector<8x32xf32>
    %27 = arith.mulf %22, %26 : vector<8x32xf32>
    %28 = vector.broadcast %8 : vector<1x32xf32> to vector<8x32xf32>
    %29 = arith.mulf %27, %28 : vector<8x32xf32>
    %30 = vector.broadcast %9 : vector<1x32xf32> to vector<8x32xf32>
    %31 = arith.addf %29, %30 : vector<8x32xf32>
    %32 = arith.truncf %31 : vector<8x32xf32> to vector<8x32xbf16>
    %c0_10 = arith.constant 0 : index
    %c0_11 = arith.constant 0 : index
    %33 = vector.load %arg6[%c0_10, %c0_11] : memref<32x32xbf16, #tpu.memory_space<vmem>>, vector<32x32xbf16>
    %cst_12 = arith.constant dense<0.000000e+00> : vector<8x32xf32>
    %34 = tpu.matmul %32, %33, %cst_12 {dimension_numbers = #tpu.dot_dimension_numbers<[1], [0], [0], [1], [0, 0, 1, 1], [], []>} : vector<8x32xbf16>, vector<32x32xbf16>, vector<8x32xf32> -> vector<8x32xf32>
    %c0_13 = arith.constant 0 : index
    %c0_14 = arith.constant 0 : index
    %35 = vector.load %arg7[%c0_13, %c0_14] : memref<1x32xf32, #tpu.memory_space<vmem>>, vector<1x32xf32>
    %36 = vector.broadcast %35 : vector<1x32xf32> to vector<8x32xf32>
    %37 = arith.addf %34, %36 : vector<8x32xf32>
    %38 = vector.extract_strided_slice %37 {offsets = [0, 0], sizes = [8, 8], strides = [1, 1]} : vector<8x32xf32> to vector<8x8xf32>
    %39 = arith.truncf %38 : vector<8x8xf32> to vector<8x8xbf16>
    %c0_15 = arith.constant 0 : index
    %c0_16 = arith.constant 0 : index
    %c0_17 = arith.constant 0 : index
    %40 = vector.load %arg22[%c0_15, %c0_16, %c0_17] : memref<4x8x8xbf16, #tpu.memory_space<vmem>>, vector<1x8x8xbf16>
    %41 = vector.shape_cast %40 : vector<1x8x8xbf16> to vector<8x8xbf16>
    %42 = vector.shape_cast %39 : vector<8x8xbf16> to vector<1x8x8xbf16>
    tpu.vector_store %arg22[%c0_15, %c0_16, %c0_17], %42 {strides = array<i32>} : memref<4x8x8xbf16, #tpu.memory_space<vmem>>, vector<1x8x8xbf16>,
    %43 = vector.extract_strided_slice %37 {offsets = [0, 8], sizes = [8, 8], strides = [1, 1]} : vector<8x32xf32> to vector<8x8xf32>
    %44 = arith.truncf %43 : vector<8x8xf32> to vector<8x8xbf16>
    %c1 = arith.constant 1 : index
    %c0_18 = arith.constant 0 : index
    %c0_19 = arith.constant 0 : index
    %45 = vector.load %arg22[%c1, %c0_18, %c0_19] : memref<4x8x8xbf16, #tpu.memory_space<vmem>>, vector<1x8x8xbf16>
    %46 = vector.shape_cast %45 : vector<1x8x8xbf16> to vector<8x8xbf16>
    %47 = vector.shape_cast %44 : vector<8x8xbf16> to vector<1x8x8xbf16>
    tpu.vector_store %arg22[%c1, %c0_18, %c0_19], %47 {strides = array<i32>} : memref<4x8x8xbf16, #tpu.memory_space<vmem>>, vector<1x8x8xbf16>,
    %48 = vector.extract_strided_slice %37 {offsets = [0, 16], sizes = [8, 8], strides = [1, 1]} : vector<8x32xf32> to vector<8x8xf32>
    %49 = arith.truncf %48 : vector<8x8xf32> to vector<8x8xbf16>
    %c2 = arith.constant 2 : index
    %c0_20 = arith.constant 0 : index
    %c0_21 = arith.constant 0 : index
    %50 = vector.load %arg22[%c2, %c0_20, %c0_21] : memref<4x8x8xbf16, #tpu.memory_space<vmem>>, vector<1x8x8xbf16>
    %51 = vector.shape_cast %50 : vector<1x8x8xbf16> to vector<8x8xbf16>
    %52 = vector.shape_cast %49 : vector<8x8xbf16> to vector<1x8x8xbf16>
    tpu.vector_store %arg22[%c2, %c0_20, %c0_21], %52 {strides = array<i32>} : memref<4x8x8xbf16, #tpu.memory_space<vmem>>, vector<1x8x8xbf16>,
    %53 = vector.extract_strided_slice %37 {offsets = [0, 24], sizes = [8, 8], strides = [1, 1]} : vector<8x32xf32> to vector<8x8xf32>
    %54 = arith.truncf %53 : vector<8x8xf32> to vector<8x8xbf16>
    %c3 = arith.constant 3 : index
    %c0_22 = arith.constant 0 : index
    %c0_23 = arith.constant 0 : index
    %55 = vector.load %arg22[%c3, %c0_22, %c0_23] : memref<4x8x8xbf16, #tpu.memory_space<vmem>>, vector<1x8x8xbf16>
    %56 = vector.shape_cast %55 : vector<1x8x8xbf16> to vector<8x8xbf16>
    %57 = vector.shape_cast %54 : vector<8x8xbf16> to vector<1x8x8xbf16>
    tpu.vector_store %arg22[%c3, %c0_22, %c0_23], %57 {strides = array<i32>} : memref<4x8x8xbf16, #tpu.memory_space<vmem>>, vector<1x8x8xbf16>,
    %c0_24 = arith.constant 0 : index
    %c0_25 = arith.constant 0 : index
    %c0_26 = arith.constant 0 : index
    %58 = vector.load %arg22[%c0_24, %c0_25, %c0_26] : memref<4x8x8xbf16, #tpu.memory_space<vmem>>, vector<4x8x8xbf16>
    %c0_27 = arith.constant 0 : index
    %c0_28 = arith.constant 0 : index
    %c0_29 = arith.constant 0 : index
    %59 = vector.load %arg20[%c0_27, %c0_28, %c0_29] : memref<4x8x8xbf16, #tpu.memory_space<vmem>>, vector<4x8x8xbf16>
    "tpu.trace_start"() <{level = 10 : i32, message = "hqd,hkd->hqk"}> : () -> ()
    %cst_30 = arith.constant dense<0.000000e+00> : vector<4x8x8xf32>
    %60 = tpu.matmul %58, %59, %cst_30 {dimension_numbers = #tpu.dot_dimension_numbers<[2], [2], [1], [1], [0, 0, 0, 1, 1, 1], [0], [0]>} : vector<4x8x8xbf16>, vector<4x8x8xbf16>, vector<4x8x8xf32> -> vector<4x8x8xf32>
    "tpu.trace_stop"() : () -> ()
    %cst_31 = arith.constant 0.353553385 : f32
    %61 = vector.broadcast %cst_31 : f32 to vector<4x8x8xf32>
    %62 = arith.mulf %60, %61 : vector<4x8x8xf32>
    %c0_32 = arith.constant 0 : index
    %c0_33 = arith.constant 0 : index
    %63 = vector.load %arg3[%c0_32, %c0_33] : memref<8x8xf32, #tpu.memory_space<vmem>>, vector<8x8xf32>
    %64 = vector.shape_cast %63 : vector<8x8xf32> to vector<1x8x8xf32>
    %65 = vector.broadcast %64 : vector<1x8x8xf32> to vector<4x8x8xf32>
    %66 = arith.addf %62, %65 : vector<4x8x8xf32>
    %cst_34 = arith.constant dense<0xFF800000> : vector<4x8xf32>
    %67 = vector.multi_reduction <maximumf>, %66, %cst_34 [2] : vector<4x8x8xf32> to vector<4x8xf32>
    %68 = vector.shape_cast %67 : vector<4x8xf32> to vector<4x8x1xf32>
    %69 = vector.broadcast %68 : vector<4x8x1xf32> to vector<4x8x8xf32>
    %70 = arith.subf %66, %69 : vector<4x8x8xf32>
    %71 = math.exp %70 : vector<4x8x8xf32>
    %cst_35 = arith.constant dense<0.000000e+00> : vector<4x8xf32>
    %72 = vector.multi_reduction <add>, %71, %cst_35 [2] : vector<4x8x8xf32> to vector<4x8xf32>
    %73 = vector.shape_cast %72 : vector<4x8xf32> to vector<4x8x1xf32>
    %74 = tpu.reciprocal %73 {approx = true} : vector<4x8x1xf32> -> vector<4x8x1xf32>
    %75 = vector.broadcast %74 : vector<4x8x1xf32> to vector<4x8x8xf32>
    %76 = arith.mulf %71, %75 : vector<4x8x8xf32>
    %77 = arith.truncf %76 : vector<4x8x8xf32> to vector<4x8x8xbf16>
    %c0_36 = arith.constant 0 : index
    %c0_37 = arith.constant 0 : index
    %c0_38 = arith.constant 0 : index
    %c0_39 = arith.constant 0 : index
    %78 = vector.load %arg19[%c0_36, %c0_37, %c0_38, %c0_39] : memref<1x4x8x8xbf16, #tpu.memory_space<vmem>>, vector<1x4x8x8xbf16>
    %79 = vector.shape_cast %78 : vector<1x4x8x8xbf16> to vector<4x8x8xbf16>
    %80 = vector.shape_cast %77 : vector<4x8x8xbf16> to vector<1x4x8x8xbf16>
    tpu.vector_store %arg19[%c0_36, %c0_37, %c0_38, %c0_39], %80 {strides = array<i32>} : memref<1x4x8x8xbf16, #tpu.memory_space<vmem>>, vector<1x4x8x8xbf16>,
    %81 = arith.truncf %76 : vector<4x8x8xf32> to vector<4x8x8xbf16>
    %c0_40 = arith.constant 0 : index
    %c0_41 = arith.constant 0 : index
    %c0_42 = arith.constant 0 : index
    %82 = vector.load %arg21[%c0_40, %c0_41, %c0_42] : memref<4x8x8xbf16, #tpu.memory_space<vmem>>, vector<4x8x8xbf16>
    "tpu.trace_start"() <{level = 10 : i32, message = "hqk,hkd->hqd"}> : () -> ()
    %cst_43 = arith.constant dense<0.000000e+00> : vector<4x8x8xf32>
    %83 = tpu.matmul %81, %82, %cst_43 {dimension_numbers = #tpu.dot_dimension_numbers<[2], [1], [1], [2], [0, 0, 0, 1, 1, 2], [0], [0]>} : vector<4x8x8xbf16>, vector<4x8x8xbf16>, vector<4x8x8xf32> -> vector<4x8x8xf32>
    "tpu.trace_stop"() : () -> ()
    %84 = vector.extract_strided_slice %83 {offsets = [0, 0, 0], sizes = [1, 8, 8], strides = [1, 1, 1]} : vector<4x8x8xf32> to vector<1x8x8xf32>
    %85 = vector.shape_cast %84 : vector<1x8x8xf32> to vector<8x8xf32>
    %86 = arith.truncf %85 : vector<8x8xf32> to vector<8x8xbf16>
    %c0_44 = arith.constant 0 : index
    %c0_45 = arith.constant 0 : index
    %87 = vector.load %arg23[%c0_44, %c0_45] : memref<8x32xbf16, #tpu.memory_space<vmem>>, vector<8x8xbf16>
    tpu.vector_store %arg23[%c0_44, %c0_45], %86 {strides = array<i32>} : memref<8x32xbf16, #tpu.memory_space<vmem>>, vector<8x8xbf16>,
    %88 = vector.extract_strided_slice %83 {offsets = [1, 0, 0], sizes = [1, 8, 8], strides = [1, 1, 1]} : vector<4x8x8xf32> to vector<1x8x8xf32>
    %89 = vector.shape_cast %88 : vector<1x8x8xf32> to vector<8x8xf32>
    %90 = arith.truncf %89 : vector<8x8xf32> to vector<8x8xbf16>
    %c0_46 = arith.constant 0 : index
    %c8 = arith.constant 8 : index
    %91 = vector.load %arg23[%c0_46, %c8] : memref<8x32xbf16, #tpu.memory_space<vmem>>, vector<8x8xbf16>
    tpu.vector_store %arg23[%c0_46, %c8], %90 {strides = array<i32>} : memref<8x32xbf16, #tpu.memory_space<vmem>>, vector<8x8xbf16>,
    %92 = vector.extract_strided_slice %83 {offsets = [2, 0, 0], sizes = [1, 8, 8], strides = [1, 1, 1]} : vector<4x8x8xf32> to vector<1x8x8xf32>
    %93 = vector.shape_cast %92 : vector<1x8x8xf32> to vector<8x8xf32>
    %94 = arith.truncf %93 : vector<8x8xf32> to vector<8x8xbf16>
    %c0_47 = arith.constant 0 : index
    %c16 = arith.constant 16 : index
    %95 = vector.load %arg23[%c0_47, %c16] : memref<8x32xbf16, #tpu.memory_space<vmem>>, vector<8x8xbf16>
    tpu.vector_store %arg23[%c0_47, %c16], %94 {strides = array<i32>} : memref<8x32xbf16, #tpu.memory_space<vmem>>, vector<8x8xbf16>,
    %96 = vector.extract_strided_slice %83 {offsets = [3, 0, 0], sizes = [1, 8, 8], strides = [1, 1, 1]} : vector<4x8x8xf32> to vector<1x8x8xf32>
    %97 = vector.shape_cast %96 : vector<1x8x8xf32> to vector<8x8xf32>
    %98 = arith.truncf %97 : vector<8x8xf32> to vector<8x8xbf16>
    %c0_48 = arith.constant 0 : index
    %c24 = arith.constant 24 : index
    %99 = vector.load %arg23[%c0_48, %c24] : memref<8x32xbf16, #tpu.memory_space<vmem>>, vector<8x8xbf16>
    tpu.vector_store %arg23[%c0_48, %c24], %98 {strides = array<i32>} : memref<8x32xbf16, #tpu.memory_space<vmem>>, vector<8x8xbf16>,
    %c0_49 = arith.constant 0 : index
    %c0_50 = arith.constant 0 : index
    %100 = vector.load %arg23[%c0_49, %c0_50] : memref<8x32xbf16, #tpu.memory_space<vmem>>, vector<8x32xbf16>
    %c0_51 = arith.constant 0 : index
    %c0_52 = arith.constant 0 : index
    %101 = vector.load %arg10[%c0_51, %c0_52] : memref<32x32xbf16, #tpu.memory_space<vmem>>, vector<32x32xbf16>
    %cst_53 = arith.constant dense<0.000000e+00> : vector<8x32xf32>
    %102 = tpu.matmul %100, %101, %cst_53 {dimension_numbers = #tpu.dot_dimension_numbers<[1], [0], [0], [1], [0, 0, 1, 1], [], []>} : vector<8x32xbf16>, vector<32x32xbf16>, vector<8x32xf32> -> vector<8x32xf32>
    %c0_54 = arith.constant 0 : index
    %c0_55 = arith.constant 0 : index
    %103 = vector.load %arg11[%c0_54, %c0_55] : memref<1x32xf32, #tpu.memory_space<vmem>>, vector<1x32xf32>
    %104 = vector.broadcast %103 : vector<1x32xf32> to vector<8x32xf32>
    %105 = arith.addf %102, %104 : vector<8x32xf32>
    %106 = arith.addf %7, %105 : vector<8x32xf32>
    %c0_56 = arith.constant 0 : index
    %c0_57 = arith.constant 0 : index
    %107 = vector.load %arg12[%c0_56, %c0_57] : memref<1x32xf32, #tpu.memory_space<vmem>>, vector<1x32xf32>
    %c0_58 = arith.constant 0 : index
    %c0_59 = arith.constant 0 : index
    %108 = vector.load %arg13[%c0_58, %c0_59] : memref<1x32xf32, #tpu.memory_space<vmem>>, vector<1x32xf32>
    %cst_60 = arith.constant dense<0.000000e+00> : vector<8xf32>
    %109 = vector.multi_reduction <add>, %106, %cst_60 [1] : vector<8x32xf32> to vector<8xf32>
    %110 = vector.shape_cast %109 : vector<8xf32> to vector<8x1xf32>
    %cst_61 = arith.constant 3.200000e+01 : f32
    %111 = vector.broadcast %cst_61 : f32 to vector<8x1xf32>
    %112 = arith.divf %110, %111 : vector<8x1xf32>
    %113 = vector.broadcast %112 : vector<8x1xf32> to vector<8x32xf32>
    %114 = arith.subf %106, %113 : vector<8x32xf32>
    %115 = arith.mulf %114, %114 : vector<8x32xf32>
    %cst_62 = arith.constant dense<0.000000e+00> : vector<8xf32>
    %116 = vector.multi_reduction <add>, %115, %cst_62 [1] : vector<8x32xf32> to vector<8xf32>
    %117 = vector.shape_cast %116 : vector<8xf32> to vector<8x1xf32>
    %cst_63 = arith.constant 3.200000e+01 : f32
    %118 = vector.broadcast %cst_63 : f32 to vector<8x1xf32>
    %119 = arith.divf %117, %118 : vector<8x1xf32>
    %120 = vector.broadcast %112 : vector<8x1xf32> to vector<8x32xf32>
    %121 = arith.subf %106, %120 : vector<8x32xf32>
    %cst_64 = arith.constant 9.99999974E-6 : f32
    %122 = vector.broadcast %cst_64 : f32 to vector<8x1xf32>
    %123 = arith.addf %119, %122 : vector<8x1xf32>
    %124 = math.rsqrt %123 : vector<8x1xf32>
    %125 = vector.broadcast %124 : vector<8x1xf32> to vector<8x32xf32>
    %126 = arith.mulf %121, %125 : vector<8x32xf32>
    %127 = vector.broadcast %107 : vector<1x32xf32> to vector<8x32xf32>
    %128 = arith.mulf %126, %127 : vector<8x32xf32>
    %129 = vector.broadcast %108 : vector<1x32xf32> to vector<8x32xf32>
    %130 = arith.addf %128, %129 : vector<8x32xf32>
    %131 = arith.truncf %130 : vector<8x32xf32> to vector<8x32xbf16>
    %c0_65 = arith.constant 0 : index
    %c0_66 = arith.constant 0 : index
    %132 = vector.load %arg14[%c0_65, %c0_66] : memref<32x64xbf16, #tpu.memory_space<vmem>>, vector<32x64xbf16>
    %cst_67 = arith.constant dense<0.000000e+00> : vector<8x64xf32>
    %133 = tpu.matmul %131, %132, %cst_67 {dimension_numbers = #tpu.dot_dimension_numbers<[1], [0], [0], [1], [0, 0, 1, 1], [], []>} : vector<8x32xbf16>, vector<32x64xbf16>, vector<8x64xf32> -> vector<8x64xf32>
    %c0_68 = arith.constant 0 : index
    %c0_69 = arith.constant 0 : index
    %134 = vector.load %arg15[%c0_68, %c0_69] : memref<1x64xf32, #tpu.memory_space<vmem>>, vector<1x64xf32>
    %135 = vector.broadcast %134 : vector<1x64xf32> to vector<8x64xf32>
    %136 = arith.addf %133, %135 : vector<8x64xf32>
    %cst_70 = arith.constant 5.000000e-01 : f32
    %137 = vector.broadcast %cst_70 : f32 to vector<8x64xf32>
    %138 = arith.mulf %137, %136 : vector<8x64xf32>
    %cst_71 = arith.constant 4.471500e-02 : f32
    %139 = vector.broadcast %cst_71 : f32 to vector<8x64xf32>
    %140 = arith.mulf %139, %136 : vector<8x64xf32>
    %141 = arith.mulf %140, %136 : vector<8x64xf32>
    %142 = arith.mulf %141, %136 : vector<8x64xf32>
    %143 = arith.addf %136, %142 : vector<8x64xf32>
    %cst_72 = arith.constant 0.797884583 : f32
    %144 = vector.broadcast %cst_72 : f32 to vector<8x64xf32>
    %145 = arith.mulf %144, %143 : vector<8x64xf32>
    %146 = math.tanh %145 : vector<8x64xf32>
    %cst_73 = arith.constant 1.000000e+00 : f32
    %147 = vector.broadcast %cst_73 : f32 to vector<8x64xf32>
    %148 = arith.addf %147, %146 : vector<8x64xf32>
    %149 = arith.mulf %138, %148 : vector<8x64xf32>
    %150 = arith.truncf %149 : vector<8x64xf32> to vector<8x64xbf16>
    %c0_74 = arith.constant 0 : index
    %c0_75 = arith.constant 0 : index
    %151 = vector.load %arg16[%c0_74, %c0_75] : memref<64x32xbf16, #tpu.memory_space<vmem>>, vector<64x32xbf16>
    %cst_76 = arith.constant dense<0.000000e+00> : vector<8x32xf32>
    %152 = tpu.matmul %150, %151, %cst_76 {dimension_numbers = #tpu.dot_dimension_numbers<[1], [0], [0], [1], [0, 0, 1, 1], [], []>} : vector<8x64xbf16>, vector<64x32xbf16>, vector<8x32xf32> -> vector<8x32xf32>
    %c0_77 = arith.constant 0 : index
    %c0_78 = arith.constant 0 : index
    %153 = vector.load %arg17[%c0_77, %c0_78] : memref<1x32xf32, #tpu.memory_space<vmem>>, vector<1x32xf32>
    %154 = vector.broadcast %153 : vector<1x32xf32> to vector<8x32xf32>
    %155 = arith.addf %152, %154 : vector<8x32xf32>
    %156 = arith.addf %106, %155 : vector<8x32xf32>
    %c0_79 = arith.constant 0 : index
    %c0_80 = arith.constant 0 : index
    %c0_81 = arith.constant 0 : index
    %157 = vector.load %arg18[%c0_79, %c0_80, %c0_81] : memref<1x8x32xf32, #tpu.memory_space<vmem>>, vector<1x8x32xf32>
    %158 = vector.shape_cast %157 : vector<1x8x32xf32> to vector<8x32xf32>
    %159 = vector.shape_cast %156 : vector<8x32xf32> to vector<1x8x32xf32>
    tpu.vector_store %arg18[%c0_79, %c0_80, %c0_81], %159 {strides = array<i32>} : memref<1x8x32xf32, #tpu.memory_space<vmem>>, vector<1x8x32xf32>,
    return
  }
  func.func @transform_0(%arg0: i32, %arg1: i32) -> (i32, i32, i32) {
    %c0_i32 = arith.constant 0 : i32
    %c0_i32_0 = arith.constant 0 : i32
    %c0_i32_1 = arith.constant 0 : i32
    return %arg0, %c0_i32, %c0_i32_0 : i32, i32, i32
  }
  func.func @transform_1(%arg0: i32, %arg1: i32) -> (i32, i32) {
    %c0_i32 = arith.constant 0 : i32
    %c0_i32_0 = arith.constant 0 : i32
    return %arg1, %c0_i32 : i32, i32
  }
  func.func @transform_2(%arg0: i32, %arg1: i32) -> (i32, i32) {
    %c0_i32 = arith.constant 0 : i32
    %c0_i32_0 = arith.constant 0 : i32
    %c0_i32_1 = arith.constant 0 : i32
    return %c0_i32, %c0_i32_0 : i32, i32
  }
  func.func @transform_3(%arg0: i32, %arg1: i32) -> (i32, i32) {
    %c0_i32 = arith.constant 0 : i32
    %c0_i32_0 = arith.constant 0 : i32
    %c0_i32_1 = arith.constant 0 : i32
    return %c0_i32, %c0_i32_0 : i32, i32
  }
  func.func @transform_4(%arg0: i32, %arg1: i32) -> (i32, i32) {
    %c0_i32 = arith.constant 0 : i32
    %c0_i32_0 = arith.constant 0 : i32
    %c0_i32_1 = arith.constant 0 : i32
    return %c0_i32, %c0_i32_0 : i32, i32
  }
  func.func @transform_5(%arg0: i32, %arg1: i32) -> (i32, i32) {
    %c0_i32 = arith.constant 0 : i32
    %c0_i32_0 = arith.constant 0 : i32
    %c0_i32_1 = arith.constant 0 : i32
    return %c0_i32, %c0_i32_0 : i32, i32
  }
  func.func @transform_6(%arg0: i32, %arg1: i32) -> (i32, i32) {
    %c0_i32 = arith.constant 0 : i32
    %c0_i32_0 = arith.constant 0 : i32
    %c0_i32_1 = arith.constant 0 : i32
    return %c0_i32, %c0_i32_0 : i32, i32
  }
  func.func @transform_7(%arg0: i32, %arg1: i32) -> (i32, i32) {
    %c0_i32 = arith.constant 0 : i32
    %c0_i32_0 = arith.constant 0 : i32
    %c0_i32_1 = arith.constant 0 : i32
    return %c0_i32, %c0_i32_0 : i32, i32
  }
  func.func @transform_8(%arg0: i32, %arg1: i32) -> (i32, i32) {
    %c0_i32 = arith.constant 0 : i32
    %c0_i32_0 = arith.constant 0 : i32
    %c0_i32_1 = arith.constant 0 : i32
    return %c0_i32, %c0_i32_0 : i32, i32
  }
  func.func @transform_9(%arg0: i32, %arg1: i32) -> (i32, i32) {
    %c0_i32 = arith.constant 0 : i32
    %c0_i32_0 = arith.constant 0 : i32
    %c0_i32_1 = arith.constant 0 : i32
    return %c0_i32, %c0_i32_0 : i32, i32
  }
  func.func @transform_10(%arg0: i32, %arg1: i32) -> (i32, i32) {
    %c0_i32 = arith.constant 0 : i32
    %c0_i32_0 = arith.constant 0 : i32
    %c0_i32_1 = arith.constant 0 : i32
    return %c0_i32, %c0_i32_0 : i32, i32
  }
  func.func @transform_11(%arg0: i32, %arg1: i32) -> (i32, i32) {
    %c0_i32 = arith.constant 0 : i32
    %c0_i32_0 = arith.constant 0 : i32
    %c0_i32_1 = arith.constant 0 : i32
    return %c0_i32, %c0_i32_0 : i32, i32
  }
  func.func @transform_12(%arg0: i32, %arg1: i32) -> (i32, i32) {
    %c0_i32 = arith.constant 0 : i32
    %c0_i32_0 = arith.constant 0 : i32
    %c0_i32_1 = arith.constant 0 : i32
    return %c0_i32, %c0_i32_0 : i32, i32
  }
  func.func @transform_13(%arg0: i32, %arg1: i32) -> (i32, i32) {
    %c0_i32 = arith.constant 0 : i32
    %c0_i32_0 = arith.constant 0 : i32
    %c0_i32_1 = arith.constant 0 : i32
    return %c0_i32, %c0_i32_0 : i32, i32
  }
  func.func @transform_14(%arg0: i32, %arg1: i32) -> (i32, i32) {
    %c0_i32 = arith.constant 0 : i32
    %c0_i32_0 = arith.constant 0 : i32
    %c0_i32_1 = arith.constant 0 : i32
    return %c0_i32, %c0_i32_0 : i32, i32
  }
  func.func @transform_15(%arg0: i32, %arg1: i32) -> (i32, i32) {
    %c0_i32 = arith.constant 0 : i32
    %c0_i32_0 = arith.constant 0 : i32
    %c0_i32_1 = arith.constant 0 : i32
    return %c0_i32, %c0_i32_0 : i32, i32
  }
  func.func @transform_16(%arg0: i32, %arg1: i32) -> (i32, i32, i32) {
    %c0_i32 = arith.constant 0 : i32
    %c0_i32_0 = arith.constant 0 : i32
    return %arg0, %arg1, %c0_i32 : i32, i32, i32
  }
  func.func @transform_17(%arg0: i32, %arg1: i32) -> (i32, i32, i32, i32) {
    %c0_i32 = arith.constant 0 : i32
    %c0_i32_0 = arith.constant 0 : i32
    %c0_i32_1 = arith.constant 0 : i32
    return %arg0, %c0_i32, %arg1, %c0_i32_0 : i32, i32, i32, i32
  }
}

module attributes {stable_mosaic.version = 11 : i64} {
  func.func @_block_kernel(%arg0: i32, %arg1: i32, %arg2: memref<1x8x32xf32, #tpu.memory_space<vmem>>, %arg3: memref<8x8xf32, #tpu.memory_space<vmem>>, %arg4: memref<1x32xf32, #tpu.memory_space<vmem>>, %arg5: memref<1x32xf32, #tpu.memory_space<vmem>>, %arg6: memref<32x32xbf16, #tpu.memory_space<vmem>>, %arg7: memref<1x32xf32, #tpu.memory_space<vmem>>, %arg8: memref<32x64xbf16, #tpu.memory_space<vmem>>, %arg9: memref<1x64xf32, #tpu.memory_space<vmem>>, %arg10: memref<32x32xbf16, #tpu.memory_space<vmem>>, %arg11: memref<1x32xf32, #tpu.memory_space<vmem>>, %arg12: memref<1x32xf32, #tpu.memory_space<vmem>>, %arg13: memref<1x32xf32, #tpu.memory_space<vmem>>, %arg14: memref<32x64xbf16, #tpu.memory_space<vmem>>, %arg15: memref<1x64xf32, #tpu.memory_space<vmem>>, %arg16: memref<64x32xbf16, #tpu.memory_space<vmem>>, %arg17: memref<1x32xf32, #tpu.memory_space<vmem>>, %arg18: memref<1x8x32xf32, #tpu.memory_space<vmem>>, %arg19: memref<1x4x8x8xbf16, #tpu.memory_space<vmem>>, %arg20: memref<4x8x8xbf16, #tpu.memory_space<vmem>>, %arg21: memref<4x8x8xbf16, #tpu.memory_space<vmem>>, %arg22: memref<4x8x8xbf16, #tpu.memory_space<vmem>>, %arg23: memref<8x32xbf16, #tpu.memory_space<vmem>>) attributes {dimension_semantics = [#tpu.dimension_semantics<parallel>, #tpu.dimension_semantics<arbitrary>], iteration_bounds = array<i64: 2, 1>, scalar_prefetch = 0 : i64, scratch_operands = 4 : i64, tpu.core_type = #tpu.core_type<tc>, window_params = [{transform_indices = @transform_0, window_bounds = array<i64: 1, 8, 32>}, {transform_indices = @transform_1, window_bounds = array<i64: 8, 8>}, {pipeline_mode = #tpu.pipeline_mode<synchronous>, transform_indices = @transform_2, window_bounds = array<i64: 1, 32>}, {pipeline_mode = #tpu.pipeline_mode<synchronous>, transform_indices = @transform_3, window_bounds = array<i64: 1, 32>}, {pipeline_mode = #tpu.pipeline_mode<synchronous>, transform_indices = @transform_4, window_bounds = array<i64: 32, 32>}, {pipeline_mode = #tpu.pipeline_mode<synchronous>, transform_indices = @transform_5, window_bounds = array<i64: 1, 32>}, {pipeline_mode = #tpu.pipeline_mode<synchronous>, transform_indices = @transform_6, window_bounds = array<i64: 32, 64>}, {pipeline_mode = #tpu.pipeline_mode<synchronous>, transform_indices = @transform_7, window_bounds = array<i64: 1, 64>}, {pipeline_mode = #tpu.pipeline_mode<synchronous>, transform_indices = @transform_8, window_bounds = array<i64: 32, 32>}, {pipeline_mode = #tpu.pipeline_mode<synchronous>, transform_indices = @transform_9, window_bounds = array<i64: 1, 32>}, {pipeline_mode = #tpu.pipeline_mode<synchronous>, transform_indices = @transform_10, window_bounds = array<i64: 1, 32>}, {pipeline_mode = #tpu.pipeline_mode<synchronous>, transform_indices = @transform_11, window_bounds = array<i64: 1, 32>}, {pipeline_mode = #tpu.pipeline_mode<synchronous>, transform_indices = @transform_12, window_bounds = array<i64: 32, 64>}, {pipeline_mode = #tpu.pipeline_mode<synchronous>, transform_indices = @transform_13, window_bounds = array<i64: 1, 64>}, {pipeline_mode = #tpu.pipeline_mode<synchronous>, transform_indices = @transform_14, window_bounds = array<i64: 64, 32>}, {pipeline_mode = #tpu.pipeline_mode<synchronous>, transform_indices = @transform_15, window_bounds = array<i64: 1, 32>}, {transform_indices = @transform_16, window_bounds = array<i64: 1, 8, 32>}, {transform_indices = @transform_17, window_bounds = array<i64: 1, 4, 8, 8>}]} {
    %c0_i32 = arith.constant 0 : i32
    %0 = arith.cmpi eq, %arg1, %c0_i32 : i32
    %1 = arith.extui %0 : i1 to i32
    %c0_i32_0 = arith.constant 0 : i32
    %2 = arith.cmpi ne, %1, %c0_i32_0 : i32
    scf.if %2 {
      %c0_82 = arith.constant 0 : index
      %c0_83 = arith.constant 0 : index
      %c0_84 = arith.constant 0 : index
      %160 = vector.load %arg2[%c0_82, %c0_83, %c0_84] : memref<1x8x32xf32, #tpu.memory_space<vmem>>, vector<1x8x32xf32>
      %161 = vector.shape_cast %160 : vector<1x8x32xf32> to vector<8x32xf32>
      %c0_85 = arith.constant 0 : index
      %c0_86 = arith.constant 0 : index
      %162 = vector.load %arg4[%c0_85, %c0_86] : memref<1x32xf32, #tpu.memory_space<vmem>>, vector<1x32xf32>
      %c0_87 = arith.constant 0 : index
      %c0_88 = arith.constant 0 : index
      %163 = vector.load %arg5[%c0_87, %c0_88] : memref<1x32xf32, #tpu.memory_space<vmem>>, vector<1x32xf32>
      %cst_89 = arith.constant dense<0.000000e+00> : vector<8xf32>
      %164 = vector.multi_reduction <add>, %161, %cst_89 [1] : vector<8x32xf32> to vector<8xf32>
      %165 = vector.shape_cast %164 : vector<8xf32> to vector<8x1xf32>
      %cst_90 = arith.constant 3.200000e+01 : f32
      %166 = vector.broadcast %cst_90 : f32 to vector<8x1xf32>
      %167 = arith.divf %165, %166 : vector<8x1xf32>
      %168 = vector.broadcast %167 : vector<8x1xf32> to vector<8x32xf32>
      %169 = arith.subf %161, %168 : vector<8x32xf32>
      %170 = arith.mulf %169, %169 : vector<8x32xf32>
      %cst_91 = arith.constant dense<0.000000e+00> : vector<8xf32>
      %171 = vector.multi_reduction <add>, %170, %cst_91 [1] : vector<8x32xf32> to vector<8xf32>
      %172 = vector.shape_cast %171 : vector<8xf32> to vector<8x1xf32>
      %cst_92 = arith.constant 3.200000e+01 : f32
      %173 = vector.broadcast %cst_92 : f32 to vector<8x1xf32>
      %174 = arith.divf %172, %173 : vector<8x1xf32>
      %175 = vector.broadcast %167 : vector<8x1xf32> to vector<8x32xf32>
      %176 = arith.subf %161, %175 : vector<8x32xf32>
      %cst_93 = arith.constant 9.99999974E-6 : f32
      %177 = vector.broadcast %cst_93 : f32 to vector<8x1xf32>
      %178 = arith.addf %174, %177 : vector<8x1xf32>
      %179 = math.rsqrt %178 : vector<8x1xf32>
      %180 = vector.broadcast %179 : vector<8x1xf32> to vector<8x32xf32>
      %181 = arith.mulf %176, %180 : vector<8x32xf32>
      %182 = vector.broadcast %162 : vector<1x32xf32> to vector<8x32xf32>
      %183 = arith.mulf %181, %182 : vector<8x32xf32>
      %184 = vector.broadcast %163 : vector<1x32xf32> to vector<8x32xf32>
      %185 = arith.addf %183, %184 : vector<8x32xf32>
      %186 = arith.truncf %185 : vector<8x32xf32> to vector<8x32xbf16>
      %c0_94 = arith.constant 0 : index
      %c0_95 = arith.constant 0 : index
      %187 = vector.load %arg8[%c0_94, %c0_95] : memref<32x64xbf16, #tpu.memory_space<vmem>>, vector<32x64xbf16>
      %cst_96 = arith.constant dense<0.000000e+00> : vector<8x64xf32>
      %188 = tpu.matmul %186, %187, %cst_96 {dimension_numbers = #tpu.dot_dimension_numbers<[1], [0], [0], [1], [0, 0, 1, 1], [], []>} : vector<8x32xbf16>, vector<32x64xbf16>, vector<8x64xf32> -> vector<8x64xf32>
      %c0_97 = arith.constant 0 : index
      %c0_98 = arith.constant 0 : index
      %189 = vector.load %arg9[%c0_97, %c0_98] : memref<1x64xf32, #tpu.memory_space<vmem>>, vector<1x64xf32>
      %190 = vector.broadcast %189 : vector<1x64xf32> to vector<8x64xf32>
      %191 = arith.addf %188, %190 : vector<8x64xf32>
      %192 = vector.extract_strided_slice %191 {offsets = [0, 0], sizes = [8, 8], strides = [1, 1]} : vector<8x64xf32> to vector<8x8xf32>
      %193 = arith.truncf %192 : vector<8x8xf32> to vector<8x8xbf16>
      %c0_99 = arith.constant 0 : index
      %c0_100 = arith.constant 0 : index
      %c0_101 = arith.constant 0 : index
      %194 = vector.load %arg20[%c0_99, %c0_100, %c0_101] : memref<4x8x8xbf16, #tpu.memory_space<vmem>>, vector<1x8x8xbf16>
      %195 = vector.shape_cast %194 : vector<1x8x8xbf16> to vector<8x8xbf16>
      %196 = vector.shape_cast %193 : vector<8x8xbf16> to vector<1x8x8xbf16>
      tpu.vector_store %arg20[%c0_99, %c0_100, %c0_101], %196 {strides = array<i32>} : memref<4x8x8xbf16, #tpu.memory_space<vmem>>, vector<1x8x8xbf16>,
      %197 = vector.extract_strided_slice %191 {offsets = [0, 32], sizes = [8, 8], strides = [1, 1]} : vector<8x64xf32> to vector<8x8xf32>
      %198 = arith.truncf %197 : vector<8x8xf32> to vector<8x8xbf16>
      %c0_102 = arith.constant 0 : index
      %c0_103 = arith.constant 0 : index
      %c0_104 = arith.constant 0 : index
      %199 = vector.load %arg21[%c0_102, %c0_103, %c0_104] : memref<4x8x8xbf16, #tpu.memory_space<vmem>>, vector<1x8x8xbf16>
      %200 = vector.shape_cast %199 : vector<1x8x8xbf16> to vector<8x8xbf16>
      %201 = vector.shape_cast %198 : vector<8x8xbf16> to vector<1x8x8xbf16>
      tpu.vector_store %arg21[%c0_102, %c0_103, %c0_104], %201 {strides = array<i32>} : memref<4x8x8xbf16, #tpu.memory_space<vmem>>, vector<1x8x8xbf16>,
      %202 = vector.extract_strided_slice %191 {offsets = [0, 8], sizes = [8, 8], strides = [1, 1]} : vector<8x64xf32> to vector<8x8xf32>
      %203 = arith.truncf %202 : vector<8x8xf32> to vector<8x8xbf16>
      %c1_105 = arith.constant 1 : index
      %c0_106 = arith.constant 0 : index
      %c0_107 = arith.constant 0 : index
      %204 = vector.load %arg20[%c1_105, %c0_106, %c0_107] : memref<4x8x8xbf16, #tpu.memory_space<vmem>>, vector<1x8x8xbf16>
      %205 = vector.shape_cast %204 : vector<1x8x8xbf16> to vector<8x8xbf16>
      %206 = vector.shape_cast %203 : vector<8x8xbf16> to vector<1x8x8xbf16>
      tpu.vector_store %arg20[%c1_105, %c0_106, %c0_107], %206 {strides = array<i32>} : memref<4x8x8xbf16, #tpu.memory_space<vmem>>, vector<1x8x8xbf16>,
      %207 = vector.extract_strided_slice %191 {offsets = [0, 40], sizes = [8, 8], strides = [1, 1]} : vector<8x64xf32> to vector<8x8xf32>
      %208 = arith.truncf %207 : vector<8x8xf32> to vector<8x8xbf16>
      %c1_108 = arith.constant 1 : index
      %c0_109 = arith.constant 0 : index
      %c0_110 = arith.constant 0 : index
      %209 = vector.load %arg21[%c1_108, %c0_109, %c0_110] : memref<4x8x8xbf16, #tpu.memory_space<vmem>>, vector<1x8x8xbf16>
      %210 = vector.shape_cast %209 : vector<1x8x8xbf16> to vector<8x8xbf16>
      %211 = vector.shape_cast %208 : vector<8x8xbf16> to vector<1x8x8xbf16>
      tpu.vector_store %arg21[%c1_108, %c0_109, %c0_110], %211 {strides = array<i32>} : memref<4x8x8xbf16, #tpu.memory_space<vmem>>, vector<1x8x8xbf16>,
      %212 = vector.extract_strided_slice %191 {offsets = [0, 16], sizes = [8, 8], strides = [1, 1]} : vector<8x64xf32> to vector<8x8xf32>
      %213 = arith.truncf %212 : vector<8x8xf32> to vector<8x8xbf16>
      %c2_111 = arith.constant 2 : index
      %c0_112 = arith.constant 0 : index
      %c0_113 = arith.constant 0 : index
      %214 = vector.load %arg20[%c2_111, %c0_112, %c0_113] : memref<4x8x8xbf16, #tpu.memory_space<vmem>>, vector<1x8x8xbf16>
      %215 = vector.shape_cast %214 : vector<1x8x8xbf16> to vector<8x8xbf16>
      %216 = vector.shape_cast %213 : vector<8x8xbf16> to vector<1x8x8xbf16>
      tpu.vector_store %arg20[%c2_111, %c0_112, %c0_113], %216 {strides = array<i32>} : memref<4x8x8xbf16, #tpu.memory_space<vmem>>, vector<1x8x8xbf16>,
      %217 = vector.extract_strided_slice %191 {offsets = [0, 48], sizes = [8, 8], strides = [1, 1]} : vector<8x64xf32> to vector<8x8xf32>
      %218 = arith.truncf %217 : vector<8x8xf32> to vector<8x8xbf16>
      %c2_114 = arith.constant 2 : index
      %c0_115 = arith.constant 0 : index
      %c0_116 = arith.constant 0 : index
      %219 = vector.load %arg21[%c2_114, %c0_115, %c0_116] : memref<4x8x8xbf16, #tpu.memory_space<vmem>>, vector<1x8x8xbf16>
      %220 = vector.shape_cast %219 : vector<1x8x8xbf16> to vector<8x8xbf16>
      %221 = vector.shape_cast %218 : vector<8x8xbf16> to vector<1x8x8xbf16>
      tpu.vector_store %arg21[%c2_114, %c0_115, %c0_116], %221 {strides = array<i32>} : memref<4x8x8xbf16, #tpu.memory_space<vmem>>, vector<1x8x8xbf16>,
      %222 = vector.extract_strided_slice %191 {offsets = [0, 24], sizes = [8, 8], strides = [1, 1]} : vector<8x64xf32> to vector<8x8xf32>
      %223 = arith.truncf %222 : vector<8x8xf32> to vector<8x8xbf16>
      %c3_117 = arith.constant 3 : index
      %c0_118 = arith.constant 0 : index
      %c0_119 = arith.constant 0 : index
      %224 = vector.load %arg20[%c3_117, %c0_118, %c0_119] : memref<4x8x8xbf16, #tpu.memory_space<vmem>>, vector<1x8x8xbf16>
      %225 = vector.shape_cast %224 : vector<1x8x8xbf16> to vector<8x8xbf16>
      %226 = vector.shape_cast %223 : vector<8x8xbf16> to vector<1x8x8xbf16>
      tpu.vector_store %arg20[%c3_117, %c0_118, %c0_119], %226 {strides = array<i32>} : memref<4x8x8xbf16, #tpu.memory_space<vmem>>, vector<1x8x8xbf16>,
      %227 = vector.extract_strided_slice %191 {offsets = [0, 56], sizes = [8, 8], strides = [1, 1]} : vector<8x64xf32> to vector<8x8xf32>
      %228 = arith.truncf %227 : vector<8x8xf32> to vector<8x8xbf16>
      %c3_120 = arith.constant 3 : index
      %c0_121 = arith.constant 0 : index
      %c0_122 = arith.constant 0 : index
      %229 = vector.load %arg21[%c3_120, %c0_121, %c0_122] : memref<4x8x8xbf16, #tpu.memory_space<vmem>>, vector<1x8x8xbf16>
      %230 = vector.shape_cast %229 : vector<1x8x8xbf16> to vector<8x8xbf16>
      %231 = vector.shape_cast %228 : vector<8x8xbf16> to vector<1x8x8xbf16>
      tpu.vector_store %arg21[%c3_120, %c0_121, %c0_122], %231 {strides = array<i32>} : memref<4x8x8xbf16, #tpu.memory_space<vmem>>, vector<1x8x8xbf16>,
    } else {
    }
    %c8_i32 = arith.constant 8 : i32
    %3 = arith.muli %arg1, %c8_i32 : i32
    %4 = tpu.assume_multiple %3, 8 : i32
    %c0 = arith.constant 0 : index
    %5 = arith.index_cast %4 : i32 to index
    %c0_1 = arith.constant 0 : index
    %6 = vector.load %arg2[%c0, %5, %c0_1] : memref<1x8x32xf32, #tpu.memory_space<vmem>>, vector<1x8x32xf32>
    %7 = vector.shape_cast %6 : vector<1x8x32xf32> to vector<8x32xf32>
    %c0_2 = arith.constant 0 : index
    %c0_3 = arith.constant 0 : index
    %8 = vector.load %arg4[%c0_2, %c0_3] : memref<1x32xf32, #tpu.memory_space<vmem>>, vector<1x32xf32>
    %c0_4 = arith.constant 0 : index
    %c0_5 = arith.constant 0 : index
    %9 = vector.load %arg5[%c0_4, %c0_5] : memref<1x32xf32, #tpu.memory_space<vmem>>, vector<1x32xf32>
    %cst = arith.constant dense<0.000000e+00> : vector<8xf32>
    %10 = vector.multi_reduction <add>, %7, %cst [1] : vector<8x32xf32> to vector<8xf32>
    %11 = vector.shape_cast %10 : vector<8xf32> to vector<8x1xf32>
    %cst_6 = arith.constant 3.200000e+01 : f32
    %12 = vector.broadcast %cst_6 : f32 to vector<8x1xf32>
    %13 = arith.divf %11, %12 : vector<8x1xf32>
    %14 = vector.broadcast %13 : vector<8x1xf32> to vector<8x32xf32>
    %15 = arith.subf %7, %14 : vector<8x32xf32>
    %16 = arith.mulf %15, %15 : vector<8x32xf32>
    %cst_7 = arith.constant dense<0.000000e+00> : vector<8xf32>
    %17 = vector.multi_reduction <add>, %16, %cst_7 [1] : vector<8x32xf32> to vector<8xf32>
    %18 = vector.shape_cast %17 : vector<8xf32> to vector<8x1xf32>
    %cst_8 = arith.constant 3.200000e+01 : f32
    %19 = vector.broadcast %cst_8 : f32 to vector<8x1xf32>
    %20 = arith.divf %18, %19 : vector<8x1xf32>
    %21 = vector.broadcast %13 : vector<8x1xf32> to vector<8x32xf32>
    %22 = arith.subf %7, %21 : vector<8x32xf32>
    %cst_9 = arith.constant 9.99999974E-6 : f32
    %23 = vector.broadcast %cst_9 : f32 to vector<8x1xf32>
    %24 = arith.addf %20, %23 : vector<8x1xf32>
    %25 = math.rsqrt %24 : vector<8x1xf32>
    %26 = vector.broadcast %25 : vector<8x1xf32> to vector<8x32xf32>
    %27 = arith.mulf %22, %26 : vector<8x32xf32>
    %28 = vector.broadcast %8 : vector<1x32xf32> to vector<8x32xf32>
    %29 = arith.mulf %27, %28 : vector<8x32xf32>
    %30 = vector.broadcast %9 : vector<1x32xf32> to vector<8x32xf32>
    %31 = arith.addf %29, %30 : vector<8x32xf32>
    %32 = arith.truncf %31 : vector<8x32xf32> to vector<8x32xbf16>
    %c0_10 = arith.constant 0 : index
    %c0_11 = arith.constant 0 : index
    %33 = vector.load %arg6[%c0_10, %c0_11] : memref<32x32xbf16, #tpu.memory_space<vmem>>, vector<32x32xbf16>
    %cst_12 = arith.constant dense<0.000000e+00> : vector<8x32xf32>
    %34 = tpu.matmul %32, %33, %cst_12 {dimension_numbers = #tpu.dot_dimension_numbers<[1], [0], [0], [1], [0, 0, 1, 1], [], []>} : vector<8x32xbf16>, vector<32x32xbf16>, vector<8x32xf32> -> vector<8x32xf32>
    %c0_13 = arith.constant 0 : index
    %c0_14 = arith.constant 0 : index
    %35 = vector.load %arg7[%c0_13, %c0_14] : memref<1x32xf32, #tpu.memory_space<vmem>>, vector<1x32xf32>
    %36 = vector.broadcast %35 : vector<1x32xf32> to vector<8x32xf32>
    %37 = arith.addf %34, %36 : vector<8x32xf32>
    %38 = vector.extract_strided_slice %37 {offsets = [0, 0], sizes = [8, 8], strides = [1, 1]} : vector<8x32xf32> to vector<8x8xf32>
    %39 = arith.truncf %38 : vector<8x8xf32> to vector<8x8xbf16>
    %c0_15 = arith.constant 0 : index
    %c0_16 = arith.constant 0 : index
    %c0_17 = arith.constant 0 : index
    %40 = vector.load %arg22[%c0_15, %c0_16, %c0_17] : memref<4x8x8xbf16, #tpu.memory_space<vmem>>, vector<1x8x8xbf16>
    %41 = vector.shape_cast %40 : vector<1x8x8xbf16> to vector<8x8xbf16>
    %42 = vector.shape_cast %39 : vector<8x8xbf16> to vector<1x8x8xbf16>
    tpu.vector_store %arg22[%c0_15, %c0_16, %c0_17], %42 {strides = array<i32>} : memref<4x8x8xbf16, #tpu.memory_space<vmem>>, vector<1x8x8xbf16>,
    %43 = vector.extract_strided_slice %37 {offsets = [0, 8], sizes = [8, 8], strides = [1, 1]} : vector<8x32xf32> to vector<8x8xf32>
    %44 = arith.truncf %43 : vector<8x8xf32> to vector<8x8xbf16>
    %c1 = arith.constant 1 : index
    %c0_18 = arith.constant 0 : index
    %c0_19 = arith.constant 0 : index
    %45 = vector.load %arg22[%c1, %c0_18, %c0_19] : memref<4x8x8xbf16, #tpu.memory_space<vmem>>, vector<1x8x8xbf16>
    %46 = vector.shape_cast %45 : vector<1x8x8xbf16> to vector<8x8xbf16>
    %47 = vector.shape_cast %44 : vector<8x8xbf16> to vector<1x8x8xbf16>
    tpu.vector_store %arg22[%c1, %c0_18, %c0_19], %47 {strides = array<i32>} : memref<4x8x8xbf16, #tpu.memory_space<vmem>>, vector<1x8x8xbf16>,
    %48 = vector.extract_strided_slice %37 {offsets = [0, 16], sizes = [8, 8], strides = [1, 1]} : vector<8x32xf32> to vector<8x8xf32>
    %49 = arith.truncf %48 : vector<8x8xf32> to vector<8x8xbf16>
    %c2 = arith.constant 2 : index
    %c0_20 = arith.constant 0 : index
    %c0_21 = arith.constant 0 : index
    %50 = vector.load %arg22[%c2, %c0_20, %c0_21] : memref<4x8x8xbf16, #tpu.memory_space<vmem>>, vector<1x8x8xbf16>
    %51 = vector.shape_cast %50 : vector<1x8x8xbf16> to vector<8x8xbf16>
    %52 = vector.shape_cast %49 : vector<8x8xbf16> to vector<1x8x8xbf16>
    tpu.vector_store %arg22[%c2, %c0_20, %c0_21], %52 {strides = array<i32>} : memref<4x8x8xbf16, #tpu.memory_space<vmem>>, vector<1x8x8xbf16>,
    %53 = vector.extract_strided_slice %37 {offsets = [0, 24], sizes = [8, 8], strides = [1, 1]} : vector<8x32xf32> to vector<8x8xf32>
    %54 = arith.truncf %53 : vector<8x8xf32> to vector<8x8xbf16>
    %c3 = arith.constant 3 : index
    %c0_22 = arith.constant 0 : index
    %c0_23 = arith.constant 0 : index
    %55 = vector.load %arg22[%c3, %c0_22, %c0_23] : memref<4x8x8xbf16, #tpu.memory_space<vmem>>, vector<1x8x8xbf16>
    %56 = vector.shape_cast %55 : vector<1x8x8xbf16> to vector<8x8xbf16>
    %57 = vector.shape_cast %54 : vector<8x8xbf16> to vector<1x8x8xbf16>
    tpu.vector_store %arg22[%c3, %c0_22, %c0_23], %57 {strides = array<i32>} : memref<4x8x8xbf16, #tpu.memory_space<vmem>>, vector<1x8x8xbf16>,
    %c0_24 = arith.constant 0 : index
    %c0_25 = arith.constant 0 : index
    %c0_26 = arith.constant 0 : index
    %58 = vector.load %arg22[%c0_24, %c0_25, %c0_26] : memref<4x8x8xbf16, #tpu.memory_space<vmem>>, vector<4x8x8xbf16>
    %c0_27 = arith.constant 0 : index
    %c0_28 = arith.constant 0 : index
    %c0_29 = arith.constant 0 : index
    %59 = vector.load %arg20[%c0_27, %c0_28, %c0_29] : memref<4x8x8xbf16, #tpu.memory_space<vmem>>, vector<4x8x8xbf16>
    "tpu.trace_start"() <{level = 10 : i32, message = "hqd,hkd->hqk"}> : () -> ()
    %cst_30 = arith.constant dense<0.000000e+00> : vector<4x8x8xf32>
    %60 = tpu.matmul %58, %59, %cst_30 {dimension_numbers = #tpu.dot_dimension_numbers<[2], [2], [1], [1], [0, 0, 0, 1, 1, 1], [0], [0]>} : vector<4x8x8xbf16>, vector<4x8x8xbf16>, vector<4x8x8xf32> -> vector<4x8x8xf32>
    "tpu.trace_stop"() : () -> ()
    %cst_31 = arith.constant 0.353553385 : f32
    %61 = vector.broadcast %cst_31 : f32 to vector<4x8x8xf32>
    %62 = arith.mulf %60, %61 : vector<4x8x8xf32>
    %c0_32 = arith.constant 0 : index
    %c0_33 = arith.constant 0 : index
    %63 = vector.load %arg3[%c0_32, %c0_33] : memref<8x8xf32, #tpu.memory_space<vmem>>, vector<8x8xf32>
    %64 = vector.shape_cast %63 : vector<8x8xf32> to vector<1x8x8xf32>
    %65 = vector.broadcast %64 : vector<1x8x8xf32> to vector<4x8x8xf32>
    %66 = arith.addf %62, %65 : vector<4x8x8xf32>
    %cst_34 = arith.constant dense<0xFF800000> : vector<4x8xf32>
    %67 = vector.multi_reduction <maximumf>, %66, %cst_34 [2] : vector<4x8x8xf32> to vector<4x8xf32>
    %68 = vector.shape_cast %67 : vector<4x8xf32> to vector<4x8x1xf32>
    %69 = vector.broadcast %68 : vector<4x8x1xf32> to vector<4x8x8xf32>
    %70 = arith.subf %66, %69 : vector<4x8x8xf32>
    %71 = math.exp %70 : vector<4x8x8xf32>
    %cst_35 = arith.constant dense<0.000000e+00> : vector<4x8xf32>
    %72 = vector.multi_reduction <add>, %71, %cst_35 [2] : vector<4x8x8xf32> to vector<4x8xf32>
    %73 = vector.shape_cast %72 : vector<4x8xf32> to vector<4x8x1xf32>
    %74 = tpu.reciprocal %73 {approx = true} : vector<4x8x1xf32> -> vector<4x8x1xf32>
    %75 = vector.broadcast %74 : vector<4x8x1xf32> to vector<4x8x8xf32>
    %76 = arith.mulf %71, %75 : vector<4x8x8xf32>
    %77 = arith.truncf %76 : vector<4x8x8xf32> to vector<4x8x8xbf16>
    %c0_36 = arith.constant 0 : index
    %c0_37 = arith.constant 0 : index
    %c0_38 = arith.constant 0 : index
    %c0_39 = arith.constant 0 : index
    %78 = vector.load %arg19[%c0_36, %c0_37, %c0_38, %c0_39] : memref<1x4x8x8xbf16, #tpu.memory_space<vmem>>, vector<1x4x8x8xbf16>
    %79 = vector.shape_cast %78 : vector<1x4x8x8xbf16> to vector<4x8x8xbf16>
    %80 = vector.shape_cast %77 : vector<4x8x8xbf16> to vector<1x4x8x8xbf16>
    tpu.vector_store %arg19[%c0_36, %c0_37, %c0_38, %c0_39], %80 {strides = array<i32>} : memref<1x4x8x8xbf16, #tpu.memory_space<vmem>>, vector<1x4x8x8xbf16>,
    %81 = arith.truncf %76 : vector<4x8x8xf32> to vector<4x8x8xbf16>
    %c0_40 = arith.constant 0 : index
    %c0_41 = arith.constant 0 : index
    %c0_42 = arith.constant 0 : index
    %82 = vector.load %arg21[%c0_40, %c0_41, %c0_42] : memref<4x8x8xbf16, #tpu.memory_space<vmem>>, vector<4x8x8xbf16>
    "tpu.trace_start"() <{level = 10 : i32, message = "hqk,hkd->hqd"}> : () -> ()
    %cst_43 = arith.constant dense<0.000000e+00> : vector<4x8x8xf32>
    %83 = tpu.matmul %81, %82, %cst_43 {dimension_numbers = #tpu.dot_dimension_numbers<[2], [1], [1], [2], [0, 0, 0, 1, 1, 2], [0], [0]>} : vector<4x8x8xbf16>, vector<4x8x8xbf16>, vector<4x8x8xf32> -> vector<4x8x8xf32>
    "tpu.trace_stop"() : () -> ()
    %84 = vector.extract_strided_slice %83 {offsets = [0, 0, 0], sizes = [1, 8, 8], strides = [1, 1, 1]} : vector<4x8x8xf32> to vector<1x8x8xf32>
    %85 = vector.shape_cast %84 : vector<1x8x8xf32> to vector<8x8xf32>
    %86 = arith.truncf %85 : vector<8x8xf32> to vector<8x8xbf16>
    %c0_44 = arith.constant 0 : index
    %c0_45 = arith.constant 0 : index
    %87 = vector.load %arg23[%c0_44, %c0_45] : memref<8x32xbf16, #tpu.memory_space<vmem>>, vector<8x8xbf16>
    tpu.vector_store %arg23[%c0_44, %c0_45], %86 {strides = array<i32>} : memref<8x32xbf16, #tpu.memory_space<vmem>>, vector<8x8xbf16>,
    %88 = vector.extract_strided_slice %83 {offsets = [1, 0, 0], sizes = [1, 8, 8], strides = [1, 1, 1]} : vector<4x8x8xf32> to vector<1x8x8xf32>
    %89 = vector.shape_cast %88 : vector<1x8x8xf32> to vector<8x8xf32>
    %90 = arith.truncf %89 : vector<8x8xf32> to vector<8x8xbf16>
    %c0_46 = arith.constant 0 : index
    %c8 = arith.constant 8 : index
    %91 = vector.load %arg23[%c0_46, %c8] : memref<8x32xbf16, #tpu.memory_space<vmem>>, vector<8x8xbf16>
    tpu.vector_store %arg23[%c0_46, %c8], %90 {strides = array<i32>} : memref<8x32xbf16, #tpu.memory_space<vmem>>, vector<8x8xbf16>,
    %92 = vector.extract_strided_slice %83 {offsets = [2, 0, 0], sizes = [1, 8, 8], strides = [1, 1, 1]} : vector<4x8x8xf32> to vector<1x8x8xf32>
    %93 = vector.shape_cast %92 : vector<1x8x8xf32> to vector<8x8xf32>
    %94 = arith.truncf %93 : vector<8x8xf32> to vector<8x8xbf16>
    %c0_47 = arith.constant 0 : index
    %c16 = arith.constant 16 : index
    %95 = vector.load %arg23[%c0_47, %c16] : memref<8x32xbf16, #tpu.memory_space<vmem>>, vector<8x8xbf16>
    tpu.vector_store %arg23[%c0_47, %c16], %94 {strides = array<i32>} : memref<8x32xbf16, #tpu.memory_space<vmem>>, vector<8x8xbf16>,
    %96 = vector.extract_strided_slice %83 {offsets = [3, 0, 0], sizes = [1, 8, 8], strides = [1, 1, 1]} : vector<4x8x8xf32> to vector<1x8x8xf32>
    %97 = vector.shape_cast %96 : vector<1x8x8xf32> to vector<8x8xf32>
    %98 = arith.truncf %97 : vector<8x8xf32> to vector<8x8xbf16>
    %c0_48 = arith.constant 0 : index
    %c24 = arith.constant 24 : index
    %99 = vector.load %arg23[%c0_48, %c24] : memref<8x32xbf16, #tpu.memory_space<vmem>>, vector<8x8xbf16>
    tpu.vector_store %arg23[%c0_48, %c24], %98 {strides = array<i32>} : memref<8x32xbf16, #tpu.memory_space<vmem>>, vector<8x8xbf16>,
    %c0_49 = arith.constant 0 : index
    %c0_50 = arith.constant 0 : index
    %100 = vector.load %arg23[%c0_49, %c0_50] : memref<8x32xbf16, #tpu.memory_space<vmem>>, vector<8x32xbf16>
    %c0_51 = arith.constant 0 : index
    %c0_52 = arith.constant 0 : index
    %101 = vector.load %arg10[%c0_51, %c0_52] : memref<32x32xbf16, #tpu.memory_space<vmem>>, vector<32x32xbf16>
    %cst_53 = arith.constant dense<0.000000e+00> : vector<8x32xf32>
    %102 = tpu.matmul %100, %101, %cst_53 {dimension_numbers = #tpu.dot_dimension_numbers<[1], [0], [0], [1], [0, 0, 1, 1], [], []>} : vector<8x32xbf16>, vector<32x32xbf16>, vector<8x32xf32> -> vector<8x32xf32>
    %c0_54 = arith.constant 0 : index
    %c0_55 = arith.constant 0 : index
    %103 = vector.load %arg11[%c0_54, %c0_55] : memref<1x32xf32, #tpu.memory_space<vmem>>, vector<1x32xf32>
    %104 = vector.broadcast %103 : vector<1x32xf32> to vector<8x32xf32>
    %105 = arith.addf %102, %104 : vector<8x32xf32>
    %106 = arith.addf %7, %105 : vector<8x32xf32>
    %c0_56 = arith.constant 0 : index
    %c0_57 = arith.constant 0 : index
    %107 = vector.load %arg12[%c0_56, %c0_57] : memref<1x32xf32, #tpu.memory_space<vmem>>, vector<1x32xf32>
    %c0_58 = arith.constant 0 : index
    %c0_59 = arith.constant 0 : index
    %108 = vector.load %arg13[%c0_58, %c0_59] : memref<1x32xf32, #tpu.memory_space<vmem>>, vector<1x32xf32>
    %cst_60 = arith.constant dense<0.000000e+00> : vector<8xf32>
    %109 = vector.multi_reduction <add>, %106, %cst_60 [1] : vector<8x32xf32> to vector<8xf32>
    %110 = vector.shape_cast %109 : vector<8xf32> to vector<8x1xf32>
    %cst_61 = arith.constant 3.200000e+01 : f32
    %111 = vector.broadcast %cst_61 : f32 to vector<8x1xf32>
    %112 = arith.divf %110, %111 : vector<8x1xf32>
    %113 = vector.broadcast %112 : vector<8x1xf32> to vector<8x32xf32>
    %114 = arith.subf %106, %113 : vector<8x32xf32>
    %115 = arith.mulf %114, %114 : vector<8x32xf32>
    %cst_62 = arith.constant dense<0.000000e+00> : vector<8xf32>
    %116 = vector.multi_reduction <add>, %115, %cst_62 [1] : vector<8x32xf32> to vector<8xf32>
    %117 = vector.shape_cast %116 : vector<8xf32> to vector<8x1xf32>
    %cst_63 = arith.constant 3.200000e+01 : f32
    %118 = vector.broadcast %cst_63 : f32 to vector<8x1xf32>
    %119 = arith.divf %117, %118 : vector<8x1xf32>
    %120 = vector.broadcast %112 : vector<8x1xf32> to vector<8x32xf32>
    %121 = arith.subf %106, %120 : vector<8x32xf32>
    %cst_64 = arith.constant 9.99999974E-6 : f32
    %122 = vector.broadcast %cst_64 : f32 to vector<8x1xf32>
    %123 = arith.addf %119, %122 : vector<8x1xf32>
    %124 = math.rsqrt %123 : vector<8x1xf32>
    %125 = vector.broadcast %124 : vector<8x1xf32> to vector<8x32xf32>
    %126 = arith.mulf %121, %125 : vector<8x32xf32>
    %127 = vector.broadcast %107 : vector<1x32xf32> to vector<8x32xf32>
    %128 = arith.mulf %126, %127 : vector<8x32xf32>
    %129 = vector.broadcast %108 : vector<1x32xf32> to vector<8x32xf32>
    %130 = arith.addf %128, %129 : vector<8x32xf32>
    %131 = arith.truncf %130 : vector<8x32xf32> to vector<8x32xbf16>
    %c0_65 = arith.constant 0 : index
    %c0_66 = arith.constant 0 : index
    %132 = vector.load %arg14[%c0_65, %c0_66] : memref<32x64xbf16, #tpu.memory_space<vmem>>, vector<32x64xbf16>
    %cst_67 = arith.constant dense<0.000000e+00> : vector<8x64xf32>
    %133 = tpu.matmul %131, %132, %cst_67 {dimension_numbers = #tpu.dot_dimension_numbers<[1], [0], [0], [1], [0, 0, 1, 1], [], []>} : vector<8x32xbf16>, vector<32x64xbf16>, vector<8x64xf32> -> vector<8x64xf32>
    %c0_68 = arith.constant 0 : index
    %c0_69 = arith.constant 0 : index
    %134 = vector.load %arg15[%c0_68, %c0_69] : memref<1x64xf32, #tpu.memory_space<vmem>>, vector<1x64xf32>
    %135 = vector.broadcast %134 : vector<1x64xf32> to vector<8x64xf32>
    %136 = arith.addf %133, %135 : vector<8x64xf32>
    %cst_70 = arith.constant 5.000000e-01 : f32
    %137 = vector.broadcast %cst_70 : f32 to vector<8x64xf32>
    %138 = arith.mulf %137, %136 : vector<8x64xf32>
    %cst_71 = arith.constant 4.471500e-02 : f32
    %139 = vector.broadcast %cst_71 : f32 to vector<8x64xf32>
    %140 = arith.mulf %139, %136 : vector<8x64xf32>
    %141 = arith.mulf %140, %136 : vector<8x64xf32>
    %142 = arith.mulf %141, %136 : vector<8x64xf32>
    %143 = arith.addf %136, %142 : vector<8x64xf32>
    %cst_72 = arith.constant 0.797884583 : f32
    %144 = vector.broadcast %cst_72 : f32 to vector<8x64xf32>
    %145 = arith.mulf %144, %143 : vector<8x64xf32>
    %146 = math.tanh %145 : vector<8x64xf32>
    %cst_73 = arith.constant 1.000000e+00 : f32
    %147 = vector.broadcast %cst_73 : f32 to vector<8x64xf32>
    %148 = arith.addf %147, %146 : vector<8x64xf32>
    %149 = arith.mulf %138, %148 : vector<8x64xf32>
    %150 = arith.truncf %149 : vector<8x64xf32> to vector<8x64xbf16>
    %c0_74 = arith.constant 0 : index
    %c0_75 = arith.constant 0 : index
    %151 = vector.load %arg16[%c0_74, %c0_75] : memref<64x32xbf16, #tpu.memory_space<vmem>>, vector<64x32xbf16>
    %cst_76 = arith.constant dense<0.000000e+00> : vector<8x32xf32>
    %152 = tpu.matmul %150, %151, %cst_76 {dimension_numbers = #tpu.dot_dimension_numbers<[1], [0], [0], [1], [0, 0, 1, 1], [], []>} : vector<8x64xbf16>, vector<64x32xbf16>, vector<8x32xf32> -> vector<8x32xf32>
    %c0_77 = arith.constant 0 : index
    %c0_78 = arith.constant 0 : index
    %153 = vector.load %arg17[%c0_77, %c0_78] : memref<1x32xf32, #tpu.memory_space<vmem>>, vector<1x32xf32>
    %154 = vector.broadcast %153 : vector<1x32xf32> to vector<8x32xf32>
    %155 = arith.addf %152, %154 : vector<8x32xf32>
    %156 = arith.addf %106, %155 : vector<8x32xf32>
    %c0_79 = arith.constant 0 : index
    %c0_80 = arith.constant 0 : index
    %c0_81 = arith.constant 0 : index
    %157 = vector.load %arg18[%c0_79, %c0_80, %c0_81] : memref<1x8x32xf32, #tpu.memory_space<vmem>>, vector<1x8x32xf32>
    %158 = vector.shape_cast %157 : vector<1x8x32xf32> to vector<8x32xf32>
    %159 = vector.shape_cast %156 : vector<8x32xf32> to vector<1x8x32xf32>
    tpu.vector_store %arg18[%c0_79, %c0_80, %c0_81], %159 {strides = array<i32>} : memref<1x8x32xf32, #tpu.memory_space<vmem>>, vector<1x8x32xf32>,
    return
  }
  func.func @transform_0(%arg0: i32, %arg1: i32) -> (i32, i32, i32) {
    %c0_i32 = arith.constant 0 : i32
    %c0_i32_0 = arith.constant 0 : i32
    %c0_i32_1 = arith.constant 0 : i32
    return %arg0, %c0_i32, %c0_i32_0 : i32, i32, i32
  }
  func.func @transform_1(%arg0: i32, %arg1: i32) -> (i32, i32) {
    %c0_i32 = arith.constant 0 : i32
    %c0_i32_0 = arith.constant 0 : i32
    return %arg1, %c0_i32 : i32, i32
  }
  func.func @transform_2(%arg0: i32, %arg1: i32) -> (i32, i32) {
    %c0_i32 = arith.constant 0 : i32
    %c0_i32_0 = arith.constant 0 : i32
    %c0_i32_1 = arith.constant 0 : i32
    return %c0_i32, %c0_i32_0 : i32, i32
  }
  func.func @transform_3(%arg0: i32, %arg1: i32) -> (i32, i32) {
    %c0_i32 = arith.constant 0 : i32
    %c0_i32_0 = arith.constant 0 : i32
    %c0_i32_1 = arith.constant 0 : i32
    return %c0_i32, %c0_i32_0 : i32, i32
  }
  func.func @transform_4(%arg0: i32, %arg1: i32) -> (i32, i32) {
    %c0_i32 = arith.constant 0 : i32
    %c0_i32_0 = arith.constant 0 : i32
    %c0_i32_1 = arith.constant 0 : i32
    return %c0_i32, %c0_i32_0 : i32, i32
  }
  func.func @transform_5(%arg0: i32, %arg1: i32) -> (i32, i32) {
    %c0_i32 = arith.constant 0 : i32
    %c0_i32_0 = arith.constant 0 : i32
    %c0_i32_1 = arith.constant 0 : i32
    return %c0_i32, %c0_i32_0 : i32, i32
  }
  func.func @transform_6(%arg0: i32, %arg1: i32) -> (i32, i32) {
    %c0_i32 = arith.constant 0 : i32
    %c0_i32_0 = arith.constant 0 : i32
    %c0_i32_1 = arith.constant 0 : i32
    return %c0_i32, %c0_i32_0 : i32, i32
  }
  func.func @transform_7(%arg0: i32, %arg1: i32) -> (i32, i32) {
    %c0_i32 = arith.constant 0 : i32
    %c0_i32_0 = arith.constant 0 : i32
    %c0_i32_1 = arith.constant 0 : i32
    return %c0_i32, %c0_i32_0 : i32, i32
  }
  func.func @transform_8(%arg0: i32, %arg1: i32) -> (i32, i32) {
    %c0_i32 = arith.constant 0 : i32
    %c0_i32_0 = arith.constant 0 : i32
    %c0_i32_1 = arith.constant 0 : i32
    return %c0_i32, %c0_i32_0 : i32, i32
  }
  func.func @transform_9(%arg0: i32, %arg1: i32) -> (i32, i32) {
    %c0_i32 = arith.constant 0 : i32
    %c0_i32_0 = arith.constant 0 : i32
    %c0_i32_1 = arith.constant 0 : i32
    return %c0_i32, %c0_i32_0 : i32, i32
  }
  func.func @transform_10(%arg0: i32, %arg1: i32) -> (i32, i32) {
    %c0_i32 = arith.constant 0 : i32
    %c0_i32_0 = arith.constant 0 : i32
    %c0_i32_1 = arith.constant 0 : i32
    return %c0_i32, %c0_i32_0 : i32, i32
  }
  func.func @transform_11(%arg0: i32, %arg1: i32) -> (i32, i32) {
    %c0_i32 = arith.constant 0 : i32
    %c0_i32_0 = arith.constant 0 : i32
    %c0_i32_1 = arith.constant 0 : i32
    return %c0_i32, %c0_i32_0 : i32, i32
  }
  func.func @transform_12(%arg0: i32, %arg1: i32) -> (i32, i32) {
    %c0_i32 = arith.constant 0 : i32
    %c0_i32_0 = arith.constant 0 : i32
    %c0_i32_1 = arith.constant 0 : i32
    return %c0_i32, %c0_i32_0 : i32, i32
  }
  func.func @transform_13(%arg0: i32, %arg1: i32) -> (i32, i32) {
    %c0_i32 = arith.constant 0 : i32
    %c0_i32_0 = arith.constant 0 : i32
    %c0_i32_1 = arith.constant 0 : i32
    return %c0_i32, %c0_i32_0 : i32, i32
  }
  func.func @transform_14(%arg0: i32, %arg1: i32) -> (i32, i32) {
    %c0_i32 = arith.constant 0 : i32
    %c0_i32_0 = arith.constant 0 : i32
    %c0_i32_1 = arith.constant 0 : i32
    return %c0_i32, %c0_i32_0 : i32, i32
  }
  func.func @transform_15(%arg0: i32, %arg1: i32) -> (i32, i32) {
    %c0_i32 = arith.constant 0 : i32
    %c0_i32_0 = arith.constant 0 : i32
    %c0_i32_1 = arith.constant 0 : i32
    return %c0_i32, %c0_i32_0 : i32, i32
  }
  func.func @transform_16(%arg0: i32, %arg1: i32) -> (i32, i32, i32) {
    %c0_i32 = arith.constant 0 : i32
    %c0_i32_0 = arith.constant 0 : i32
    return %arg0, %arg1, %c0_i32 : i32, i32, i32
  }
  func.func @transform_17(%arg0: i32, %arg1: i32) -> (i32, i32, i32, i32) {
    %c0_i32 = arith.constant 0 : i32
    %c0_i32_0 = arith.constant 0 : i32
    %c0_i32_1 = arith.constant 0 : i32
    return %arg0, %c0_i32, %arg1, %c0_i32_0 : i32, i32, i32, i32
  }
}

</mosaic_0001>

<llo_original>
// kernel: tpu_custom_call.1
$region0: #{tpu_custom_call.1}
  #allocation0 [shape = 'u32[]', space=smem, size = 0x4, offset = 0x4, fixed_abs, tag = 'smem constant byte address 0x4 - core index']
  #allocation1 [shape = 'u32[72,128]{1,0:T(1,128)}', space=vmem, size = 0x9000, scoped, tag = 'internal scratch']
  #allocation2 [shape = 'bf16[4,8,8]{2,1,0:T(8,128)(2,1)}', space=vmem, size = 0x2000, scoped, tag = 'scratch operand']
  #allocation3 [shape = 'bf16[4,8,8]{2,1,0:T(8,128)(2,1)}', space=vmem, size = 0x2000, scoped, tag = 'scratch operand']
  #allocation4 [shape = 'bf16[4,8,8]{2,1,0:T(8,128)(2,1)}', space=vmem, size = 0x2000, scoped, tag = 'scratch operand']
  #allocation5 [shape = 'bf16[8,32]{1,0:T(8,128)(2,1)}', space=vmem, size = 0x800, scoped, tag = 'scratch operand']
  %s0 = inlined_call_operand.vmem [shape: f32[2,8,32], index: 0, kind: input, shape index: {}]
  %s1 = inlined_call_operand.hbm [shape: f32[8,8], index: 1, kind: input, shape index: {}]
  %s2 = inlined_call_operand.vmem [shape: f32[1,32], index: 2, kind: input, shape index: {}]
  %s3 = inlined_call_operand.vmem [shape: f32[1,32], index: 3, kind: input, shape index: {}]
  %s4 = inlined_call_operand.vmem [shape: bf16[32,32], index: 4, kind: input, shape index: {}]
  %s5 = inlined_call_operand.vmem [shape: f32[1,32], index: 5, kind: input, shape index: {}]
  %s6 = inlined_call_operand.vmem [shape: bf16[32,64], index: 6, kind: input, shape index: {}]
  %s7 = inlined_call_operand.vmem [shape: f32[1,64], index: 7, kind: input, shape index: {}]
  %s8 = inlined_call_operand.hbm [shape: bf16[32,32], index: 8, kind: input, shape index: {}]
  %s9 = inlined_call_operand.vmem [shape: f32[1,32], index: 9, kind: input, shape index: {}]
  %s10 = inlined_call_operand.vmem [shape: f32[1,32], index: 10, kind: input, shape index: {}]
  %s11 = inlined_call_operand.vmem [shape: f32[1,32], index: 11, kind: input, shape index: {}]
  %s12 = inlined_call_operand.hbm [shape: bf16[32,64], index: 12, kind: input, shape index: {}]
  %s13 = inlined_call_operand.vmem [shape: f32[1,64], index: 13, kind: input, shape index: {}]
  %s14 = inlined_call_operand.vmem [shape: bf16[64,32], index: 14, kind: input, shape index: {}]
  %s15 = inlined_call_operand.vmem [shape: f32[1,32], index: 15, kind: input, shape index: {}]
  %s16 = inlined_call_operand.hbm [shape: f32[2,8,32], index: 16, kind: output, shape index: {0}]
  %s17 = inlined_call_operand.hbm [shape: bf16[2,4,8,8], index: 17, kind: output, shape index: {1}]
  %18 = xla_tuple %s16, %s17
  %s19 = sld [smem:[#allocation0]]
  $region121: #{tpu_custom_call.1} parent=0
    _
  %s21 = ssub.s32 1, %s19
  %s22 = scalar_select 0, %s21, %s19
  $region1: #{tpu_custom_call.1} parent=0
    #allocation6 [shape = 'u8[4096]{0}', space=vmem, size = 0x1000, scoped, tag = 'input window, operand 1, single buffered']
    #allocation7 [shape = 's32[2]{0}', space=sflag, size = 0x8, scoped, tag = 'scoped memory for tpu_custom_call.1']
    #allocation8 [shape = 's32[2]{0}', space=sflag, size = 0x8, scoped, tag = 'scoped memory for tpu_custom_call.1']
    #allocation9 [shape = 'u8[8192]{0}', space=vmem, size = 0x2000, scoped, tag = 'input window, operand 8, single buffered']
    #allocation10 [shape = 's32[1]{0}', space=sflag, size = 0x4, scoped, tag = 'scoped memory for tpu_custom_call.1']
    #allocation11 [shape = 'u8[8192]{0}', space=vmem, size = 0x2000, scoped, tag = 'input window, operand 12, single buffered']
    #allocation12 [shape = 'u8[8192]{0}', space=vmem, size = 0x2000, scoped, tag = 'output window, operand 0']
    #allocation13 [shape = 'u8[16384]{0}', space=vmem, size = 0x4000, scoped, tag = 'output window, operand 1']
    #allocation14 [shape = 's32[2]{0}', space=sflag, size = 0x8, scoped, tag = 'scoped memory for tpu_custom_call.1']
    %23 = vsyncpa [#allocation7], 0
    %24 = vsyncpa [#allocation10], 0
    %25 = vsyncpa [#allocation8], 0
    %s26 = scalar_lea.sflag [#allocation8], 1
    %27 = vsyncpa %s26, 0
    %28 = vsyncpa [#allocation14], 0
    %s29 = scalar_lea.sflag [#allocation14], 1
    %30 = vsyncpa %s29, 0
    loop: start=0, step=1, limit=4
    $region2: #{tpu_custom_call.1} parent=1 // loop_pre_header
      _
    $region3: #{tpu_custom_call.1} parent=1 // loop_header
      %s32 = sphi 0, %s36
      %p33 = scmp.ge.s32.totalorder %s32, 4
      %s39 = sphi 0, %s51
      %s40 = sphi 0, %s47
      %s41 = sphi 0, %s39
      %s42 = sphi 0, %s40
      %s43 = sphi 0, %s41
      %s44 = sphi 0, %s42
      %s54 = sphi 0, %s56
      %s57 = sphi 0, %s54
      %s58 = sphi 0, %s57
      %s74 = sphi 0, %s58
      %s80 = sphi 0, %s82
      %s83 = sphi 0, %s80
      %s84 = sphi 0, %s83
      %s100 = sphi 0, %s84
      %s104 = sphi 0, %s104
      %s106 = sphi 0, %s104
      %s107 = sphi 0, %s106
      %s121 = sphi 0, %s107
      %s125 = sphi 0, %s125
      %s127 = sphi 0, %s125
      %s128 = sphi 0, %s127
      %s142 = sphi 0, %s128
      %s146 = sphi 0, %s146
      %s148 = sphi 0, %s146
      %s149 = sphi 0, %s148
      %s163 = sphi 0, %s149
      %s167 = sphi 0, %s167
      %s169 = sphi 0, %s167
      %s170 = sphi 0, %s169
      %s184 = sphi 0, %s170
      %s188 = sphi 0, %s188
      %s190 = sphi 0, %s188
      %s191 = sphi 0, %s190
      %s205 = sphi 0, %s191
      %s209 = sphi 0, %s209
      %s211 = sphi 0, %s209
      %s212 = sphi 0, %s211
      %s226 = sphi 0, %s212
      %s230 = sphi 0, %s230
      %s232 = sphi 0, %s230
      %s233 = sphi 0, %s232
      %s247 = sphi 0, %s233
      %s251 = sphi 0, %s251
      %s253 = sphi 0, %s251
      %s254 = sphi 0, %s253
      %s268 = sphi 0, %s254
      %s272 = sphi 0, %s272
      %s274 = sphi 0, %s272
      %s275 = sphi 0, %s274
      %s289 = sphi 0, %s275
      %s293 = sphi 0, %s293
      %s295 = sphi 0, %s293
      %s296 = sphi 0, %s295
      %s310 = sphi 0, %s296
      %s314 = sphi 0, %s314
      %s316 = sphi 0, %s314
      %s317 = sphi 0, %s316
      %s331 = sphi 0, %s317
      %s335 = sphi 0, %s335
      %s337 = sphi 0, %s335
      %s338 = sphi 0, %s337
      %s352 = sphi 0, %s338
      %s356 = sphi 0, %s356
      %s358 = sphi 0, %s356
      %s359 = sphi 0, %s358
      %s373 = sphi 0, %s359
      %s377 = sphi 0, %s377
      %s379 = sphi 0, %s377
      %s380 = sphi 0, %s379
      %s394 = sphi 0, %s380
      %s402 = sphi 0, %s404
      %s405 = sphi 0, %s402
      %s406 = sphi 0, %s405
      %s422 = sphi 0, %s406
      %s430 = sphi 0, %s432
      %s433 = sphi 0, %s430
      %s434 = sphi 0, %s433
      %s450 = sphi 0, %s434
    $region4: #{tpu_custom_call.1} parent=1 // loop_header_branch
      %35 = sbr.rel (%p33) target = $region8
    $region5: #{tpu_custom_call.1} parent=1 // loop_body
      %s37 = ssub.s32 %s32, 1
      %s38 = ssub.s32 %s32, 2
      %s45 = sadd.s32 1, %s40
      %p46 = scmp.ge.s32.totalorder %s45, 1
      %s47 = scalar_select %p46, 0, %s45
      %s48 = sadd.s32 1, %s39
      %s49 = scalar_select %p46, %s48, %s39
      %p50 = scmp.ge.s32.totalorder %s49, 2
      %s51 = scalar_select %p50, 0, %s49
      %s52 = ssub.s32 %s39, %s51
      %p53 = scmp.eq.s32.totalorder %s52, 0
      %s55 = sadd.s32 %s54, 1
      %s56 = scalar_select %p53, %s54, %s55
      %p59 = pneg %p53
      %p60 = scmp.eq.s32.totalorder %s32, 1
      %p61 = por %p59, %p60
      %p62 = scmp.ne.s32.totalorder %s54, %s57
      %p63 = scmp.eq.s32.totalorder %s32, 0
      %p64 = por %p62, %p63
      %p65 = scmp.ne.s32.totalorder %s54, %s57
      %p66 = scmp.eq.s32.totalorder %s37, 1
      %p67 = por %p65, %p66
      %p68 = scmp.ne.s32.totalorder %s57, %s58
      %p69 = scmp.eq.s32.totalorder %s37, 0
      %p70 = por %p68, %p69
      %p71 = scmp.ne.s32.totalorder %s57, %s58
      %p72 = scmp.eq.s32.totalorder %s38, 1
      %p73 = por %p71, %p72
      %p75 = scmp.ne.s32.totalorder %s58, %s74
      %p76 = scmp.eq.s32.totalorder %s38, 0
      %p77 = por %p75, %p76
      %s78 = ssub.s32 %s40, %s47
      %p79 = scmp.eq.s32.totalorder %s78, 0
      %s81 = sadd.s32 %s80, 1
      %s82 = scalar_select %p79, %s80, %s81
      %p85 = pneg %p79
      %p86 = scmp.eq.s32.totalorder %s32, 1
      %p87 = por %p85, %p86
      %p88 = scmp.ne.s32.totalorder %s80, %s83
      %p89 = scmp.eq.s32.totalorder %s32, 0
      %p90 = por %p88, %p89
      %p91 = scmp.ne.s32.totalorder %s80, %s83
      %p92 = scmp.eq.s32.totalorder %s37, 1
      %p93 = por %p91, %p92
      %p94 = scmp.ne.s32.totalorder %s83, %s84
      %p95 = scmp.eq.s32.totalorder %s37, 0
      %p96 = por %p94, %p95
      %p97 = scmp.ne.s32.totalorder %s83, %s84
      %p98 = scmp.eq.s32.totalorder %s38, 1
      %p99 = por %p97, %p98
      %p101 = scmp.ne.s32.totalorder %s84, %s100
      %p102 = scmp.eq.s32.totalorder %s38, 0
      %p103 = por %p101, %p102
      %s105 = sadd.s32 %s104, 1
      %p108 = scmp.eq.s32.totalorder %s32, 1
      %p109 = scmp.ne.s32.totalorder %s104, %s106
      %p110 = scmp.eq.s32.totalorder %s32, 0
      %p111 = por %p109, %p110
      %p112 = scmp.ne.s32.totalorder %s104, %s106
      %p113 = scmp.eq.s32.totalorder %s37, 1
      %p114 = por %p112, %p113
      %p115 = scmp.ne.s32.totalorder %s106, %s107
      %p116 = scmp.eq.s32.totalorder %s37, 0
      %p117 = por %p115, %p116
      %p118 = scmp.ne.s32.totalorder %s106, %s107
      %p119 = scmp.eq.s32.totalorder %s38, 1
      %p120 = por %p118, %p119
      %p122 = scmp.ne.s32.totalorder %s107, %s121
      %p123 = scmp.eq.s32.totalorder %s38, 0
      %p124 = por %p122, %p123
      %s126 = sadd.s32 %s125, 1
      %p129 = scmp.eq.s32.totalorder %s32, 1
      %p130 = scmp.ne.s32.totalorder %s125, %s127
      %p131 = scmp.eq.s32.totalorder %s32, 0
      %p132 = por %p130, %p131
      %p133 = scmp.ne.s32.totalorder %s125, %s127
      %p134 = scmp.eq.s32.totalorder %s37, 1
      %p135 = por %p133, %p134
      %p136 = scmp.ne.s32.totalorder %s127, %s128
      %p137 = scmp.eq.s32.totalorder %s37, 0
      %p138 = por %p136, %p137
      %p139 = scmp.ne.s32.totalorder %s127, %s128
      %p140 = scmp.eq.s32.totalorder %s38, 1
      %p141 = por %p139, %p140
      %p143 = scmp.ne.s32.totalorder %s128, %s142
      %p144 = scmp.eq.s32.totalorder %s38, 0
      %p145 = por %p143, %p144
      %s147 = sadd.s32 %s146, 1
      %p150 = scmp.eq.s32.totalorder %s32, 1
      %p151 = scmp.ne.s32.totalorder %s146, %s148
      %p152 = scmp.eq.s32.totalorder %s32, 0
      %p153 = por %p151, %p152
      %p154 = scmp.ne.s32.totalorder %s146, %s148
      %p155 = scmp.eq.s32.totalorder %s37, 1
      %p156 = por %p154, %p155
      %p157 = scmp.ne.s32.totalorder %s148, %s149
      %p158 = scmp.eq.s32.totalorder %s37, 0
      %p159 = por %p157, %p158
      %p160 = scmp.ne.s32.totalorder %s148, %s149
      %p161 = scmp.eq.s32.totalorder %s38, 1
      %p162 = por %p160, %p161
      %p164 = scmp.ne.s32.totalorder %s149, %s163
      %p165 = scmp.eq.s32.totalorder %s38, 0
      %p166 = por %p164, %p165
      %s168 = sadd.s32 %s167, 1
      %p171 = scmp.eq.s32.totalorder %s32, 1
      %p172 = scmp.ne.s32.totalorder %s167, %s169
      %p173 = scmp.eq.s32.totalorder %s32, 0
      %p174 = por %p172, %p173
      %p175 = scmp.ne.s32.totalorder %s167, %s169
      %p176 = scmp.eq.s32.totalorder %s37, 1
      %p177 = por %p175, %p176
      %p178 = scmp.ne.s32.totalorder %s169, %s170
      %p179 = scmp.eq.s32.totalorder %s37, 0
      %p180 = por %p178, %p179
      %p181 = scmp.ne.s32.totalorder %s169, %s170
      %p182 = scmp.eq.s32.totalorder %s38, 1
      %p183 = por %p181, %p182
      %p185 = scmp.ne.s32.totalorder %s170, %s184
      %p186 = scmp.eq.s32.totalorder %s38, 0
      %p187 = por %p185, %p186
      %s189 = sadd.s32 %s188, 1
      %p192 = scmp.eq.s32.totalorder %s32, 1
      %p193 = scmp.ne.s32.totalorder %s188, %s190
      %p194 = scmp.eq.s32.totalorder %s32, 0
      %p195 = por %p193, %p194
      %p196 = scmp.ne.s32.totalorder %s188, %s190
      %p197 = scmp.eq.s32.totalorder %s37, 1
      %p198 = por %p196, %p197
      %p199 = scmp.ne.s32.totalorder %s190, %s191
      %p200 = scmp.eq.s32.totalorder %s37, 0
      %p201 = por %p199, %p200
      %p202 = scmp.ne.s32.totalorder %s190, %s191
      %p203 = scmp.eq.s32.totalorder %s38, 1
      %p204 = por %p202, %p203
      %p206 = scmp.ne.s32.totalorder %s191, %s205
      %p207 = scmp.eq.s32.totalorder %s38, 0
      %p208 = por %p206, %p207
      %s210 = sadd.s32 %s209, 1
      %p213 = scmp.eq.s32.totalorder %s32, 1
      %p214 = scmp.ne.s32.totalorder %s209, %s211
      %p215 = scmp.eq.s32.totalorder %s32, 0
      %p216 = por %p214, %p215
      %p217 = scmp.ne.s32.totalorder %s209, %s211
      %p218 = scmp.eq.s32.totalorder %s37, 1
      %p219 = por %p217, %p218
      %p220 = scmp.ne.s32.totalorder %s211, %s212
      %p221 = scmp.eq.s32.totalorder %s37, 0
      %p222 = por %p220, %p221
      %p223 = scmp.ne.s32.totalorder %s211, %s212
      %p224 = scmp.eq.s32.totalorder %s38, 1
      %p225 = por %p223, %p224
      %p227 = scmp.ne.s32.totalorder %s212, %s226
      %p228 = scmp.eq.s32.totalorder %s38, 0
      %p229 = por %p227, %p228
      %s231 = sadd.s32 %s230, 1
      %p234 = scmp.eq.s32.totalorder %s32, 1
      %p235 = scmp.ne.s32.totalorder %s230, %s232
      %p236 = scmp.eq.s32.totalorder %s32, 0
      %p237 = por %p235, %p236
      %p238 = scmp.ne.s32.totalorder %s230, %s232
      %p239 = scmp.eq.s32.totalorder %s37, 1
      %p240 = por %p238, %p239
      %p241 = scmp.ne.s32.totalorder %s232, %s233
      %p242 = scmp.eq.s32.totalorder %s37, 0
      %p243 = por %p241, %p242
      %p244 = scmp.ne.s32.totalorder %s232, %s233
      %p245 = scmp.eq.s32.totalorder %s38, 1
      %p246 = por %p244, %p245
      %p248 = scmp.ne.s32.totalorder %s233, %s247
      %p249 = scmp.eq.s32.totalorder %s38, 0
      %p250 = por %p248, %p249
      %s252 = sadd.s32 %s251, 1
      %p255 = scmp.eq.s32.totalorder %s32, 1
      %p256 = scmp.ne.s32.totalorder %s251, %s253
      %p257 = scmp.eq.s32.totalorder %s32, 0
      %p258 = por %p256, %p257
      %p259 = scmp.ne.s32.totalorder %s251, %s253
      %p260 = scmp.eq.s32.totalorder %s37, 1
      %p261 = por %p259, %p260
      %p262 = scmp.ne.s32.totalorder %s253, %s254
      %p263 = scmp.eq.s32.totalorder %s37, 0
      %p264 = por %p262, %p263
      %p265 = scmp.ne.s32.totalorder %s253, %s254
      %p266 = scmp.eq.s32.totalorder %s38, 1
      %p267 = por %p265, %p266
      %p269 = scmp.ne.s32.totalorder %s254, %s268
      %p270 = scmp.eq.s32.totalorder %s38, 0
      %p271 = por %p269, %p270
      %s273 = sadd.s32 %s272, 1
      %p276 = scmp.eq.s32.totalorder %s32, 1
      %p277 = scmp.ne.s32.totalorder %s272, %s274
      %p278 = scmp.eq.s32.totalorder %s32, 0
      %p279 = por %p277, %p278
      %p280 = scmp.ne.s32.totalorder %s272, %s274
      %p281 = scmp.eq.s32.totalorder %s37, 1
      %p282 = por %p280, %p281
      %p283 = scmp.ne.s32.totalorder %s274, %s275
      %p284 = scmp.eq.s32.totalorder %s37, 0
      %p285 = por %p283, %p284
      %p286 = scmp.ne.s32.totalorder %s274, %s275
      %p287 = scmp.eq.s32.totalorder %s38, 1
      %p288 = por %p286, %p287
      %p290 = scmp.ne.s32.totalorder %s275, %s289
      %p291 = scmp.eq.s32.totalorder %s38, 0
      %p292 = por %p290, %p291
      %s294 = sadd.s32 %s293, 1
      %p297 = scmp.eq.s32.totalorder %s32, 1
      %p298 = scmp.ne.s32.totalorder %s293, %s295
      %p299 = scmp.eq.s32.totalorder %s32, 0
      %p300 = por %p298, %p299
      %p301 = scmp.ne.s32.totalorder %s293, %s295
      %p302 = scmp.eq.s32.totalorder %s37, 1
      %p303 = por %p301, %p302
      %p304 = scmp.ne.s32.totalorder %s295, %s296
      %p305 = scmp.eq.s32.totalorder %s37, 0
      %p306 = por %p304, %p305
      %p307 = scmp.ne.s32.totalorder %s295, %s296
      %p308 = scmp.eq.s32.totalorder %s38, 1
      %p309 = por %p307, %p308
      %p311 = scmp.ne.s32.totalorder %s296, %s310
      %p312 = scmp.eq.s32.totalorder %s38, 0
      %p313 = por %p311, %p312
      %s315 = sadd.s32 %s314, 1
      %p318 = scmp.eq.s32.totalorder %s32, 1
      %p319 = scmp.ne.s32.totalorder %s314, %s316
      %p320 = scmp.eq.s32.totalorder %s32, 0
      %p321 = por %p319, %p320
      %p322 = scmp.ne.s32.totalorder %s314, %s316
      %p323 = scmp.eq.s32.totalorder %s37, 1
      %p324 = por %p322, %p323
      %p325 = scmp.ne.s32.totalorder %s316, %s317
      %p326 = scmp.eq.s32.totalorder %s37, 0
      %p327 = por %p325, %p326
      %p328 = scmp.ne.s32.totalorder %s316, %s317
      %p329 = scmp.eq.s32.totalorder %s38, 1
      %p330 = por %p328, %p329
      %p332 = scmp.ne.s32.totalorder %s317, %s331
      %p333 = scmp.eq.s32.totalorder %s38, 0
      %p334 = por %p332, %p333
      %s336 = sadd.s32 %s335, 1
      %p339 = scmp.eq.s32.totalorder %s32, 1
      %p340 = scmp.ne.s32.totalorder %s335, %s337
      %p341 = scmp.eq.s32.totalorder %s32, 0
      %p342 = por %p340, %p341
      %p343 = scmp.ne.s32.totalorder %s335, %s337
      %p344 = scmp.eq.s32.totalorder %s37, 1
      %p345 = por %p343, %p344
      %p346 = scmp.ne.s32.totalorder %s337, %s338
      %p347 = scmp.eq.s32.totalorder %s37, 0
      %p348 = por %p346, %p347
      %p349 = scmp.ne.s32.totalorder %s337, %s338
      %p350 = scmp.eq.s32.totalorder %s38, 1
      %p351 = por %p349, %p350
      %p353 = scmp.ne.s32.totalorder %s338, %s352
      %p354 = scmp.eq.s32.totalorder %s38, 0
      %p355 = por %p353, %p354
      %s357 = sadd.s32 %s356, 1
      %p360 = scmp.eq.s32.totalorder %s32, 1
      %p361 = scmp.ne.s32.totalorder %s356, %s358
      %p362 = scmp.eq.s32.totalorder %s32, 0
      %p363 = por %p361, %p362
      %p364 = scmp.ne.s32.totalorder %s356, %s358
      %p365 = scmp.eq.s32.totalorder %s37, 1
      %p366 = por %p364, %p365
      %p367 = scmp.ne.s32.totalorder %s358, %s359
      %p368 = scmp.eq.s32.totalorder %s37, 0
      %p369 = por %p367, %p368
      %p370 = scmp.ne.s32.totalorder %s358, %s359
      %p371 = scmp.eq.s32.totalorder %s38, 1
      %p372 = por %p370, %p371
      %p374 = scmp.ne.s32.totalorder %s359, %s373
      %p375 = scmp.eq.s32.totalorder %s38, 0
      %p376 = por %p374, %p375
      %s378 = sadd.s32 %s377, 1
      %p381 = scmp.eq.s32.totalorder %s32, 1
      %p382 = scmp.ne.s32.totalorder %s377, %s379
      %p383 = scmp.eq.s32.totalorder %s32, 0
      %p384 = por %p382, %p383
      %p385 = scmp.ne.s32.totalorder %s377, %s379
      %p386 = scmp.eq.s32.totalorder %s37, 1
      %p387 = por %p385, %p386
      %p388 = scmp.ne.s32.totalorder %s379, %s380
      %p389 = scmp.eq.s32.totalorder %s37, 0
      %p390 = por %p388, %p389
      %p391 = scmp.ne.s32.totalorder %s379, %s380
      %p392 = scmp.eq.s32.totalorder %s38, 1
      %p393 = por %p391, %p392
      %p395 = scmp.ne.s32.totalorder %s380, %s394
      %p396 = scmp.eq.s32.totalorder %s38, 0
      %p397 = por %p395, %p396
      %s398 = ssub.s32 %s39, %s51
      %s399 = ssub.s32 %s40, %s47
      %s400 = sor.u32 %s398, %s399
      %p401 = scmp.eq.s32.totalorder %s400, 0
      %s403 = sadd.s32 %s402, 1
      %s404 = scalar_select %p401, %s402, %s403
      %p407 = pneg %p401
      %p408 = scmp.eq.s32.totalorder %s32, 1
      %p409 = por %p407, %p408
      %p410 = scmp.ne.s32.totalorder %s402, %s405
      %p411 = scmp.eq.s32.totalorder %s32, 0
      %p412 = por %p410, %p411
      %p413 = scmp.ne.s32.totalorder %s402, %s405
      %p414 = scmp.eq.s32.totalorder %s37, 1
      %p415 = por %p413, %p414
      %p416 = scmp.ne.s32.totalorder %s405, %s406
      %p417 = scmp.eq.s32.totalorder %s37, 0
      %p418 = por %p416, %p417
      %p419 = scmp.ne.s32.totalorder %s405, %s406
      %p420 = scmp.eq.s32.totalorder %s38, 1
      %p421 = por %p419, %p420
      %p423 = scmp.ne.s32.totalorder %s406, %s422
      %p424 = scmp.eq.s32.totalorder %s38, 0
      %p425 = por %p423, %p424
      %s426 = ssub.s32 %s39, %s51
      %s427 = ssub.s32 %s40, %s47
      %s428 = sor.u32 %s426, %s427
      %p429 = scmp.eq.s32.totalorder %s428, 0
      %s431 = sadd.s32 %s430, 1
      %s432 = scalar_select %p429, %s430, %s431
      %p435 = pneg %p429
      %p436 = scmp.eq.s32.totalorder %s32, 1
      %p437 = por %p435, %p436
      %p438 = scmp.ne.s32.totalorder %s430, %s433
      %p439 = scmp.eq.s32.totalorder %s32, 0
      %p440 = por %p438, %p439
      %p441 = scmp.ne.s32.totalorder %s430, %s433
      %p442 = scmp.eq.s32.totalorder %s37, 1
      %p443 = por %p441, %p442
      %p444 = scmp.ne.s32.totalorder %s433, %s434
      %p445 = scmp.eq.s32.totalorder %s37, 0
      %p446 = por %p444, %p445
      %p447 = scmp.ne.s32.totalorder %s433, %s434
      %p448 = scmp.eq.s32.totalorder %s38, 1
      %p449 = por %p447, %p448
      %p451 = scmp.ne.s32.totalorder %s434, %s450
      %p452 = scmp.eq.s32.totalorder %s38, 0
      %p453 = por %p451, %p452
      %p454 = scmp.le.s32.totalorder 1, %s32
      %p455 = scmp.lt.s32.totalorder %s32, 3
      %p456 = pnand %p454, %p455
      %p457 = pneg %p456
      // Predicated region
      $region9: #{tpu_custom_call.1} parent=5 // pred_check
        _
      $region10: #{tpu_custom_call.1} parent=5 // pred_check_branch
        %459 = sbr.rel (%p456) target = $region12
      $region11: #{tpu_custom_call.1} parent=5 // pred_region
        %s460 = ssub.s32 %s32, 1
        // Predicated region
        $region13: #{tpu_custom_call.1} parent=11 // pred_check
          %p461 = pneg %p96
        $region14: #{tpu_custom_call.1} parent=11 // pred_check_branch
          %463 = sbr.rel (%p461) target = $region16
        $region15: #{tpu_custom_call.1} parent=11 // pred_region
          %465 = vsyncadd [#allocation7], 0
          %s466 = smul.addr %s42, 8
          %s467 = scalar_lea.hbm %s1, %s466
          %s469 = sshll.u32 %s467, 4
          %s470 = int_to_ptr.hbm [resolvable:$true] %s469
          %s471 = sshll.u32 [#allocation6], 4
          %s472 = int_to_ptr.vmem [resolvable:$true] %s471
          %474 = dma.hbm_to_vmem [thread:$0]  %s470, 128, %s472, [#allocation7]
        $region16: #{tpu_custom_call.1} parent=11 // pred_fallthru
          _
        // Predicated region
        $region17: #{tpu_custom_call.1} parent=11 // pred_check
          %p475 = pneg %p117
        $region18: #{tpu_custom_call.1} parent=11 // pred_check_branch
          %477 = sbr.rel (%p475) target = $region20
        $region19: #{tpu_custom_call.1} parent=11 // pred_region
          _
        $region20: #{tpu_custom_call.1} parent=11 // pred_fallthru
          _
        // Predicated region
        $region21: #{tpu_custom_call.1} parent=11 // pred_check
          %p478 = pneg %p138
        $region22: #{tpu_custom_call.1} parent=11 // pred_check_branch
          %480 = sbr.rel (%p478) target = $region24
        $region23: #{tpu_custom_call.1} parent=11 // pred_region
          _
        $region24: #{tpu_custom_call.1} parent=11 // pred_fallthru
          _
        // Predicated region
        $region25: #{tpu_custom_call.1} parent=11 // pred_check
          %p481 = pneg %p159
        $region26: #{tpu_custom_call.1} parent=11 // pred_check_branch
          %483 = sbr.rel (%p481) target = $region28
        $region27: #{tpu_custom_call.1} parent=11 // pred_region
          _
        $region28: #{tpu_custom_call.1} parent=11 // pred_fallthru
          _
        // Predicated region
        $region29: #{tpu_custom_call.1} parent=11 // pred_check
          %p484 = pneg %p180
        $region30: #{tpu_custom_call.1} parent=11 // pred_check_branch
          %486 = sbr.rel (%p484) target = $region32
        $region31: #{tpu_custom_call.1} parent=11 // pred_region
          _
        $region32: #{tpu_custom_call.1} parent=11 // pred_fallthru
          _
        // Predicated region
        $region33: #{tpu_custom_call.1} parent=11 // pred_check
          %p487 = pneg %p201
        $region34: #{tpu_custom_call.1} parent=11 // pred_check_branch
          %489 = sbr.rel (%p487) target = $region36
        $region35: #{tpu_custom_call.1} parent=11 // pred_region
          _
        $region36: #{tpu_custom_call.1} parent=11 // pred_fallthru
          _
        // Predicated region
        $region37: #{tpu_custom_call.1} parent=11 // pred_check
          %p490 = pneg %p222
        $region38: #{tpu_custom_call.1} parent=11 // pred_check_branch
          %492 = sbr.rel (%p490) target = $region40
        $region39: #{tpu_custom_call.1} parent=11 // pred_region
          _
        $region40: #{tpu_custom_call.1} parent=11 // pred_fallthru
          _
        // Predicated region
        $region41: #{tpu_custom_call.1} parent=11 // pred_check
          %p493 = pneg %p243
        $region42: #{tpu_custom_call.1} parent=11 // pred_check_branch
          %495 = sbr.rel (%p493) target = $region44
        $region43: #{tpu_custom_call.1} parent=11 // pred_region
          %497 = vsyncadd [#allocation10], 0
          %s498 = sshll.u32 %s8, 4
          %s499 = int_to_ptr.hbm [resolvable:$true] %s498
          %s500 = sshll.u32 [#allocation9], 4
          %s501 = int_to_ptr.vmem [resolvable:$true] %s500
          %506 = dma.hbm_to_vmem [thread:$0]  %s499, 256, %s501, [#allocation10], 64, 64, 4
        $region44: #{tpu_custom_call.1} parent=11 // pred_fallthru
          _
        // Predicated region
        $region45: #{tpu_custom_call.1} parent=11 // pred_check
          %p507 = pneg %p264
        $region46: #{tpu_custom_call.1} parent=11 // pred_check_branch
          %509 = sbr.rel (%p507) target = $region48
        $region47: #{tpu_custom_call.1} parent=11 // pred_region
          _
        $region48: #{tpu_custom_call.1} parent=11 // pred_fallthru
          _
        // Predicated region
        $region49: #{tpu_custom_call.1} parent=11 // pred_check
          %p510 = pneg %p285
        $region50: #{tpu_custom_call.1} parent=11 // pred_check_branch
          %512 = sbr.rel (%p510) target = $region52
        $region51: #{tpu_custom_call.1} parent=11 // pred_region
          _
        $region52: #{tpu_custom_call.1} parent=11 // pred_fallthru
          _
        // Predicated region
        $region53: #{tpu_custom_call.1} parent=11 // pred_check
          %p513 = pneg %p306
        $region54: #{tpu_custom_call.1} parent=11 // pred_check_branch
          %515 = sbr.rel (%p513) target = $region56
        $region55: #{tpu_custom_call.1} parent=11 // pred_region
          _
        $region56: #{tpu_custom_call.1} parent=11 // pred_fallthru
          _
        // Predicated region
        $region57: #{tpu_custom_call.1} parent=11 // pred_check
          %p516 = pneg %p327
        $region58: #{tpu_custom_call.1} parent=11 // pred_check_branch
          %518 = sbr.rel (%p516) target = $region60
        $region59: #{tpu_custom_call.1} parent=11 // pred_region
          %520 = vsyncadd [#allocation10], 0
          %s521 = sshll.u32 %s12, 4
          %s522 = int_to_ptr.hbm [resolvable:$true] %s521
          %s523 = sshll.u32 [#allocation11], 4
          %s524 = int_to_ptr.vmem [resolvable:$true] %s523
          %529 = dma.hbm_to_vmem [thread:$0]  %s522, 256, %s524, [#allocation10], 64, 64, 4
        $region60: #{tpu_custom_call.1} parent=11 // pred_fallthru
          _
        // Predicated region
        $region61: #{tpu_custom_call.1} parent=11 // pred_check
          %p530 = pneg %p348
        $region62: #{tpu_custom_call.1} parent=11 // pred_check_branch
          %532 = sbr.rel (%p530) target = $region64
        $region63: #{tpu_custom_call.1} parent=11 // pred_region
          _
        $region64: #{tpu_custom_call.1} parent=11 // pred_fallthru
          _
        // Predicated region
        $region65: #{tpu_custom_call.1} parent=11 // pred_check
          %p533 = pneg %p369
        $region66: #{tpu_custom_call.1} parent=11 // pred_check_branch
          %535 = sbr.rel (%p533) target = $region68
        $region67: #{tpu_custom_call.1} parent=11 // pred_region
          _
        $region68: #{tpu_custom_call.1} parent=11 // pred_fallthru
          _
        // Predicated region
        $region69: #{tpu_custom_call.1} parent=11 // pred_check
          %p536 = pneg %p390
        $region70: #{tpu_custom_call.1} parent=11 // pred_check_branch
          %538 = sbr.rel (%p536) target = $region72
        $region71: #{tpu_custom_call.1} parent=11 // pred_region
          _
        $region72: #{tpu_custom_call.1} parent=11 // pred_fallthru
          _
      $region12: #{tpu_custom_call.1} parent=5 // pred_fallthru
        _
      %p539 = scmp.lt.s32.totalorder %s32, 2
      // Predicated region
      $region73: #{tpu_custom_call.1} parent=5 // pred_check
        %p540 = pneg %p539
      $region74: #{tpu_custom_call.1} parent=5 // pred_check_branch
        %542 = sbr.rel (%p540) target = $region76
      $region75: #{tpu_custom_call.1} parent=5 // pred_region
        // Predicated region
        $region77: #{tpu_custom_call.1} parent=75 // pred_check
          %p543 = pneg %p64
        $region78: #{tpu_custom_call.1} parent=75 // pred_check_branch
          %545 = sbr.rel (%p543) target = $region80
        $region79: #{tpu_custom_call.1} parent=75 // pred_region
          %p546 = scmp.lt.s32.totalorder %s39, 1
          %s547 = scalar_select %p546, %s39, 1
          %s548 = smul.addr %s547, 8
          %s549 = scalar_lea.vmem %s0, %s548
        $region80: #{tpu_custom_call.1} parent=75 // pred_fallthru
          _
      $region76: #{tpu_custom_call.1} parent=5 // pred_fallthru
        _
      %p550 = scmp.le.s32.totalorder 1, %s32
      %p551 = scmp.lt.s32.totalorder %s32, 3
      %p552 = pnand %p550, %p551
      %p553 = pneg %p552
      // Predicated region
      $region81: #{tpu_custom_call.1} parent=5 // pred_check
        _
      $region82: #{tpu_custom_call.1} parent=5 // pred_check_branch
        %555 = sbr.rel (%p552) target = $region84
      $region83: #{tpu_custom_call.1} parent=5 // pred_region
        %s556 = ssub.s32 %s32, 1
        // Predicated region
        $region85: #{tpu_custom_call.1} parent=83 // pred_check
          %p557 = pneg %p96
        $region86: #{tpu_custom_call.1} parent=83 // pred_check_branch
          %559 = sbr.rel (%p557) target = $region88
        $region87: #{tpu_custom_call.1} parent=83 // pred_region
          %561 = dma.done [#allocation7], 128
        $region88: #{tpu_custom_call.1} parent=83 // pred_fallthru
          _
        // Predicated region
        $region89: #{tpu_custom_call.1} parent=83 // pred_check
          %p562 = pneg %p243
        $region90: #{tpu_custom_call.1} parent=83 // pred_check_branch
          %564 = sbr.rel (%p562) target = $region92
        $region91: #{tpu_custom_call.1} parent=83 // pred_region
          %566 = dma.done [#allocation10], 256
        $region92: #{tpu_custom_call.1} parent=83 // pred_fallthru
          _
        // Predicated region
        $region93: #{tpu_custom_call.1} parent=83 // pred_check
          %p567 = pneg %p327
        $region94: #{tpu_custom_call.1} parent=83 // pred_check_branch
          %569 = sbr.rel (%p567) target = $region96
        $region95: #{tpu_custom_call.1} parent=83 // pred_region
          %571 = dma.done [#allocation10], 256
        $region96: #{tpu_custom_call.1} parent=83 // pred_fallthru
          _
        %p572 = scmp.lt.s32.totalorder %s41, 1
        %s573 = scalar_select %p572, %s41, 1
        %s574 = smul.addr %s573, 8
        %s575 = scalar_lea.vmem %s0, %s574
        %p576 = pneg %p70
        %p577 = pneg %p67
        %p578 = pneg %p96
        %p579 = pneg %p93
        %p580 = pneg %p117
        %p581 = pneg %p114
        %p582 = pneg %p138
        %p583 = pneg %p135
        %p584 = pneg %p159
        %p585 = pneg %p156
        %p586 = pneg %p180
        %p587 = pneg %p177
        %p588 = pneg %p201
        %p589 = pneg %p198
        %p590 = pneg %p222
        %p591 = pneg %p219
        %p592 = pneg %p243
        %p593 = pneg %p240
        %p594 = pneg %p264
        %p595 = pneg %p261
        %p596 = pneg %p285
        %p597 = pneg %p282
        %p598 = pneg %p306
        %p599 = pneg %p303
        %p600 = pneg %p327
        %p601 = pneg %p324
        %p602 = pneg %p348
        %p603 = pneg %p345
        %p604 = pneg %p369
        %p605 = pneg %p366
        %p606 = pneg %p390
        %p607 = pneg %p387
        %p608 = pneg %p418
        %p609 = pneg %p415
        %s610 = sand.u32 %s405, 1
        %s611 = scalar_lea.sflag [#allocation8], %s610
        %s612 = sand.u32 %s405, 1
        %s613 = smul.addr %s612, 8
        %s614 = scalar_lea.vmem [#allocation12], %s613
        %p615 = pneg %p446
        %p616 = pneg %p443
        %s617 = sand.u32 %s433, 1
        %s618 = scalar_lea.sflag [#allocation14], %s617
        %s619 = sand.u32 %s433, 1
        %s620 = smul.addr %s619, 16
        %s621 = scalar_lea.vmem [#allocation13], %s620
        %p622 = scmp.lt.s32.totalorder %s41, 1
        %s623 = scalar_select %p622, %s41, 1
        %s624 = smul.addr %s623, 8
        %s625 = scalar_lea.vmem %s0, %s624
        %p627 = scmp.eq.s32.totalorder %s42, 0
        // Predicated region
        $region97: #{tpu_custom_call.1} parent=83 // pred_check
          %p628 = pneg %p627
        $region98: #{tpu_custom_call.1} parent=83 // pred_check_branch
          %630 = sbr.rel (%p628) target = $region100
        $region99: #{tpu_custom_call.1} parent=83 // pred_region
          %v631 = vld [vmem:[%s625] sm:$0xff]
          %v632 = vld [vmem:[%s2] sm:$0x1]
          %v633 = vld [vmem:[%s3] sm:$0x1]
          %vm634 = vcmask 261120
          %v635 = vsel %vm634, %v631, 0.0
          %636 = vadd.xlane.f32.xlu0 %v635
          %v637 = vpop.xlane.xlu0 %636
          %v638 = vrcp.pop 32.0
          %v639 = vmul.f32 32.0, %v638
          %v640 = vsub.f32 1.0, %v639
          %v641 = vmul.f32 %v638, %v640
          %v642 = vadd.f32 %v638, %v641
          %vm643 = vweird.f32 %v638
          %v644 = vsel %vm643, %v638, %v642
          %v645 = vmul.f32 %v637, %v644
          %v646 = vsub.f32 %v631, %v645
          %v647 = vmul.f32 %v646, %v646
          %v648 = vsel %vm634, %v647, 0.0
          %649 = vadd.xlane.f32.xlu0 %v648
          %v650 = vpop.xlane.xlu0 %649
          %v651 = vmul.f32 %v650, %v644
          %v652 = vadd.f32 %v651, 1e-05
          %v653 = vrsqrt.pop %v652
          %v654 = vmul.f32 %v653, %v652
          %v655 = vmul.f32 %v654, %v653
          %v656 = vmul.f32 0.5, %v655
          %v657 = vsub.f32 1.5, %v656
          %v658 = vmul.f32 %v653, %v657
          %vm659 = vweird.f32 %v652
          %vm660 = vweird.f32 %v653
          %vm661 = vmor %vm659, %vm660
          %v662 = vsel %vm661, %v653, %v658
          %v663 = vmul.f32 %v646, %v662
          %v665 = vperm.slane %v632, 0
          %v667 = vmul.f32 %v663, %v665
          %v669 = vperm.slane %v633, 0
          %v671 = vadd.f32 %v667, %v669
          %v672 = vpack.c.bf16 %v671, %v671
          %v673 = vld [vmem:[%s6] sm:$0xf]
          %v674 = vld [vmem:[%s6 + $0x4] sm:$0xf]
          %v675 = vld [vmem:[%s6 + $0x8] sm:$0xf]
          %v676 = vld [vmem:[%s6 + $0xc] sm:$0xf]
          %v677 = vld [vmem:[%s7] sm:$0x1]
          %v679 = vperm.slane %v677, 0
          %v685 = vunpack.c.l.b16 %v673
          %v686 = vunpack.c.l.b16 %v674
          %v687 = vunpack.c.l.b16 %v675
          %v688 = vunpack.c.l.b16 %v676
          %v689 = vpack.c.b16 %v686, %v685
          %v690 = vpack.c.b16 %v688, %v687
          %v694 = vsel %vm634, %v672, 0
          %696 = vmatpush.bf16.msra.mxu0 0
          %697 = vmatpush.bf16.msra.mxu0 0
          %698 = vmatpush.bf16.msra.mxu0 0
          %699 = vmatpush.bf16.msra.mxu0 0
          %700 = vmatpush.bf16.msra.mxu0 0
          %701 = vmatpush.bf16.msra.mxu0 0
          %702 = vmatpush.bf16.msra.mxu0 %v690
          %703 = vmatpush.bf16.msra.mxu0 %v689
          %704 = vmatmul.bf16.gmra.mxu0 %v694
          %v705 = vpop.f32.mrf.mxu0
          %v706 = vadd.f32 %v679, %v705
          %v707 = vpop.f32.mrf.mxu0
          %708 = vdwg.mxu0
          %v709 = vpack.c.bf16 %v706, %v706
          %vm710 = vcmask 60416
          %711 = vst.msk [vmem:[#allocation2] sm:$0xf] %vm710, %v709
          %713 = vrot.lane.b32.xlu0 %v709, 96
          %v714 = vpop.permute.xlu0 %713
          %716 = vst.msk [vmem:[#allocation3] sm:$0xf] %vm710, %v714
          %717 = vrot.lane.b32.xlu0 %v709, 120
          %v718 = vpop.permute.xlu0 %717
          %s720 = scalar_lea.vmem [#allocation2], 4
          %721 = vst.msk [vmem:[%s720] sm:$0xf] %vm710, %v718
          %722 = vrot.lane.b32.xlu0 %v709, 88
          %v723 = vpop.permute.xlu0 %722
          %s725 = scalar_lea.vmem [#allocation3], 4
          %726 = vst.msk [vmem:[%s725] sm:$0xf] %vm710, %v723
          %727 = vrot.lane.b32.xlu0 %v709, 112
          %v728 = vpop.permute.xlu0 %727
          %s730 = scalar_lea.vmem [#allocation2], 8
          %731 = vst.msk [vmem:[%s730] sm:$0xf] %vm710, %v728
          %732 = vrot.lane.b32.xlu0 %v709, 80
          %v733 = vpop.permute.xlu0 %732
          %s735 = scalar_lea.vmem [#allocation3], 8
          %736 = vst.msk [vmem:[%s735] sm:$0xf] %vm710, %v733
          %737 = vrot.lane.b32.xlu0 %v709, 104
          %v738 = vpop.permute.xlu0 %737
          %s740 = scalar_lea.vmem [#allocation2], 12
          %741 = vst.msk [vmem:[%s740] sm:$0xf] %vm710, %v738
          %742 = vrot.lane.b32.xlu0 %v709, 72
          %v743 = vpop.permute.xlu0 %742
          %s745 = scalar_lea.vmem [#allocation3], 12
          %746 = vst.msk [vmem:[%s745] sm:$0xf] %vm710, %v743
        $region100: #{tpu_custom_call.1} parent=83 // pred_fallthru
          _
        %s747 = smul.u32 %s42, 8
        %s748 = scalar_lea.vmem %s625, %s747
        %v749 = vld [vmem:[%s748] sm:$0xff]
        %v750 = vld [vmem:[%s2] sm:$0x1]
        %v751 = vld [vmem:[%s3] sm:$0x1]
        %vm752 = vcmask 261120
        %v753 = vsel %vm752, %v749, 0.0
        %754 = vadd.xlane.f32.xlu0 %v753
        %v755 = vpop.xlane.xlu0 %754
        %v756 = vrcp.pop 32.0
        %v757 = vmul.f32 32.0, %v756
        %v758 = vsub.f32 1.0, %v757
        %v759 = vmul.f32 %v756, %v758
        %v760 = vadd.f32 %v756, %v759
        %vm761 = vweird.f32 %v756
        %v762 = vsel %vm761, %v756, %v760
        %v763 = vmul.f32 %v755, %v762
        %v764 = vsub.f32 %v749, %v763
        %v765 = vmul.f32 %v764, %v764
        %v766 = vsel %vm752, %v765, 0.0
        %767 = vadd.xlane.f32.xlu0 %v766
        %v768 = vpop.xlane.xlu0 %767
        %v769 = vmul.f32 %v768, %v762
        %v770 = vadd.f32 %v769, 1e-05
        %v771 = vrsqrt.pop %v770
        %v772 = vmul.f32 %v771, %v770
        %v773 = vmul.f32 %v772, %v771
        %v774 = vmul.f32 0.5, %v773
        %v775 = vsub.f32 1.5, %v774
        %v776 = vmul.f32 %v771, %v775
        %vm777 = vweird.f32 %v770
        %vm778 = vweird.f32 %v771
        %vm779 = vmor %vm777, %vm778
        %v780 = vsel %vm779, %v771, %v776
        %v781 = vmul.f32 %v764, %v780
        %v783 = vperm.slane %v750, 0
        %v785 = vmul.f32 %v781, %v783
        %v787 = vperm.slane %v751, 0
        %v789 = vadd.f32 %v785, %v787
        %v790 = vpack.c.bf16 %v789, %v789
        %v791 = vld [vmem:[%s4] sm:$0xf]
        %v792 = vld [vmem:[%s4 + $0x4] sm:$0xf]
        %v793 = vld [vmem:[%s4 + $0x8] sm:$0xf]
        %v794 = vld [vmem:[%s4 + $0xc] sm:$0xf]
        %v795 = vld [vmem:[%s5] sm:$0x1]
        %v797 = vperm.slane %v795, 0
        %v803 = vunpack.c.l.b16 %v791
        %v804 = vunpack.c.l.b16 %v792
        %v805 = vunpack.c.l.b16 %v793
        %v806 = vunpack.c.l.b16 %v794
        %v807 = vpack.c.b16 %v804, %v803
        %v808 = vpack.c.b16 %v806, %v805
        %v812 = vsel %vm752, %v790, 0
        %814 = vmatpush.bf16.msra.mxu0 0
        %815 = vmatpush.bf16.msra.mxu0 0
        %816 = vmatpush.bf16.msra.mxu0 0
        %817 = vmatpush.bf16.msra.mxu0 0
        %818 = vmatpush.bf16.msra.mxu0 0
        %819 = vmatpush.bf16.msra.mxu0 0
        %820 = vmatpush.bf16.msra.mxu0 %v808
        %821 = vmatpush.bf16.msra.mxu0 %v807
        %822 = vmatmul.bf16.gmra.mxu0 %v812
        %v823 = vpop.f32.mrf.mxu0
        %v824 = vadd.f32 %v797, %v823
        %v825 = vpop.f32.mrf.mxu0
        %826 = vdwg.mxu0
        %v827 = vpack.c.bf16 %v824, %v824
        %vm828 = vcmask 60416
        %829 = vst.msk [vmem:[#allocation4] sm:$0xf] %vm828, %v827
        %831 = vrot.lane.b32.xlu0 %v827, 120
        %v832 = vpop.permute.xlu0 %831
        %s834 = scalar_lea.vmem [#allocation4], 4
        %835 = vst.msk [vmem:[%s834] sm:$0xf] %vm828, %v832
        %836 = vrot.lane.b32.xlu0 %v827, 112
        %v837 = vpop.permute.xlu0 %836
        %s839 = scalar_lea.vmem [#allocation4], 8
        %840 = vst.msk [vmem:[%s839] sm:$0xf] %vm828, %v837
        %841 = vrot.lane.b32.xlu0 %v827, 104
        %v842 = vpop.permute.xlu0 %841
        %s844 = scalar_lea.vmem [#allocation4], 12
        %845 = vst.msk [vmem:[%s844] sm:$0xf] %vm828, %v842
        %v846 = vld [vmem:[#allocation4] sm:$0xf]
        %v847 = vld [vmem:[#allocation4 + $0x4] sm:$0xf]
        %v848 = vld [vmem:[#allocation4 + $0x8] sm:$0xf]
        %v849 = vld [vmem:[#allocation4 + $0xc] sm:$0xf]
        %v850 = vld [vmem:[#allocation2] sm:$0xf]
        %v851 = vld [vmem:[#allocation2 + $0x4] sm:$0xf]
        %v852 = vld [vmem:[#allocation2 + $0x8] sm:$0xf]
        %v853 = vld [vmem:[#allocation2 + $0xc] sm:$0xf]
        %vm854 = vcmask 64512
        %v856 = vsel %vm854, %v846, 0
        %v859 = vsel %vm854, %v850, 0
        %861 = vmatpush.bf16.xpose.msra.mxu0 0
        %862 = vmatpush.bf16.xpose.msra.mxu0 0
        %863 = vmatpush.bf16.xpose.msra.mxu0 0
        %864 = vmatpush.bf16.xpose.msra.mxu0 0
        %865 = vmatpush.bf16.xpose.msra.mxu0 0
        %866 = vmatpush.bf16.xpose.msra.mxu0 0
        %867 = vmatpush.bf16.xpose.msra.mxu0 0
        %868 = vmatpush.bf16.xpose.msra.mxu0 %v859
        %869 = vmatmul.bf16.gmra.mxu0 %v856
        %v870 = vpop.f32.mrf.mxu0
        %v871 = vadd.f32 0.0, %v870
        %v872 = vpop.f32.mrf.mxu0
        %873 = vdwg.mxu0
        %v875 = vsel %vm854, %v847, 0
        %v878 = vsel %vm854, %v851, 0
        %880 = vmatpush.bf16.xpose.msra.mxu0 0
        %881 = vmatpush.bf16.xpose.msra.mxu0 0
        %882 = vmatpush.bf16.xpose.msra.mxu0 0
        %883 = vmatpush.bf16.xpose.msra.mxu0 0
        %884 = vmatpush.bf16.xpose.msra.mxu0 0
        %885 = vmatpush.bf16.xpose.msra.mxu0 0
        %886 = vmatpush.bf16.xpose.msra.mxu0 0
        %887 = vmatpush.bf16.xpose.msra.mxu0 %v878
        %888 = vmatmul.bf16.gmra.mxu0 %v875
        %v889 = vpop.f32.mrf.mxu0
        %v890 = vadd.f32 0.0, %v889
        %v891 = vpop.f32.mrf.mxu0
        %892 = vdwg.mxu0
        %v894 = vsel %vm854, %v848, 0
        %v897 = vsel %vm854, %v852, 0
        %899 = vmatpush.bf16.xpose.msra.mxu0 0
        %900 = vmatpush.bf16.xpose.msra.mxu0 0
        %901 = vmatpush.bf16.xpose.msra.mxu0 0
        %902 = vmatpush.bf16.xpose.msra.mxu0 0
        %903 = vmatpush.bf16.xpose.msra.mxu0 0
        %904 = vmatpush.bf16.xpose.msra.mxu0 0
        %905 = vmatpush.bf16.xpose.msra.mxu0 0
        %906 = vmatpush.bf16.xpose.msra.mxu0 %v897
        %907 = vmatmul.bf16.gmra.mxu0 %v894
        %v908 = vpop.f32.mrf.mxu0
        %v909 = vadd.f32 0.0, %v908
        %v910 = vpop.f32.mrf.mxu0
        %911 = vdwg.mxu0
        %v913 = vsel %vm854, %v849, 0
        %v916 = vsel %vm854, %v853, 0
        %918 = vmatpush.bf16.xpose.msra.mxu0 0
        %919 = vmatpush.bf16.xpose.msra.mxu0 0
        %920 = vmatpush.bf16.xpose.msra.mxu0 0
        %921 = vmatpush.bf16.xpose.msra.mxu0 0
        %922 = vmatpush.bf16.xpose.msra.mxu0 0
        %923 = vmatpush.bf16.xpose.msra.mxu0 0
        %924 = vmatpush.bf16.xpose.msra.mxu0 0
        %925 = vmatpush.bf16.xpose.msra.mxu0 %v916
        %926 = vmatmul.bf16.gmra.mxu0 %v913
        %v927 = vpop.f32.mrf.mxu0
        %v928 = vadd.f32 0.0, %v927
        %v929 = vpop.f32.mrf.mxu0
        %930 = vdwg.mxu0
        %v931 = vmul.f32 %v871, 0.35355338
        %v932 = vmul.f32 %v890, 0.35355338
        %v933 = vmul.f32 %v909, 0.35355338
        %v934 = vmul.f32 %v928, 0.35355338
        %v935 = vld [vmem:[#allocation6] sm:$0xff]
        %v936 = vadd.f32 %v931, %v935
        %v937 = vadd.f32 %v932, %v935
        %v938 = vadd.f32 %v933, %v935
        %v939 = vadd.f32 %v934, %v935
        %v940 = vsel %vm854, %v936, -inf
        %941 = vmax.xlane.f32.xlu0 %v940
        %v942 = vpop.xlane.xlu0 %941
        %v943 = vsel %vm854, %v937, -inf
        %944 = vmax.xlane.f32.xlu0 %v943
        %v945 = vpop.xlane.xlu0 %944
        %v946 = vsel %vm854, %v938, -inf
        %947 = vmax.xlane.f32.xlu0 %v946
        %v948 = vpop.xlane.xlu0 %947
        %v949 = vsel %vm854, %v939, -inf
        %950 = vmax.xlane.f32.xlu0 %v949
        %v951 = vpop.xlane.xlu0 %950
        %v952 = vsub.f32 %v936, %v942
        %v953 = vsub.f32 %v937, %v945
        %v954 = vsub.f32 %v938, %v948
        %v955 = vsub.f32 %v939, %v951
        %v956 = vmul.f32 %v952, 1.442695
        %v957 = vpow.pop %v956
        %v958 = vmul.f32 %v953, 1.442695
        %v959 = vpow.pop %v958
        %v960 = vmul.f32 %v954, 1.442695
        %v961 = vpow.pop %v960
        %v962 = vmul.f32 %v955, 1.442695
        %v963 = vpow.pop %v962
        %v964 = vsel %vm854, %v957, 0.0
        %965 = vadd.xlane.f32.xlu0 %v964
        %v966 = vpop.xlane.xlu0 %965
        %v967 = vsel %vm854, %v959, 0.0
        %968 = vadd.xlane.f32.xlu0 %v967
        %v969 = vpop.xlane.xlu0 %968
        %v970 = vsel %vm854, %v961, 0.0
        %971 = vadd.xlane.f32.xlu0 %v970
        %v972 = vpop.xlane.xlu0 %971
        %v973 = vsel %vm854, %v963, 0.0
        %974 = vadd.xlane.f32.xlu0 %v973
        %v975 = vpop.xlane.xlu0 %974
        %v976 = vrcp.pop %v966
        %v977 = vrcp.pop %v969
        %v978 = vrcp.pop %v972
        %v979 = vrcp.pop %v975
        %v980 = vmul.f32 %v957, %v976
        %v981 = vmul.f32 %v959, %v977
        %v982 = vmul.f32 %v961, %v978
        %v983 = vmul.f32 %v963, %v979
        %v984 = vpack.c.bf16 %v980, %v980
        %v985 = vpack.c.bf16 %v981, %v981
        %v986 = vpack.c.bf16 %v982, %v982
        %v987 = vpack.c.bf16 %v983, %v983
        %988 = vst.msk [vmem:[%s621] sm:$0xf] %vm828, %v984
        %989 = vst.msk [vmem:[%s621 + $0x4] sm:$0xf] %vm828, %v985
        %990 = vst.msk [vmem:[%s621 + $0x8] sm:$0xf] %vm828, %v986
        %991 = vst.msk [vmem:[%s621 + $0xc] sm:$0xf] %vm828, %v987
        %v992 = vld [vmem:[#allocation3] sm:$0xf]
        %v993 = vld [vmem:[#allocation3 + $0x4] sm:$0xf]
        %v994 = vld [vmem:[#allocation3 + $0x8] sm:$0xf]
        %v995 = vld [vmem:[#allocation3 + $0xc] sm:$0xf]
        %v997 = vsel %vm854, %v984, 0
        %vm999 = vcmask 1043456
        %v1001 = vsel %vm999, %v992, 0
        %1003 = vmatpush.bf16.msra.mxu0 0
        %1004 = vmatpush.bf16.msra.mxu0 0
        %1005 = vmatpush.bf16.msra.mxu0 0
        %1006 = vmatpush.bf16.msra.mxu0 0
        %1007 = vmatpush.bf16.msra.mxu0 0
        %1008 = vmatpush.bf16.msra.mxu0 0
        %1009 = vmatpush.bf16.msra.mxu0 0
        %1010 = vmatpush.bf16.msra.mxu0 %v1001
        %1011 = vmatmul.bf16.gmra.mxu0 %v997
        %v1012 = vpop.f32.mrf.mxu0
        %v1013 = vadd.f32 0.0, %v1012
        %v1014 = vpop.f32.mrf.mxu0
        %1015 = vdwg.mxu0
        %v1017 = vsel %vm854, %v985, 0
        %v1020 = vsel %vm999, %v993, 0
        %1022 = vmatpush.bf16.msra.mxu0 0
        %1023 = vmatpush.bf16.msra.mxu0 0
        %1024 = vmatpush.bf16.msra.mxu0 0
        %1025 = vmatpush.bf16.msra.mxu0 0
        %1026 = vmatpush.bf16.msra.mxu0 0
        %1027 = vmatpush.bf16.msra.mxu0 0
        %1028 = vmatpush.bf16.msra.mxu0 0
        %1029 = vmatpush.bf16.msra.mxu0 %v1020
        %1030 = vmatmul.bf16.gmra.mxu0 %v1017
        %v1031 = vpop.f32.mrf.mxu0
        %v1032 = vadd.f32 0.0, %v1031
        %v1033 = vpop.f32.mrf.mxu0
        %1034 = vdwg.mxu0
        %v1036 = vsel %vm854, %v986, 0
        %v1039 = vsel %vm999, %v994, 0
        %1041 = vmatpush.bf16.msra.mxu0 0
        %1042 = vmatpush.bf16.msra.mxu0 0
        %1043 = vmatpush.bf16.msra.mxu0 0
        %1044 = vmatpush.bf16.msra.mxu0 0
        %1045 = vmatpush.bf16.msra.mxu0 0
        %1046 = vmatpush.bf16.msra.mxu0 0
        %1047 = vmatpush.bf16.msra.mxu0 0
        %1048 = vmatpush.bf16.msra.mxu0 %v1039
        %1049 = vmatmul.bf16.gmra.mxu0 %v1036
        %v1050 = vpop.f32.mrf.mxu0
        %v1051 = vadd.f32 0.0, %v1050
        %v1052 = vpop.f32.mrf.mxu0
        %1053 = vdwg.mxu0
        %v1055 = vsel %vm854, %v987, 0
        %v1058 = vsel %vm999, %v995, 0
        %1060 = vmatpush.bf16.msra.mxu0 0
        %1061 = vmatpush.bf16.msra.mxu0 0
        %1062 = vmatpush.bf16.msra.mxu0 0
        %1063 = vmatpush.bf16.msra.mxu0 0
        %1064 = vmatpush.bf16.msra.mxu0 0
        %1065 = vmatpush.bf16.msra.mxu0 0
        %1066 = vmatpush.bf16.msra.mxu0 0
        %1067 = vmatpush.bf16.msra.mxu0 %v1058
        %1068 = vmatmul.bf16.gmra.mxu0 %v1055
        %v1069 = vpop.f32.mrf.mxu0
        %v1070 = vadd.f32 0.0, %v1069
        %v1071 = vpop.f32.mrf.mxu0
        %1072 = vdwg.mxu0
        %v1073 = vpack.c.bf16 %v1013, %v1013
        %1074 = vst.msk [vmem:[#allocation5] sm:$0xf] %vm828, %v1073
        %v1075 = vpack.c.bf16 %v1032, %v1032
        %1077 = vrot.lane.b32.xlu0 %v1075, 8
        %v1078 = vpop.permute.xlu0 %1077
        %vm1080 = vcmask 126016
        %1081 = vst.msk [vmem:[#allocation5] sm:$0xf] %vm1080, %v1078
        %v1082 = vpack.c.bf16 %v1051, %v1051
        %1084 = vrot.lane.b32.xlu0 %v1082, 16
        %v1085 = vpop.permute.xlu0 %1084
        %vm1087 = vcmask 191616
        %1088 = vst.msk [vmem:[#allocation5] sm:$0xf] %vm1087, %v1085
        %v1089 = vpack.c.bf16 %v1070, %v1070
        %1091 = vrot.lane.b32.xlu0 %v1089, 24
        %v1092 = vpop.permute.xlu0 %1091
        %vm1094 = vcmask 257216
        %1095 = vst.msk [vmem:[#allocation5] sm:$0xf] %vm1094, %v1092
        %v1096 = vld [vmem:[#allocation5] sm:$0xf]
        %v1097 = vld [vmem:[#allocation9] sm:$0xf]
        %v1098 = vld [vmem:[#allocation9 + $0x4] sm:$0xf]
        %v1099 = vld [vmem:[#allocation9 + $0x8] sm:$0xf]
        %v1100 = vld [vmem:[#allocation9 + $0xc] sm:$0xf]
        %v1101 = vld [vmem:[%s9] sm:$0x1]
        %v1103 = vperm.slane %v1101, 0
        %v1109 = vunpack.c.l.b16 %v1097
        %v1110 = vunpack.c.l.b16 %v1098
        %v1111 = vunpack.c.l.b16 %v1099
        %v1112 = vunpack.c.l.b16 %v1100
        %v1113 = vpack.c.b16 %v1110, %v1109
        %v1114 = vpack.c.b16 %v1112, %v1111
        %v1118 = vsel %vm752, %v1096, 0
        %1120 = vmatpush.bf16.msra.mxu0 0
        %1121 = vmatpush.bf16.msra.mxu0 0
        %1122 = vmatpush.bf16.msra.mxu0 0
        %1123 = vmatpush.bf16.msra.mxu0 0
        %1124 = vmatpush.bf16.msra.mxu0 0
        %1125 = vmatpush.bf16.msra.mxu0 0
        %1126 = vmatpush.bf16.msra.mxu0 %v1114
        %1127 = vmatpush.bf16.msra.mxu0 %v1113
        %1128 = vmatmul.bf16.gmra.mxu0 %v1118
        %v1129 = vpop.f32.mrf.mxu0
        %v1130 = vadd.f32 %v1103, %v1129
        %v1131 = vpop.f32.mrf.mxu0
        %1132 = vdwg.mxu0
        %v1133 = vadd.f32 %v749, %v1130
        %v1134 = vld [vmem:[%s10] sm:$0x1]
        %v1135 = vld [vmem:[%s11] sm:$0x1]
        %v1136 = vsel %vm752, %v1133, 0.0
        %1137 = vadd.xlane.f32.xlu0 %v1136
        %v1138 = vpop.xlane.xlu0 %1137
        %v1139 = vmul.f32 %v1138, %v762
        %v1140 = vsub.f32 %v1133, %v1139
        %v1141 = vmul.f32 %v1140, %v1140
        %v1142 = vsel %vm752, %v1141, 0.0
        %1143 = vadd.xlane.f32.xlu0 %v1142
        %v1144 = vpop.xlane.xlu0 %1143
        %v1145 = vmul.f32 %v1144, %v762
        %v1146 = vadd.f32 %v1145, 1e-05
        %v1147 = vrsqrt.pop %v1146
        %v1148 = vmul.f32 %v1147, %v1146
        %v1149 = vmul.f32 %v1148, %v1147
        %v1150 = vmul.f32 0.5, %v1149
        %v1151 = vsub.f32 1.5, %v1150
        %v1152 = vmul.f32 %v1147, %v1151
        %vm1153 = vweird.f32 %v1146
        %vm1154 = vweird.f32 %v1147
        %vm1155 = vmor %vm1153, %vm1154
        %v1156 = vsel %vm1155, %v1147, %v1152
        %v1157 = vmul.f32 %v1140, %v1156
        %v1159 = vperm.slane %v1134, 0
        %v1161 = vmul.f32 %v1157, %v1159
        %v1163 = vperm.slane %v1135, 0
        %v1165 = vadd.f32 %v1161, %v1163
        %v1166 = vpack.c.bf16 %v1165, %v1165
        %v1167 = vld [vmem:[#allocation11] sm:$0xf]
        %v1168 = vld [vmem:[#allocation11 + $0x4] sm:$0xf]
        %v1169 = vld [vmem:[#allocation11 + $0x8] sm:$0xf]
        %v1170 = vld [vmem:[#allocation11 + $0xc] sm:$0xf]
        %v1171 = vld [vmem:[%s13] sm:$0x1]
        %v1173 = vperm.slane %v1171, 0
        %v1179 = vunpack.c.l.b16 %v1167
        %v1180 = vunpack.c.l.b16 %v1168
        %v1181 = vunpack.c.l.b16 %v1169
        %v1182 = vunpack.c.l.b16 %v1170
        %v1183 = vpack.c.b16 %v1180, %v1179
        %v1184 = vpack.c.b16 %v1182, %v1181
        %v1188 = vsel %vm752, %v1166, 0
        %1190 = vmatpush.bf16.msra.mxu0 0
        %1191 = vmatpush.bf16.msra.mxu0 0
        %1192 = vmatpush.bf16.msra.mxu0 0
        %1193 = vmatpush.bf16.msra.mxu0 0
        %1194 = vmatpush.bf16.msra.mxu0 0
        %1195 = vmatpush.bf16.msra.mxu0 0
        %1196 = vmatpush.bf16.msra.mxu0 %v1184
        %1197 = vmatpush.bf16.msra.mxu0 %v1183
        %1198 = vmatmul.bf16.gmra.mxu0 %v1188
        %v1199 = vpop.f32.mrf.mxu0
        %v1200 = vadd.f32 %v1173, %v1199
        %v1201 = vpop.f32.mrf.mxu0
        %1202 = vdwg.mxu0
        %v1203 = vmul.f32 %v1200, 0.5
        %v1204 = vmul.f32 %v1200, 0.044715
        %v1205 = vmul.f32 %v1204, %v1200
        %v1206 = vmul.f32 %v1205, %v1200
        %v1207 = vadd.f32 %v1200, %v1206
        %v1208 = vmul.f32 %v1207, 0.7978846
        %v1209 = vtanh.pop %v1208
        %v1210 = vadd.f32 %v1209, 1.0
        %v1211 = vmul.f32 %v1203, %v1210
        %v1212 = vpack.c.bf16 %v1211, %v1211
        %v1213 = vld [vmem:[%s14] sm:$0xf]
        %v1214 = vld [vmem:[%s14 + $0x4] sm:$0xf]
        %v1215 = vld [vmem:[%s14 + $0x8] sm:$0xf]
        %v1216 = vld [vmem:[%s14 + $0xc] sm:$0xf]
        %v1217 = vld [vmem:[%s14 + $0x10] sm:$0xf]
        %v1218 = vld [vmem:[%s14 + $0x14] sm:$0xf]
        %v1219 = vld [vmem:[%s14 + $0x18] sm:$0xf]
        %v1220 = vld [vmem:[%s14 + $0x1c] sm:$0xf]
        %v1221 = vld [vmem:[%s15] sm:$0x1]
        %v1223 = vperm.slane %v1221, 0
        %v1233 = vunpack.c.l.b16 %v1213
        %v1234 = vunpack.c.l.b16 %v1214
        %v1235 = vunpack.c.l.b16 %v1215
        %v1236 = vunpack.c.l.b16 %v1216
        %v1237 = vunpack.c.l.b16 %v1217
        %v1238 = vunpack.c.l.b16 %v1218
        %v1239 = vunpack.c.l.b16 %v1219
        %v1240 = vunpack.c.l.b16 %v1220
        %v1241 = vpack.c.b16 %v1234, %v1233
        %v1242 = vpack.c.b16 %v1236, %v1235
        %v1243 = vpack.c.b16 %v1238, %v1237
        %v1244 = vpack.c.b16 %v1240, %v1239
        %vm1249 = vcmask 523264
        %v1251 = vsel %vm1249, %v1212, 0
        %1253 = vmatpush.bf16.msra.mxu0 0
        %1254 = vmatpush.bf16.msra.mxu0 0
        %1255 = vmatpush.bf16.msra.mxu0 0
        %1256 = vmatpush.bf16.msra.mxu0 0
        %1257 = vmatpush.bf16.msra.mxu0 %v1244
        %1258 = vmatpush.bf16.msra.mxu0 %v1243
        %1259 = vmatpush.bf16.msra.mxu0 %v1242
        %1260 = vmatpush.bf16.msra.mxu0 %v1241
        %1261 = vmatmul.bf16.gmra.mxu0 %v1251
        %v1262 = vpop.f32.mrf.mxu0
        %v1263 = vadd.f32 %v1223, %v1262
        %v1264 = vpop.f32.mrf.mxu0
        %1265 = vdwg.mxu0
        %v1266 = vadd.f32 %v1133, %v1263
        %1267 = vst.msk [vmem:[%s614] sm:$0xff] %vm752, %v1266
        %s1268 = sand.u32 %s405, 1
        %s1269 = scalar_lea.sflag [#allocation8], %s1268
        %s1270 = sand.u32 %s405, 1
        %s1271 = smul.addr %s1270, 8
        %s1272 = scalar_lea.vmem [#allocation12], %s1271
        %s1273 = sand.u32 %s433, 1
        %s1274 = scalar_lea.sflag [#allocation14], %s1273
        %s1275 = sand.u32 %s433, 1
        %s1276 = smul.addr %s1275, 16
        %s1277 = scalar_lea.vmem [#allocation13], %s1276
        // Predicated region
        $region101: #{tpu_custom_call.1} parent=83 // pred_check
          %p1278 = pneg %p415
        $region102: #{tpu_custom_call.1} parent=83 // pred_check_branch
          %1280 = sbr.rel (%p1278) target = $region104
        $region103: #{tpu_custom_call.1} parent=83 // pred_region
          %1282 = vsyncadd %s1269, 0
          %s1283 = sadd.s32 %s42, %s41
          %s1284 = smul.addr %s1283, 8
          %s1285 = scalar_lea.hbm %s16, %s1284
          %s1287 = sshll.u32 %s1272, 4
          %s1288 = int_to_ptr.vmem [resolvable:$true] %s1287
          %s1289 = sshll.u32 %s1285, 4
          %s1290 = int_to_ptr.hbm [resolvable:$true] %s1289
          %1292 = dma.vmem_to_hbm [thread:$0]  %s1288, 128, %s1290, %s1269
        $region104: #{tpu_custom_call.1} parent=83 // pred_fallthru
          _
        // Predicated region
        $region105: #{tpu_custom_call.1} parent=83 // pred_check
          %p1293 = pneg %p443
        $region106: #{tpu_custom_call.1} parent=83 // pred_check_branch
          %1295 = sbr.rel (%p1293) target = $region108
        $region107: #{tpu_custom_call.1} parent=83 // pred_region
          %1297 = vsyncadd %s1274, 0
          %s1298 = smul.addr %s41, 4
          %s1299 = sadd.s32 %s42, %s1298
          %s1300 = smul.addr %s1299, 4
          %s1301 = scalar_lea.hbm %s17, %s1300
          %s1302 = sshll.u32 %s1277, 4
          %s1303 = int_to_ptr.vmem [resolvable:$true] %s1302
          %s1304 = sshll.u32 %s1301, 4
          %s1305 = int_to_ptr.hbm [resolvable:$true] %s1304
          %1310 = dma.vmem_to_hbm [thread:$0]  %s1303, 256, %s1305, %s1274, 64, 64, 4
        $region108: #{tpu_custom_call.1} parent=83 // pred_fallthru
          _
      $region84: #{tpu_custom_call.1} parent=5 // pred_fallthru
        _
      %p1311 = scmp.le.s32.totalorder 2, %s32
      // Predicated region
      $region109: #{tpu_custom_call.1} parent=5 // pred_check
        %p1312 = pneg %p1311
      $region110: #{tpu_custom_call.1} parent=5 // pred_check_branch
        %1314 = sbr.rel (%p1312) target = $region112
      $region111: #{tpu_custom_call.1} parent=5 // pred_region
        %s1315 = ssub.s32 %s32, 2
        // Predicated region
        $region113: #{tpu_custom_call.1} parent=111 // pred_check
          %p1316 = pneg %p421
        $region114: #{tpu_custom_call.1} parent=111 // pred_check_branch
          %1318 = sbr.rel (%p1316) target = $region116
        $region115: #{tpu_custom_call.1} parent=111 // pred_region
          %s1319 = sand.u32 %s406, 1
          %s1320 = scalar_lea.sflag [#allocation8], %s1319
          %s1321 = sand.u32 %s406, 1
          %s1322 = smul.addr %s1321, 8
          %s1323 = scalar_lea.vmem [#allocation12], %s1322
          %1325 = dma.done %s1320, 128
        $region116: #{tpu_custom_call.1} parent=111 // pred_fallthru
          _
        // Predicated region
        $region117: #{tpu_custom_call.1} parent=111 // pred_check
          %p1326 = pneg %p449
        $region118: #{tpu_custom_call.1} parent=111 // pred_check_branch
          %1328 = sbr.rel (%p1326) target = $region120
        $region119: #{tpu_custom_call.1} parent=111 // pred_region
          %s1329 = sand.u32 %s434, 1
          %s1330 = scalar_lea.sflag [#allocation14], %s1329
          %s1331 = sand.u32 %s434, 1
          %s1332 = smul.addr %s1331, 16
          %s1333 = scalar_lea.vmem [#allocation13], %s1332
          %1335 = dma.done %s1330, 256
        $region120: #{tpu_custom_call.1} parent=111 // pred_fallthru
          _
      $region112: #{tpu_custom_call.1} parent=5 // pred_fallthru
        _
    $region6: #{tpu_custom_call.1} parent=1 // loop_footer
      %s36 = sadd.s32 1, %s32
    $region7: #{tpu_custom_call.1} parent=1 // loop_footer_branch
      %31 = sbr.rel target = $region3
    $region8: #{tpu_custom_call.1} parent=1 // loop_exit
      _
    %1336 = vsyncpa [#allocation7], 1
    %s1337 = scalar_lea.sflag [#allocation7], 1
    %1338 = vsyncpa %s1337, 1
    %1339 = vsyncpa [#allocation10], 1
    %1340 = vsyncpa [#allocation8], 1
    %s1341 = scalar_lea.sflag [#allocation8], 1
    %1342 = vsyncpa %s1341, 1
    %1343 = vsyncpa [#allocation14], 1
    %s1344 = scalar_lea.sflag [#allocation14], 1
    %1345 = vsyncpa %s1344, 1

// kernel: tpu_custom_call.1
$region0: #{tpu_custom_call.1}
  #allocation0 [shape = 'u32[]', space=smem, size = 0x4, offset = 0x4, fixed_abs, tag = 'smem constant byte address 0x4 - core index']
  #allocation1 [shape = 'u32[72,128]{1,0:T(1,128)}', space=vmem, size = 0x9000, scoped, tag = 'internal scratch']
  #allocation2 [shape = 'bf16[4,8,8]{2,1,0:T(8,128)(2,1)}', space=vmem, size = 0x2000, scoped, tag = 'scratch operand']
  #allocation3 [shape = 'bf16[4,8,8]{2,1,0:T(8,128)(2,1)}', space=vmem, size = 0x2000, scoped, tag = 'scratch operand']
  #allocation4 [shape = 'bf16[4,8,8]{2,1,0:T(8,128)(2,1)}', space=vmem, size = 0x2000, scoped, tag = 'scratch operand']
  #allocation5 [shape = 'bf16[8,32]{1,0:T(8,128)(2,1)}', space=vmem, size = 0x800, scoped, tag = 'scratch operand']
  %s0 = inlined_call_operand.vmem [shape: f32[2,8,32], index: 0, kind: input, shape index: {}]
  %s1 = inlined_call_operand.hbm [shape: f32[8,8], index: 1, kind: input, shape index: {}]
  %s2 = inlined_call_operand.vmem [shape: f32[1,32], index: 2, kind: input, shape index: {}]
  %s3 = inlined_call_operand.vmem [shape: f32[1,32], index: 3, kind: input, shape index: {}]
  %s4 = inlined_call_operand.vmem [shape: bf16[32,32], index: 4, kind: input, shape index: {}]
  %s5 = inlined_call_operand.vmem [shape: f32[1,32], index: 5, kind: input, shape index: {}]
  %s6 = inlined_call_operand.vmem [shape: bf16[32,64], index: 6, kind: input, shape index: {}]
  %s7 = inlined_call_operand.vmem [shape: f32[1,64], index: 7, kind: input, shape index: {}]
  %s8 = inlined_call_operand.hbm [shape: bf16[32,32], index: 8, kind: input, shape index: {}]
  %s9 = inlined_call_operand.vmem [shape: f32[1,32], index: 9, kind: input, shape index: {}]
  %s10 = inlined_call_operand.vmem [shape: f32[1,32], index: 10, kind: input, shape index: {}]
  %s11 = inlined_call_operand.vmem [shape: f32[1,32], index: 11, kind: input, shape index: {}]
  %s12 = inlined_call_operand.hbm [shape: bf16[32,64], index: 12, kind: input, shape index: {}]
  %s13 = inlined_call_operand.vmem [shape: f32[1,64], index: 13, kind: input, shape index: {}]
  %s14 = inlined_call_operand.vmem [shape: bf16[64,32], index: 14, kind: input, shape index: {}]
  %s15 = inlined_call_operand.vmem [shape: f32[1,32], index: 15, kind: input, shape index: {}]
  %s16 = inlined_call_operand.hbm [shape: f32[2,8,32], index: 16, kind: output, shape index: {0}]
  %s17 = inlined_call_operand.hbm [shape: bf16[2,4,8,8], index: 17, kind: output, shape index: {1}]
  %18 = xla_tuple %s16, %s17
  %s19 = sld [smem:[#allocation0]]
  $region121: #{tpu_custom_call.1} parent=0
    _
  %s21 = ssub.s32 1, %s19
  %s22 = scalar_select 0, %s21, %s19
  $region1: #{tpu_custom_call.1} parent=0
    #allocation6 [shape = 'u8[4096]{0}', space=vmem, size = 0x1000, scoped, tag = 'input window, operand 1, single buffered']
    #allocation7 [shape = 's32[2]{0}', space=sflag, size = 0x8, scoped, tag = 'scoped memory for tpu_custom_call.1']
    #allocation8 [shape = 's32[2]{0}', space=sflag, size = 0x8, scoped, tag = 'scoped memory for tpu_custom_call.1']
    #allocation9 [shape = 'u8[8192]{0}', space=vmem, size = 0x2000, scoped, tag = 'input window, operand 8, single buffered']
    #allocation10 [shape = 's32[1]{0}', space=sflag, size = 0x4, scoped, tag = 'scoped memory for tpu_custom_call.1']
    #allocation11 [shape = 'u8[8192]{0}', space=vmem, size = 0x2000, scoped, tag = 'input window, operand 12, single buffered']
    #allocation12 [shape = 'u8[8192]{0}', space=vmem, size = 0x2000, scoped, tag = 'output window, operand 0']
    #allocation13 [shape = 'u8[16384]{0}', space=vmem, size = 0x4000, scoped, tag = 'output window, operand 1']
    #allocation14 [shape = 's32[2]{0}', space=sflag, size = 0x8, scoped, tag = 'scoped memory for tpu_custom_call.1']
    %23 = vsyncpa [#allocation7], 0
    %24 = vsyncpa [#allocation10], 0
    %25 = vsyncpa [#allocation8], 0
    %s26 = scalar_lea.sflag [#allocation8], 1
    %27 = vsyncpa %s26, 0
    %28 = vsyncpa [#allocation14], 0
    %s29 = scalar_lea.sflag [#allocation14], 1
    %30 = vsyncpa %s29, 0
    loop: start=0, step=1, limit=4
    $region2: #{tpu_custom_call.1} parent=1 // loop_pre_header
      _
    $region3: #{tpu_custom_call.1} parent=1 // loop_header
      %s32 = sphi 0, %s36
      %p33 = scmp.ge.s32.totalorder %s32, 4
      %s39 = sphi 0, %s51
      %s40 = sphi 0, %s47
      %s41 = sphi 0, %s39
      %s42 = sphi 0, %s40
      %s43 = sphi 0, %s41
      %s44 = sphi 0, %s42
      %s54 = sphi 0, %s56
      %s57 = sphi 0, %s54
      %s58 = sphi 0, %s57
      %s74 = sphi 0, %s58
      %s80 = sphi 0, %s82
      %s83 = sphi 0, %s80
      %s84 = sphi 0, %s83
      %s100 = sphi 0, %s84
      %s104 = sphi 0, %s104
      %s106 = sphi 0, %s104
      %s107 = sphi 0, %s106
      %s121 = sphi 0, %s107
      %s125 = sphi 0, %s125
      %s127 = sphi 0, %s125
      %s128 = sphi 0, %s127
      %s142 = sphi 0, %s128
      %s146 = sphi 0, %s146
      %s148 = sphi 0, %s146
      %s149 = sphi 0, %s148
      %s163 = sphi 0, %s149
      %s167 = sphi 0, %s167
      %s169 = sphi 0, %s167
      %s170 = sphi 0, %s169
      %s184 = sphi 0, %s170
      %s188 = sphi 0, %s188
      %s190 = sphi 0, %s188
      %s191 = sphi 0, %s190
      %s205 = sphi 0, %s191
      %s209 = sphi 0, %s209
      %s211 = sphi 0, %s209
      %s212 = sphi 0, %s211
      %s226 = sphi 0, %s212
      %s230 = sphi 0, %s230
      %s232 = sphi 0, %s230
      %s233 = sphi 0, %s232
      %s247 = sphi 0, %s233
      %s251 = sphi 0, %s251
      %s253 = sphi 0, %s251
      %s254 = sphi 0, %s253
      %s268 = sphi 0, %s254
      %s272 = sphi 0, %s272
      %s274 = sphi 0, %s272
      %s275 = sphi 0, %s274
      %s289 = sphi 0, %s275
      %s293 = sphi 0, %s293
      %s295 = sphi 0, %s293
      %s296 = sphi 0, %s295
      %s310 = sphi 0, %s296
      %s314 = sphi 0, %s314
      %s316 = sphi 0, %s314
      %s317 = sphi 0, %s316
      %s331 = sphi 0, %s317
      %s335 = sphi 0, %s335
      %s337 = sphi 0, %s335
      %s338 = sphi 0, %s337
      %s352 = sphi 0, %s338
      %s356 = sphi 0, %s356
      %s358 = sphi 0, %s356
      %s359 = sphi 0, %s358
      %s373 = sphi 0, %s359
      %s377 = sphi 0, %s377
      %s379 = sphi 0, %s377
      %s380 = sphi 0, %s379
      %s394 = sphi 0, %s380
      %s402 = sphi 0, %s404
      %s405 = sphi 0, %s402
      %s406 = sphi 0, %s405
      %s422 = sphi 0, %s406
      %s430 = sphi 0, %s432
      %s433 = sphi 0, %s430
      %s434 = sphi 0, %s433
      %s450 = sphi 0, %s434
    $region4: #{tpu_custom_call.1} parent=1 // loop_header_branch
      %35 = sbr.rel (%p33) target = $region8
    $region5: #{tpu_custom_call.1} parent=1 // loop_body
      %s37 = ssub.s32 %s32, 1
      %s38 = ssub.s32 %s32, 2
      %s45 = sadd.s32 1, %s40
      %p46 = scmp.ge.s32.totalorder %s45, 1
      %s47 = scalar_select %p46, 0, %s45
      %s48 = sadd.s32 1, %s39
      %s49 = scalar_select %p46, %s48, %s39
      %p50 = scmp.ge.s32.totalorder %s49, 2
      %s51 = scalar_select %p50, 0, %s49
      %s52 = ssub.s32 %s39, %s51
      %p53 = scmp.eq.s32.totalorder %s52, 0
      %s55 = sadd.s32 %s54, 1
      %s56 = scalar_select %p53, %s54, %s55
      %p59 = pneg %p53
      %p60 = scmp.eq.s32.totalorder %s32, 1
      %p61 = por %p59, %p60
      %p62 = scmp.ne.s32.totalorder %s54, %s57
      %p63 = scmp.eq.s32.totalorder %s32, 0
      %p64 = por %p62, %p63
      %p65 = scmp.ne.s32.totalorder %s54, %s57
      %p66 = scmp.eq.s32.totalorder %s37, 1
      %p67 = por %p65, %p66
      %p68 = scmp.ne.s32.totalorder %s57, %s58
      %p69 = scmp.eq.s32.totalorder %s37, 0
      %p70 = por %p68, %p69
      %p71 = scmp.ne.s32.totalorder %s57, %s58
      %p72 = scmp.eq.s32.totalorder %s38, 1
      %p73 = por %p71, %p72
      %p75 = scmp.ne.s32.totalorder %s58, %s74
      %p76 = scmp.eq.s32.totalorder %s38, 0
      %p77 = por %p75, %p76
      %s78 = ssub.s32 %s40, %s47
      %p79 = scmp.eq.s32.totalorder %s78, 0
      %s81 = sadd.s32 %s80, 1
      %s82 = scalar_select %p79, %s80, %s81
      %p85 = pneg %p79
      %p86 = scmp.eq.s32.totalorder %s32, 1
      %p87 = por %p85, %p86
      %p88 = scmp.ne.s32.totalorder %s80, %s83
      %p89 = scmp.eq.s32.totalorder %s32, 0
      %p90 = por %p88, %p89
      %p91 = scmp.ne.s32.totalorder %s80, %s83
      %p92 = scmp.eq.s32.totalorder %s37, 1
      %p93 = por %p91, %p92
      %p94 = scmp.ne.s32.totalorder %s83, %s84
      %p95 = scmp.eq.s32.totalorder %s37, 0
      %p96 = por %p94, %p95
      %p97 = scmp.ne.s32.totalorder %s83, %s84
      %p98 = scmp.eq.s32.totalorder %s38, 1
      %p99 = por %p97, %p98
      %p101 = scmp.ne.s32.totalorder %s84, %s100
      %p102 = scmp.eq.s32.totalorder %s38, 0
      %p103 = por %p101, %p102
      %s105 = sadd.s32 %s104, 1
      %p108 = scmp.eq.s32.totalorder %s32, 1
      %p109 = scmp.ne.s32.totalorder %s104, %s106
      %p110 = scmp.eq.s32.totalorder %s32, 0
      %p111 = por %p109, %p110
      %p112 = scmp.ne.s32.totalorder %s104, %s106
      %p113 = scmp.eq.s32.totalorder %s37, 1
      %p114 = por %p112, %p113
      %p115 = scmp.ne.s32.totalorder %s106, %s107
      %p116 = scmp.eq.s32.totalorder %s37, 0
      %p117 = por %p115, %p116
      %p118 = scmp.ne.s32.totalorder %s106, %s107
      %p119 = scmp.eq.s32.totalorder %s38, 1
      %p120 = por %p118, %p119
      %p122 = scmp.ne.s32.totalorder %s107, %s121
      %p123 = scmp.eq.s32.totalorder %s38, 0
      %p124 = por %p122, %p123
      %s126 = sadd.s32 %s125, 1
      %p129 = scmp.eq.s32.totalorder %s32, 1
      %p130 = scmp.ne.s32.totalorder %s125, %s127
      %p131 = scmp.eq.s32.totalorder %s32, 0
      %p132 = por %p130, %p131
      %p133 = scmp.ne.s32.totalorder %s125, %s127
      %p134 = scmp.eq.s32.totalorder %s37, 1
      %p135 = por %p133, %p134
      %p136 = scmp.ne.s32.totalorder %s127, %s128
      %p137 = scmp.eq.s32.totalorder %s37, 0
      %p138 = por %p136, %p137
      %p139 = scmp.ne.s32.totalorder %s127, %s128
      %p140 = scmp.eq.s32.totalorder %s38, 1
      %p141 = por %p139, %p140
      %p143 = scmp.ne.s32.totalorder %s128, %s142
      %p144 = scmp.eq.s32.totalorder %s38, 0
      %p145 = por %p143, %p144
      %s147 = sadd.s32 %s146, 1
      %p150 = scmp.eq.s32.totalorder %s32, 1
      %p151 = scmp.ne.s32.totalorder %s146, %s148
      %p152 = scmp.eq.s32.totalorder %s32, 0
      %p153 = por %p151, %p152
      %p154 = scmp.ne.s32.totalorder %s146, %s148
      %p155 = scmp.eq.s32.totalorder %s37, 1
      %p156 = por %p154, %p155
      %p157 = scmp.ne.s32.totalorder %s148, %s149
      %p158 = scmp.eq.s32.totalorder %s37, 0
      %p159 = por %p157, %p158
      %p160 = scmp.ne.s32.totalorder %s148, %s149
      %p161 = scmp.eq.s32.totalorder %s38, 1
      %p162 = por %p160, %p161
      %p164 = scmp.ne.s32.totalorder %s149, %s163
      %p165 = scmp.eq.s32.totalorder %s38, 0
      %p166 = por %p164, %p165
      %s168 = sadd.s32 %s167, 1
      %p171 = scmp.eq.s32.totalorder %s32, 1
      %p172 = scmp.ne.s32.totalorder %s167, %s169
      %p173 = scmp.eq.s32.totalorder %s32, 0
      %p174 = por %p172, %p173
      %p175 = scmp.ne.s32.totalorder %s167, %s169
      %p176 = scmp.eq.s32.totalorder %s37, 1
      %p177 = por %p175, %p176
      %p178 = scmp.ne.s32.totalorder %s169, %s170
      %p179 = scmp.eq.s32.totalorder %s37, 0
      %p180 = por %p178, %p179
      %p181 = scmp.ne.s32.totalorder %s169, %s170
      %p182 = scmp.eq.s32.totalorder %s38, 1
      %p183 = por %p181, %p182
      %p185 = scmp.ne.s32.totalorder %s170, %s184
      %p186 = scmp.eq.s32.totalorder %s38, 0
      %p187 = por %p185, %p186
      %s189 = sadd.s32 %s188, 1
      %p192 = scmp.eq.s32.totalorder %s32, 1
      %p193 = scmp.ne.s32.totalorder %s188, %s190
      %p194 = scmp.eq.s32.totalorder %s32, 0
      %p195 = por %p193, %p194
      %p196 = scmp.ne.s32.totalorder %s188, %s190
      %p197 = scmp.eq.s32.totalorder %s37, 1
      %p198 = por %p196, %p197
      %p199 = scmp.ne.s32.totalorder %s190, %s191
      %p200 = scmp.eq.s32.totalorder %s37, 0
      %p201 = por %p199, %p200
      %p202 = scmp.ne.s32.totalorder %s190, %s191
      %p203 = scmp.eq.s32.totalorder %s38, 1
      %p204 = por %p202, %p203
      %p206 = scmp.ne.s32.totalorder %s191, %s205
      %p207 = scmp.eq.s32.totalorder %s38, 0
      %p208 = por %p206, %p207
      %s210 = sadd.s32 %s209, 1
      %p213 = scmp.eq.s32.totalorder %s32, 1
      %p214 = scmp.ne.s32.totalorder %s209, %s211
      %p215 = scmp.eq.s32.totalorder %s32, 0
      %p216 = por %p214, %p215
      %p217 = scmp.ne.s32.totalorder %s209, %s211
      %p218 = scmp.eq.s32.totalorder %s37, 1
      %p219 = por %p217, %p218
      %p220 = scmp.ne.s32.totalorder %s211, %s212
      %p221 = scmp.eq.s32.totalorder %s37, 0
      %p222 = por %p220, %p221
      %p223 = scmp.ne.s32.totalorder %s211, %s212
      %p224 = scmp.eq.s32.totalorder %s38, 1
      %p225 = por %p223, %p224
      %p227 = scmp.ne.s32.totalorder %s212, %s226
      %p228 = scmp.eq.s32.totalorder %s38, 0
      %p229 = por %p227, %p228
      %s231 = sadd.s32 %s230, 1
      %p234 = scmp.eq.s32.totalorder %s32, 1
      %p235 = scmp.ne.s32.totalorder %s230, %s232
      %p236 = scmp.eq.s32.totalorder %s32, 0
      %p237 = por %p235, %p236
      %p238 = scmp.ne.s32.totalorder %s230, %s232
      %p239 = scmp.eq.s32.totalorder %s37, 1
      %p240 = por %p238, %p239
      %p241 = scmp.ne.s32.totalorder %s232, %s233
      %p242 = scmp.eq.s32.totalorder %s37, 0
      %p243 = por %p241, %p242
      %p244 = scmp.ne.s32.totalorder %s232, %s233
      %p245 = scmp.eq.s32.totalorder %s38, 1
      %p246 = por %p244, %p245
      %p248 = scmp.ne.s32.totalorder %s233, %s247
      %p249 = scmp.eq.s32.totalorder %s38, 0
      %p250 = por %p248, %p249
      %s252 = sadd.s32 %s251, 1
      %p255 = scmp.eq.s32.totalorder %s32, 1
      %p256 = scmp.ne.s32.totalorder %s251, %s253
      %p257 = scmp.eq.s32.totalorder %s32, 0
      %p258 = por %p256, %p257
      %p259 = scmp.ne.s32.totalorder %s251, %s253
      %p260 = scmp.eq.s32.totalorder %s37, 1
      %p261 = por %p259, %p260
      %p262 = scmp.ne.s32.totalorder %s253, %s254
      %p263 = scmp.eq.s32.totalorder %s37, 0
      %p264 = por %p262, %p263
      %p265 = scmp.ne.s32.totalorder %s253, %s254
      %p266 = scmp.eq.s32.totalorder %s38, 1
      %p267 = por %p265, %p266
      %p269 = scmp.ne.s32.totalorder %s254, %s268
      %p270 = scmp.eq.s32.totalorder %s38, 0
      %p271 = por %p269, %p270
      %s273 = sadd.s32 %s272, 1
      %p276 = scmp.eq.s32.totalorder %s32, 1
      %p277 = scmp.ne.s32.totalorder %s272, %s274
      %p278 = scmp.eq.s32.totalorder %s32, 0
      %p279 = por %p277, %p278
      %p280 = scmp.ne.s32.totalorder %s272, %s274
      %p281 = scmp.eq.s32.totalorder %s37, 1
      %p282 = por %p280, %p281
      %p283 = scmp.ne.s32.totalorder %s274, %s275
      %p284 = scmp.eq.s32.totalorder %s37, 0
      %p285 = por %p283, %p284
      %p286 = scmp.ne.s32.totalorder %s274, %s275
      %p287 = scmp.eq.s32.totalorder %s38, 1
      %p288 = por %p286, %p287
      %p290 = scmp.ne.s32.totalorder %s275, %s289
      %p291 = scmp.eq.s32.totalorder %s38, 0
      %p292 = por %p290, %p291
      %s294 = sadd.s32 %s293, 1
      %p297 = scmp.eq.s32.totalorder %s32, 1
      %p298 = scmp.ne.s32.totalorder %s293, %s295
      %p299 = scmp.eq.s32.totalorder %s32, 0
      %p300 = por %p298, %p299
      %p301 = scmp.ne.s32.totalorder %s293, %s295
      %p302 = scmp.eq.s32.totalorder %s37, 1
      %p303 = por %p301, %p302
      %p304 = scmp.ne.s32.totalorder %s295, %s296
      %p305 = scmp.eq.s32.totalorder %s37, 0
      %p306 = por %p304, %p305
      %p307 = scmp.ne.s32.totalorder %s295, %s296
      %p308 = scmp.eq.s32.totalorder %s38, 1
      %p309 = por %p307, %p308
      %p311 = scmp.ne.s32.totalorder %s296, %s310
      %p312 = scmp.eq.s32.totalorder %s38, 0
      %p313 = por %p311, %p312
      %s315 = sadd.s32 %s314, 1
      %p318 = scmp.eq.s32.totalorder %s32, 1
      %p319 = scmp.ne.s32.totalorder %s314, %s316
      %p320 = scmp.eq.s32.totalorder %s32, 0
      %p321 = por %p319, %p320
      %p322 = scmp.ne.s32.totalorder %s314, %s316
      %p323 = scmp.eq.s32.totalorder %s37, 1
      %p324 = por %p322, %p323
      %p325 = scmp.ne.s32.totalorder %s316, %s317
      %p326 = scmp.eq.s32.totalorder %s37, 0
      %p327 = por %p325, %p326
      %p328 = scmp.ne.s32.totalorder %s316, %s317
      %p329 = scmp.eq.s32.totalorder %s38, 1
      %p330 = por %p328, %p329
      %p332 = scmp.ne.s32.totalorder %s317, %s331
      %p333 = scmp.eq.s32.totalorder %s38, 0
      %p334 = por %p332, %p333
      %s336 = sadd.s32 %s335, 1
      %p339 = scmp.eq.s32.totalorder %s32, 1
      %p340 = scmp.ne.s32.totalorder %s335, %s337
      %p341 = scmp.eq.s32.totalorder %s32, 0
      %p342 = por %p340, %p341
      %p343 = scmp.ne.s32.totalorder %s335, %s337
      %p344 = scmp.eq.s32.totalorder %s37, 1
      %p345 = por %p343, %p344
      %p346 = scmp.ne.s32.totalorder %s337, %s338
      %p347 = scmp.eq.s32.totalorder %s37, 0
      %p348 = por %p346, %p347
      %p349 = scmp.ne.s32.totalorder %s337, %s338
      %p350 = scmp.eq.s32.totalorder %s38, 1
      %p351 = por %p349, %p350
      %p353 = scmp.ne.s32.totalorder %s338, %s352
      %p354 = scmp.eq.s32.totalorder %s38, 0
      %p355 = por %p353, %p354
      %s357 = sadd.s32 %s356, 1
      %p360 = scmp.eq.s32.totalorder %s32, 1
      %p361 = scmp.ne.s32.totalorder %s356, %s358
      %p362 = scmp.eq.s32.totalorder %s32, 0
      %p363 = por %p361, %p362
      %p364 = scmp.ne.s32.totalorder %s356, %s358
      %p365 = scmp.eq.s32.totalorder %s37, 1
      %p366 = por %p364, %p365
      %p367 = scmp.ne.s32.totalorder %s358, %s359
      %p368 = scmp.eq.s32.totalorder %s37, 0
      %p369 = por %p367, %p368
      %p370 = scmp.ne.s32.totalorder %s358, %s359
      %p371 = scmp.eq.s32.totalorder %s38, 1
      %p372 = por %p370, %p371
      %p374 = scmp.ne.s32.totalorder %s359, %s373
      %p375 = scmp.eq.s32.totalorder %s38, 0
      %p376 = por %p374, %p375
      %s378 = sadd.s32 %s377, 1
      %p381 = scmp.eq.s32.totalorder %s32, 1
      %p382 = scmp.ne.s32.totalorder %s377, %s379
      %p383 = scmp.eq.s32.totalorder %s32, 0
      %p384 = por %p382, %p383
      %p385 = scmp.ne.s32.totalorder %s377, %s379
      %p386 = scmp.eq.s32.totalorder %s37, 1
      %p387 = por %p385, %p386
      %p388 = scmp.ne.s32.totalorder %s379, %s380
      %p389 = scmp.eq.s32.totalorder %s37, 0
      %p390 = por %p388, %p389
      %p391 = scmp.ne.s32.totalorder %s379, %s380
      %p392 = scmp.eq.s32.totalorder %s38, 1
      %p393 = por %p391, %p392
      %p395 = scmp.ne.s32.totalorder %s380, %s394
      %p396 = scmp.eq.s32.totalorder %s38, 0
      %p397 = por %p395, %p396
      %s398 = ssub.s32 %s39, %s51
      %s399 = ssub.s32 %s40, %s47
      %s400 = sor.u32 %s398, %s399
      %p401 = scmp.eq.s32.totalorder %s400, 0
      %s403 = sadd.s32 %s402, 1
      %s404 = scalar_select %p401, %s402, %s403
      %p407 = pneg %p401
      %p408 = scmp.eq.s32.totalorder %s32, 1
      %p409 = por %p407, %p408
      %p410 = scmp.ne.s32.totalorder %s402, %s405
      %p411 = scmp.eq.s32.totalorder %s32, 0
      %p412 = por %p410, %p411
      %p413 = scmp.ne.s32.totalorder %s402, %s405
      %p414 = scmp.eq.s32.totalorder %s37, 1
      %p415 = por %p413, %p414
      %p416 = scmp.ne.s32.totalorder %s405, %s406
      %p417 = scmp.eq.s32.totalorder %s37, 0
      %p418 = por %p416, %p417
      %p419 = scmp.ne.s32.totalorder %s405, %s406
      %p420 = scmp.eq.s32.totalorder %s38, 1
      %p421 = por %p419, %p420
      %p423 = scmp.ne.s32.totalorder %s406, %s422
      %p424 = scmp.eq.s32.totalorder %s38, 0
      %p425 = por %p423, %p424
      %s426 = ssub.s32 %s39, %s51
      %s427 = ssub.s32 %s40, %s47
      %s428 = sor.u32 %s426, %s427
      %p429 = scmp.eq.s32.totalorder %s428, 0
      %s431 = sadd.s32 %s430, 1
      %s432 = scalar_select %p429, %s430, %s431
      %p435 = pneg %p429
      %p436 = scmp.eq.s32.totalorder %s32, 1
      %p437 = por %p435, %p436
      %p438 = scmp.ne.s32.totalorder %s430, %s433
      %p439 = scmp.eq.s32.totalorder %s32, 0
      %p440 = por %p438, %p439
      %p441 = scmp.ne.s32.totalorder %s430, %s433
      %p442 = scmp.eq.s32.totalorder %s37, 1
      %p443 = por %p441, %p442
      %p444 = scmp.ne.s32.totalorder %s433, %s434
      %p445 = scmp.eq.s32.totalorder %s37, 0
      %p446 = por %p444, %p445
      %p447 = scmp.ne.s32.totalorder %s433, %s434
      %p448 = scmp.eq.s32.totalorder %s38, 1
      %p449 = por %p447, %p448
      %p451 = scmp.ne.s32.totalorder %s434, %s450
      %p452 = scmp.eq.s32.totalorder %s38, 0
      %p453 = por %p451, %p452
      %p454 = scmp.le.s32.totalorder 1, %s32
      %p455 = scmp.lt.s32.totalorder %s32, 3
      %p456 = pnand %p454, %p455
      %p457 = pneg %p456
      // Predicated region
      $region9: #{tpu_custom_call.1} parent=5 // pred_check
        _
      $region10: #{tpu_custom_call.1} parent=5 // pred_check_branch
        %459 = sbr.rel (%p456) target = $region12
      $region11: #{tpu_custom_call.1} parent=5 // pred_region
        %s460 = ssub.s32 %s32, 1
        // Predicated region
        $region13: #{tpu_custom_call.1} parent=11 // pred_check
          %p461 = pneg %p96
        $region14: #{tpu_custom_call.1} parent=11 // pred_check_branch
          %463 = sbr.rel (%p461) target = $region16
        $region15: #{tpu_custom_call.1} parent=11 // pred_region
          %465 = vsyncadd [#allocation7], 0
          %s466 = smul.addr %s42, 8
          %s467 = scalar_lea.hbm %s1, %s466
          %s469 = sshll.u32 %s467, 4
          %s470 = int_to_ptr.hbm [resolvable:$true] %s469
          %s471 = sshll.u32 [#allocation6], 4
          %s472 = int_to_ptr.vmem [resolvable:$true] %s471
          %474 = dma.hbm_to_vmem [thread:$0]  %s470, 128, %s472, [#allocation7]
        $region16: #{tpu_custom_call.1} parent=11 // pred_fallthru
          _
        // Predicated region
        $region17: #{tpu_custom_call.1} parent=11 // pred_check
          %p475 = pneg %p117
        $region18: #{tpu_custom_call.1} parent=11 // pred_check_branch
          %477 = sbr.rel (%p475) target = $region20
        $region19: #{tpu_custom_call.1} parent=11 // pred_region
          _
        $region20: #{tpu_custom_call.1} parent=11 // pred_fallthru
          _
        // Predicated region
        $region21: #{tpu_custom_call.1} parent=11 // pred_check
          %p478 = pneg %p138
        $region22: #{tpu_custom_call.1} parent=11 // pred_check_branch
          %480 = sbr.rel (%p478) target = $region24
        $region23: #{tpu_custom_call.1} parent=11 // pred_region
          _
        $region24: #{tpu_custom_call.1} parent=11 // pred_fallthru
          _
        // Predicated region
        $region25: #{tpu_custom_call.1} parent=11 // pred_check
          %p481 = pneg %p159
        $region26: #{tpu_custom_call.1} parent=11 // pred_check_branch
          %483 = sbr.rel (%p481) target = $region28
        $region27: #{tpu_custom_call.1} parent=11 // pred_region
          _
        $region28: #{tpu_custom_call.1} parent=11 // pred_fallthru
          _
        // Predicated region
        $region29: #{tpu_custom_call.1} parent=11 // pred_check
          %p484 = pneg %p180
        $region30: #{tpu_custom_call.1} parent=11 // pred_check_branch
          %486 = sbr.rel (%p484) target = $region32
        $region31: #{tpu_custom_call.1} parent=11 // pred_region
          _
        $region32: #{tpu_custom_call.1} parent=11 // pred_fallthru
          _
        // Predicated region
        $region33: #{tpu_custom_call.1} parent=11 // pred_check
          %p487 = pneg %p201
        $region34: #{tpu_custom_call.1} parent=11 // pred_check_branch
          %489 = sbr.rel (%p487) target = $region36
        $region35: #{tpu_custom_call.1} parent=11 // pred_region
          _
        $region36: #{tpu_custom_call.1} parent=11 // pred_fallthru
          _
        // Predicated region
        $region37: #{tpu_custom_call.1} parent=11 // pred_check
          %p490 = pneg %p222
        $region38: #{tpu_custom_call.1} parent=11 // pred_check_branch
          %492 = sbr.rel (%p490) target = $region40
        $region39: #{tpu_custom_call.1} parent=11 // pred_region
          _
        $region40: #{tpu_custom_call.1} parent=11 // pred_fallthru
          _
        // Predicated region
        $region41: #{tpu_custom_call.1} parent=11 // pred_check
          %p493 = pneg %p243
        $region42: #{tpu_custom_call.1} parent=11 // pred_check_branch
          %495 = sbr.rel (%p493) target = $region44
        $region43: #{tpu_custom_call.1} parent=11 // pred_region
          %497 = vsyncadd [#allocation10], 0
          %s498 = sshll.u32 %s8, 4
          %s499 = int_to_ptr.hbm [resolvable:$true] %s498
          %s500 = sshll.u32 [#allocation9], 4
          %s501 = int_to_ptr.vmem [resolvable:$true] %s500
          %506 = dma.hbm_to_vmem [thread:$0]  %s499, 256, %s501, [#allocation10], 64, 64, 4
        $region44: #{tpu_custom_call.1} parent=11 // pred_fallthru
          _
        // Predicated region
        $region45: #{tpu_custom_call.1} parent=11 // pred_check
          %p507 = pneg %p264
        $region46: #{tpu_custom_call.1} parent=11 // pred_check_branch
          %509 = sbr.rel (%p507) target = $region48
        $region47: #{tpu_custom_call.1} parent=11 // pred_region
          _
        $region48: #{tpu_custom_call.1} parent=11 // pred_fallthru
          _
        // Predicated region
        $region49: #{tpu_custom_call.1} parent=11 // pred_check
          %p510 = pneg %p285
        $region50: #{tpu_custom_call.1} parent=11 // pred_check_branch
          %512 = sbr.rel (%p510) target = $region52
        $region51: #{tpu_custom_call.1} parent=11 // pred_region
          _
        $region52: #{tpu_custom_call.1} parent=11 // pred_fallthru
          _
        // Predicated region
        $region53: #{tpu_custom_call.1} parent=11 // pred_check
          %p513 = pneg %p306
        $region54: #{tpu_custom_call.1} parent=11 // pred_check_branch
          %515 = sbr.rel (%p513) target = $region56
        $region55: #{tpu_custom_call.1} parent=11 // pred_region
          _
        $region56: #{tpu_custom_call.1} parent=11 // pred_fallthru
          _
        // Predicated region
        $region57: #{tpu_custom_call.1} parent=11 // pred_check
          %p516 = pneg %p327
        $region58: #{tpu_custom_call.1} parent=11 // pred_check_branch
          %518 = sbr.rel (%p516) target = $region60
        $region59: #{tpu_custom_call.1} parent=11 // pred_region
          %520 = vsyncadd [#allocation10], 0
          %s521 = sshll.u32 %s12, 4
          %s522 = int_to_ptr.hbm [resolvable:$true] %s521
          %s523 = sshll.u32 [#allocation11], 4
          %s524 = int_to_ptr.vmem [resolvable:$true] %s523
          %529 = dma.hbm_to_vmem [thread:$0]  %s522, 256, %s524, [#allocation10], 64, 64, 4
        $region60: #{tpu_custom_call.1} parent=11 // pred_fallthru
          _
        // Predicated region
        $region61: #{tpu_custom_call.1} parent=11 // pred_check
          %p530 = pneg %p348
        $region62: #{tpu_custom_call.1} parent=11 // pred_check_branch
          %532 = sbr.rel (%p530) target = $region64
        $region63: #{tpu_custom_call.1} parent=11 // pred_region
          _
        $region64: #{tpu_custom_call.1} parent=11 // pred_fallthru
          _
        // Predicated region
        $region65: #{tpu_custom_call.1} parent=11 // pred_check
          %p533 = pneg %p369
        $region66: #{tpu_custom_call.1} parent=11 // pred_check_branch
          %535 = sbr.rel (%p533) target = $region68
        $region67: #{tpu_custom_call.1} parent=11 // pred_region
          _
        $region68: #{tpu_custom_call.1} parent=11 // pred_fallthru
          _
        // Predicated region
        $region69: #{tpu_custom_call.1} parent=11 // pred_check
          %p536 = pneg %p390
        $region70: #{tpu_custom_call.1} parent=11 // pred_check_branch
          %538 = sbr.rel (%p536) target = $region72
        $region71: #{tpu_custom_call.1} parent=11 // pred_region
          _
        $region72: #{tpu_custom_call.1} parent=11 // pred_fallthru
          _
      $region12: #{tpu_custom_call.1} parent=5 // pred_fallthru
        _
      %p539 = scmp.lt.s32.totalorder %s32, 2
      // Predicated region
      $region73: #{tpu_custom_call.1} parent=5 // pred_check
        %p540 = pneg %p539
      $region74: #{tpu_custom_call.1} parent=5 // pred_check_branch
        %542 = sbr.rel (%p540) target = $region76
      $region75: #{tpu_custom_call.1} parent=5 // pred_region
        // Predicated region
        $region77: #{tpu_custom_call.1} parent=75 // pred_check
          %p543 = pneg %p64
        $region78: #{tpu_custom_call.1} parent=75 // pred_check_branch
          %545 = sbr.rel (%p543) target = $region80
        $region79: #{tpu_custom_call.1} parent=75 // pred_region
          %p546 = scmp.lt.s32.totalorder %s39, 1
          %s547 = scalar_select %p546, %s39, 1
          %s548 = smul.addr %s547, 8
          %s549 = scalar_lea.vmem %s0, %s548
        $region80: #{tpu_custom_call.1} parent=75 // pred_fallthru
          _
      $region76: #{tpu_custom_call.1} parent=5 // pred_fallthru
        _
      %p550 = scmp.le.s32.totalorder 1, %s32
      %p551 = scmp.lt.s32.totalorder %s32, 3
      %p552 = pnand %p550, %p551
      %p553 = pneg %p552
      // Predicated region
      $region81: #{tpu_custom_call.1} parent=5 // pred_check
        _
      $region82: #{tpu_custom_call.1} parent=5 // pred_check_branch
        %555 = sbr.rel (%p552) target = $region84
      $region83: #{tpu_custom_call.1} parent=5 // pred_region
        %s556 = ssub.s32 %s32, 1
        // Predicated region
        $region85: #{tpu_custom_call.1} parent=83 // pred_check
          %p557 = pneg %p96
        $region86: #{tpu_custom_call.1} parent=83 // pred_check_branch
          %559 = sbr.rel (%p557) target = $region88
        $region87: #{tpu_custom_call.1} parent=83 // pred_region
          %561 = dma.done [#allocation7], 128
        $region88: #{tpu_custom_call.1} parent=83 // pred_fallthru
          _
        // Predicated region
        $region89: #{tpu_custom_call.1} parent=83 // pred_check
          %p562 = pneg %p243
        $region90: #{tpu_custom_call.1} parent=83 // pred_check_branch
          %564 = sbr.rel (%p562) target = $region92
        $region91: #{tpu_custom_call.1} parent=83 // pred_region
          %566 = dma.done [#allocation10], 256
        $region92: #{tpu_custom_call.1} parent=83 // pred_fallthru
          _
        // Predicated region
        $region93: #{tpu_custom_call.1} parent=83 // pred_check
          %p567 = pneg %p327
        $region94: #{tpu_custom_call.1} parent=83 // pred_check_branch
          %569 = sbr.rel (%p567) target = $region96
        $region95: #{tpu_custom_call.1} parent=83 // pred_region
          %571 = dma.done [#allocation10], 256
        $region96: #{tpu_custom_call.1} parent=83 // pred_fallthru
          _
        %p572 = scmp.lt.s32.totalorder %s41, 1
        %s573 = scalar_select %p572, %s41, 1
        %s574 = smul.addr %s573, 8
        %s575 = scalar_lea.vmem %s0, %s574
        %p576 = pneg %p70
        %p577 = pneg %p67
        %p578 = pneg %p96
        %p579 = pneg %p93
        %p580 = pneg %p117
        %p581 = pneg %p114
        %p582 = pneg %p138
        %p583 = pneg %p135
        %p584 = pneg %p159
        %p585 = pneg %p156
        %p586 = pneg %p180
        %p587 = pneg %p177
        %p588 = pneg %p201
        %p589 = pneg %p198
        %p590 = pneg %p222
        %p591 = pneg %p219
        %p592 = pneg %p243
        %p593 = pneg %p240
        %p594 = pneg %p264
        %p595 = pneg %p261
        %p596 = pneg %p285
        %p597 = pneg %p282
        %p598 = pneg %p306
        %p599 = pneg %p303
        %p600 = pneg %p327
        %p601 = pneg %p324
        %p602 = pneg %p348
        %p603 = pneg %p345
        %p604 = pneg %p369
        %p605 = pneg %p366
        %p606 = pneg %p390
        %p607 = pneg %p387
        %p608 = pneg %p418
        %p609 = pneg %p415
        %s610 = sand.u32 %s405, 1
        %s611 = scalar_lea.sflag [#allocation8], %s610
        %s612 = sand.u32 %s405, 1
        %s613 = smul.addr %s612, 8
        %s614 = scalar_lea.vmem [#allocation12], %s613
        %p615 = pneg %p446
        %p616 = pneg %p443
        %s617 = sand.u32 %s433, 1
        %s618 = scalar_lea.sflag [#allocation14], %s617
        %s619 = sand.u32 %s433, 1
        %s620 = smul.addr %s619, 16
        %s621 = scalar_lea.vmem [#allocation13], %s620
        %p622 = scmp.lt.s32.totalorder %s41, 1
        %s623 = scalar_select %p622, %s41, 1
        %s624 = smul.addr %s623, 8
        %s625 = scalar_lea.vmem %s0, %s624
        %p627 = scmp.eq.s32.totalorder %s42, 0
        // Predicated region
        $region97: #{tpu_custom_call.1} parent=83 // pred_check
          %p628 = pneg %p627
        $region98: #{tpu_custom_call.1} parent=83 // pred_check_branch
          %630 = sbr.rel (%p628) target = $region100
        $region99: #{tpu_custom_call.1} parent=83 // pred_region
          %v631 = vld [vmem:[%s625] sm:$0xff]
          %v632 = vld [vmem:[%s2] sm:$0x1]
          %v633 = vld [vmem:[%s3] sm:$0x1]
          %vm634 = vcmask 261120
          %v635 = vsel %vm634, %v631, 0.0
          %636 = vadd.xlane.f32.xlu0 %v635
          %v637 = vpop.xlane.xlu0 %636
          %v638 = vrcp.pop 32.0
          %v639 = vmul.f32 32.0, %v638
          %v640 = vsub.f32 1.0, %v639
          %v641 = vmul.f32 %v638, %v640
          %v642 = vadd.f32 %v638, %v641
          %vm643 = vweird.f32 %v638
          %v644 = vsel %vm643, %v638, %v642
          %v645 = vmul.f32 %v637, %v644
          %v646 = vsub.f32 %v631, %v645
          %v647 = vmul.f32 %v646, %v646
          %v648 = vsel %vm634, %v647, 0.0
          %649 = vadd.xlane.f32.xlu0 %v648
          %v650 = vpop.xlane.xlu0 %649
          %v651 = vmul.f32 %v650, %v644
          %v652 = vadd.f32 %v651, 1e-05
          %v653 = vrsqrt.pop %v652
          %v654 = vmul.f32 %v653, %v652
          %v655 = vmul.f32 %v654, %v653
          %v656 = vmul.f32 0.5, %v655
          %v657 = vsub.f32 1.5, %v656
          %v658 = vmul.f32 %v653, %v657
          %vm659 = vweird.f32 %v652
          %vm660 = vweird.f32 %v653
          %vm661 = vmor %vm659, %vm660
          %v662 = vsel %vm661, %v653, %v658
          %v663 = vmul.f32 %v646, %v662
          %v665 = vperm.slane %v632, 0
          %v667 = vmul.f32 %v663, %v665
          %v669 = vperm.slane %v633, 0
          %v671 = vadd.f32 %v667, %v669
          %v672 = vpack.c.bf16 %v671, %v671
          %v673 = vld [vmem:[%s6] sm:$0xf]
          %v674 = vld [vmem:[%s6 + $0x4] sm:$0xf]
          %v675 = vld [vmem:[%s6 + $0x8] sm:$0xf]
          %v676 = vld [vmem:[%s6 + $0xc] sm:$0xf]
          %v677 = vld [vmem:[%s7] sm:$0x1]
          %v679 = vperm.slane %v677, 0
          %v685 = vunpack.c.l.b16 %v673
          %v686 = vunpack.c.l.b16 %v674
          %v687 = vunpack.c.l.b16 %v675
          %v688 = vunpack.c.l.b16 %v676
          %v689 = vpack.c.b16 %v686, %v685
          %v690 = vpack.c.b16 %v688, %v687
          %v694 = vsel %vm634, %v672, 0
          %696 = vmatpush.bf16.msra.mxu0 0
          %697 = vmatpush.bf16.msra.mxu0 0
          %698 = vmatpush.bf16.msra.mxu0 0
          %699 = vmatpush.bf16.msra.mxu0 0
          %700 = vmatpush.bf16.msra.mxu0 0
          %701 = vmatpush.bf16.msra.mxu0 0
          %702 = vmatpush.bf16.msra.mxu0 %v690
          %703 = vmatpush.bf16.msra.mxu0 %v689
          %704 = vmatmul.bf16.gmra.mxu0 %v694
          %v705 = vpop.f32.mrf.mxu0
          %v706 = vadd.f32 %v679, %v705
          %v707 = vpop.f32.mrf.mxu0
          %708 = vdwg.mxu0
          %v709 = vpack.c.bf16 %v706, %v706
          %vm710 = vcmask 60416
          %711 = vst.msk [vmem:[#allocation2] sm:$0xf] %vm710, %v709
          %713 = vrot.lane.b32.xlu0 %v709, 96
          %v714 = vpop.permute.xlu0 %713
          %716 = vst.msk [vmem:[#allocation3] sm:$0xf] %vm710, %v714
          %717 = vrot.lane.b32.xlu0 %v709, 120
          %v718 = vpop.permute.xlu0 %717
          %s720 = scalar_lea.vmem [#allocation2], 4
          %721 = vst.msk [vmem:[%s720] sm:$0xf] %vm710, %v718
          %722 = vrot.lane.b32.xlu0 %v709, 88
          %v723 = vpop.permute.xlu0 %722
          %s725 = scalar_lea.vmem [#allocation3], 4
          %726 = vst.msk [vmem:[%s725] sm:$0xf] %vm710, %v723
          %727 = vrot.lane.b32.xlu0 %v709, 112
          %v728 = vpop.permute.xlu0 %727
          %s730 = scalar_lea.vmem [#allocation2], 8
          %731 = vst.msk [vmem:[%s730] sm:$0xf] %vm710, %v728
          %732 = vrot.lane.b32.xlu0 %v709, 80
          %v733 = vpop.permute.xlu0 %732
          %s735 = scalar_lea.vmem [#allocation3], 8
          %736 = vst.msk [vmem:[%s735] sm:$0xf] %vm710, %v733
          %737 = vrot.lane.b32.xlu0 %v709, 104
          %v738 = vpop.permute.xlu0 %737
          %s740 = scalar_lea.vmem [#allocation2], 12
          %741 = vst.msk [vmem:[%s740] sm:$0xf] %vm710, %v738
          %742 = vrot.lane.b32.xlu0 %v709, 72
          %v743 = vpop.permute.xlu0 %742
          %s745 = scalar_lea.vmem [#allocation3], 12
          %746 = vst.msk [vmem:[%s745] sm:$0xf] %vm710, %v743
        $region100: #{tpu_custom_call.1} parent=83 // pred_fallthru
          _
        %s747 = smul.u32 %s42, 8
        %s748 = scalar_lea.vmem %s625, %s747
        %v749 = vld [vmem:[%s748] sm:$0xff]
        %v750 = vld [vmem:[%s2] sm:$0x1]
        %v751 = vld [vmem:[%s3] sm:$0x1]
        %vm752 = vcmask 261120
        %v753 = vsel %vm752, %v749, 0.0
        %754 = vadd.xlane.f32.xlu0 %v753
        %v755 = vpop.xlane.xlu0 %754
        %v756 = vrcp.pop 32.0
        %v757 = vmul.f32 32.0, %v756
        %v758 = vsub.f32 1.0, %v757
        %v759 = vmul.f32 %v756, %v758
        %v760 = vadd.f32 %v756, %v759
        %vm761 = vweird.f32 %v756
        %v762 = vsel %vm761, %v756, %v760
        %v763 = vmul.f32 %v755, %v762
        %v764 = vsub.f32 %v749, %v763
        %v765 = vmul.f32 %v764, %v764
        %v766 = vsel %vm752, %v765, 0.0
        %767 = vadd.xlane.f32.xlu0 %v766
        %v768 = vpop.xlane.xlu0 %767
        %v769 = vmul.f32 %v768, %v762
        %v770 = vadd.f32 %v769, 1e-05
        %v771 = vrsqrt.pop %v770
        %v772 = vmul.f32 %v771, %v770
        %v773 = vmul.f32 %v772, %v771
        %v774 = vmul.f32 0.5, %v773
        %v775 = vsub.f32 1.5, %v774
        %v776 = vmul.f32 %v771, %v775
        %vm777 = vweird.f32 %v770
        %vm778 = vweird.f32 %v771
        %vm779 = vmor %vm777, %vm778
        %v780 = vsel %vm779, %v771, %v776
        %v781 = vmul.f32 %v764, %v780
        %v783 = vperm.slane %v750, 0
        %v785 = vmul.f32 %v781, %v783
        %v787 = vperm.slane %v751, 0
        %v789 = vadd.f32 %v785, %v787
        %v790 = vpack.c.bf16 %v789, %v789
        %v791 = vld [vmem:[%s4] sm:$0xf]
        %v792 = vld [vmem:[%s4 + $0x4] sm:$0xf]
        %v793 = vld [vmem:[%s4 + $0x8] sm:$0xf]
        %v794 = vld [vmem:[%s4 + $0xc] sm:$0xf]
        %v795 = vld [vmem:[%s5] sm:$0x1]
        %v797 = vperm.slane %v795, 0
        %v803 = vunpack.c.l.b16 %v791
        %v804 = vunpack.c.l.b16 %v792
        %v805 = vunpack.c.l.b16 %v793
        %v806 = vunpack.c.l.b16 %v794
        %v807 = vpack.c.b16 %v804, %v803
        %v808 = vpack.c.b16 %v806, %v805
        %v812 = vsel %vm752, %v790, 0
        %814 = vmatpush.bf16.msra.mxu0 0
        %815 = vmatpush.bf16.msra.mxu0 0
        %816 = vmatpush.bf16.msra.mxu0 0
        %817 = vmatpush.bf16.msra.mxu0 0
        %818 = vmatpush.bf16.msra.mxu0 0
        %819 = vmatpush.bf16.msra.mxu0 0
        %820 = vmatpush.bf16.msra.mxu0 %v808
        %821 = vmatpush.bf16.msra.mxu0 %v807
        %822 = vmatmul.bf16.gmra.mxu0 %v812
        %v823 = vpop.f32.mrf.mxu0
        %v824 = vadd.f32 %v797, %v823
        %v825 = vpop.f32.mrf.mxu0
        %826 = vdwg.mxu0
        %v827 = vpack.c.bf16 %v824, %v824
        %vm828 = vcmask 60416
        %829 = vst.msk [vmem:[#allocation4] sm:$0xf] %vm828, %v827
        %831 = vrot.lane.b32.xlu0 %v827, 120
        %v832 = vpop.permute.xlu0 %831
        %s834 = scalar_lea.vmem [#allocation4], 4
        %835 = vst.msk [vmem:[%s834] sm:$0xf] %vm828, %v832
        %836 = vrot.lane.b32.xlu0 %v827, 112
        %v837 = vpop.permute.xlu0 %836
        %s839 = scalar_lea.vmem [#allocation4], 8
        %840 = vst.msk [vmem:[%s839] sm:$0xf] %vm828, %v837
        %841 = vrot.lane.b32.xlu0 %v827, 104
        %v842 = vpop.permute.xlu0 %841
        %s844 = scalar_lea.vmem [#allocation4], 12
        %845 = vst.msk [vmem:[%s844] sm:$0xf] %vm828, %v842
        %v846 = vld [vmem:[#allocation4] sm:$0xf]
        %v847 = vld [vmem:[#allocation4 + $0x4] sm:$0xf]
        %v848 = vld [vmem:[#allocation4 + $0x8] sm:$0xf]
        %v849 = vld [vmem:[#allocation4 + $0xc] sm:$0xf]
        %v850 = vld [vmem:[#allocation2] sm:$0xf]
        %v851 = vld [vmem:[#allocation2 + $0x4] sm:$0xf]
        %v852 = vld [vmem:[#allocation2 + $0x8] sm:$0xf]
        %v853 = vld [vmem:[#allocation2 + $0xc] sm:$0xf]
        %vm854 = vcmask 64512
        %v856 = vsel %vm854, %v846, 0
        %v859 = vsel %vm854, %v850, 0
        %861 = vmatpush.bf16.xpose.msra.mxu0 0
        %862 = vmatpush.bf16.xpose.msra.mxu0 0
        %863 = vmatpush.bf16.xpose.msra.mxu0 0
        %864 = vmatpush.bf16.xpose.msra.mxu0 0
        %865 = vmatpush.bf16.xpose.msra.mxu0 0
        %866 = vmatpush.bf16.xpose.msra.mxu0 0
        %867 = vmatpush.bf16.xpose.msra.mxu0 0
        %868 = vmatpush.bf16.xpose.msra.mxu0 %v859
        %869 = vmatmul.bf16.gmra.mxu0 %v856
        %v870 = vpop.f32.mrf.mxu0
        %v871 = vadd.f32 0.0, %v870
        %v872 = vpop.f32.mrf.mxu0
        %873 = vdwg.mxu0
        %v875 = vsel %vm854, %v847, 0
        %v878 = vsel %vm854, %v851, 0
        %880 = vmatpush.bf16.xpose.msra.mxu0 0
        %881 = vmatpush.bf16.xpose.msra.mxu0 0
        %882 = vmatpush.bf16.xpose.msra.mxu0 0
        %883 = vmatpush.bf16.xpose.msra.mxu0 0
        %884 = vmatpush.bf16.xpose.msra.mxu0 0
        %885 = vmatpush.bf16.xpose.msra.mxu0 0
        %886 = vmatpush.bf16.xpose.msra.mxu0 0
        %887 = vmatpush.bf16.xpose.msra.mxu0 %v878
        %888 = vmatmul.bf16.gmra.mxu0 %v875
        %v889 = vpop.f32.mrf.mxu0
        %v890 = vadd.f32 0.0, %v889
        %v891 = vpop.f32.mrf.mxu0
        %892 = vdwg.mxu0
        %v894 = vsel %vm854, %v848, 0
        %v897 = vsel %vm854, %v852, 0
        %899 = vmatpush.bf16.xpose.msra.mxu0 0
        %900 = vmatpush.bf16.xpose.msra.mxu0 0
        %901 = vmatpush.bf16.xpose.msra.mxu0 0
        %902 = vmatpush.bf16.xpose.msra.mxu0 0
        %903 = vmatpush.bf16.xpose.msra.mxu0 0
        %904 = vmatpush.bf16.xpose.msra.mxu0 0
        %905 = vmatpush.bf16.xpose.msra.mxu0 0
        %906 = vmatpush.bf16.xpose.msra.mxu0 %v897
        %907 = vmatmul.bf16.gmra.mxu0 %v894
        %v908 = vpop.f32.mrf.mxu0
        %v909 = vadd.f32 0.0, %v908
        %v910 = vpop.f32.mrf.mxu0
        %911 = vdwg.mxu0
        %v913 = vsel %vm854, %v849, 0
        %v916 = vsel %vm854, %v853, 0
        %918 = vmatpush.bf16.xpose.msra.mxu0 0
        %919 = vmatpush.bf16.xpose.msra.mxu0 0
        %920 = vmatpush.bf16.xpose.msra.mxu0 0
        %921 = vmatpush.bf16.xpose.msra.mxu0 0
        %922 = vmatpush.bf16.xpose.msra.mxu0 0
        %923 = vmatpush.bf16.xpose.msra.mxu0 0
        %924 = vmatpush.bf16.xpose.msra.mxu0 0
        %925 = vmatpush.bf16.xpose.msra.mxu0 %v916
        %926 = vmatmul.bf16.gmra.mxu0 %v913
        %v927 = vpop.f32.mrf.mxu0
        %v928 = vadd.f32 0.0, %v927
        %v929 = vpop.f32.mrf.mxu0
        %930 = vdwg.mxu0
        %v931 = vmul.f32 %v871, 0.35355338
        %v932 = vmul.f32 %v890, 0.35355338
        %v933 = vmul.f32 %v909, 0.35355338
        %v934 = vmul.f32 %v928, 0.35355338
        %v935 = vld [vmem:[#allocation6] sm:$0xff]
        %v936 = vadd.f32 %v931, %v935
        %v937 = vadd.f32 %v932, %v935
        %v938 = vadd.f32 %v933, %v935
        %v939 = vadd.f32 %v934, %v935
        %v940 = vsel %vm854, %v936, -inf
        %941 = vmax.xlane.f32.xlu0 %v940
        %v942 = vpop.xlane.xlu0 %941
        %v943 = vsel %vm854, %v937, -inf
        %944 = vmax.xlane.f32.xlu0 %v943
        %v945 = vpop.xlane.xlu0 %944
        %v946 = vsel %vm854, %v938, -inf
        %947 = vmax.xlane.f32.xlu0 %v946
        %v948 = vpop.xlane.xlu0 %947
        %v949 = vsel %vm854, %v939, -inf
        %950 = vmax.xlane.f32.xlu0 %v949
        %v951 = vpop.xlane.xlu0 %950
        %v952 = vsub.f32 %v936, %v942
        %v953 = vsub.f32 %v937, %v945
        %v954 = vsub.f32 %v938, %v948
        %v955 = vsub.f32 %v939, %v951
        %v956 = vmul.f32 %v952, 1.442695
        %v957 = vpow.pop %v956
        %v958 = vmul.f32 %v953, 1.442695
        %v959 = vpow.pop %v958
        %v960 = vmul.f32 %v954, 1.442695
        %v961 = vpow.pop %v960
        %v962 = vmul.f32 %v955, 1.442695
        %v963 = vpow.pop %v962
        %v964 = vsel %vm854, %v957, 0.0
        %965 = vadd.xlane.f32.xlu0 %v964
        %v966 = vpop.xlane.xlu0 %965
        %v967 = vsel %vm854, %v959, 0.0
        %968 = vadd.xlane.f32.xlu0 %v967
        %v969 = vpop.xlane.xlu0 %968
        %v970 = vsel %vm854, %v961, 0.0
        %971 = vadd.xlane.f32.xlu0 %v970
        %v972 = vpop.xlane.xlu0 %971
        %v973 = vsel %vm854, %v963, 0.0
        %974 = vadd.xlane.f32.xlu0 %v973
        %v975 = vpop.xlane.xlu0 %974
        %v976 = vrcp.pop %v966
        %v977 = vrcp.pop %v969
        %v978 = vrcp.pop %v972
        %v979 = vrcp.pop %v975
        %v980 = vmul.f32 %v957, %v976
        %v981 = vmul.f32 %v959, %v977
        %v982 = vmul.f32 %v961, %v978
        %v983 = vmul.f32 %v963, %v979
        %v984 = vpack.c.bf16 %v980, %v980
        %v985 = vpack.c.bf16 %v981, %v981
        %v986 = vpack.c.bf16 %v982, %v982
        %v987 = vpack.c.bf16 %v983, %v983
        %988 = vst.msk [vmem:[%s621] sm:$0xf] %vm828, %v984
        %989 = vst.msk [vmem:[%s621 + $0x4] sm:$0xf] %vm828, %v985
        %990 = vst.msk [vmem:[%s621 + $0x8] sm:$0xf] %vm828, %v986
        %991 = vst.msk [vmem:[%s621 + $0xc] sm:$0xf] %vm828, %v987
        %v992 = vld [vmem:[#allocation3] sm:$0xf]
        %v993 = vld [vmem:[#allocation3 + $0x4] sm:$0xf]
        %v994 = vld [vmem:[#allocation3 + $0x8] sm:$0xf]
        %v995 = vld [vmem:[#allocation3 + $0xc] sm:$0xf]
        %v997 = vsel %vm854, %v984, 0
        %vm999 = vcmask 1043456
        %v1001 = vsel %vm999, %v992, 0
        %1003 = vmatpush.bf16.msra.mxu0 0
        %1004 = vmatpush.bf16.msra.mxu0 0
        %1005 = vmatpush.bf16.msra.mxu0 0
        %1006 = vmatpush.bf16.msra.mxu0 0
        %1007 = vmatpush.bf16.msra.mxu0 0
        %1008 = vmatpush.bf16.msra.mxu0 0
        %1009 = vmatpush.bf16.msra.mxu0 0
        %1010 = vmatpush.bf16.msra.mxu0 %v1001
        %1011 = vmatmul.bf16.gmra.mxu0 %v997
        %v1012 = vpop.f32.mrf.mxu0
        %v1013 = vadd.f32 0.0, %v1012
        %v1014 = vpop.f32.mrf.mxu0
        %1015 = vdwg.mxu0
        %v1017 = vsel %vm854, %v985, 0
        %v1020 = vsel %vm999, %v993, 0
        %1022 = vmatpush.bf16.msra.mxu0 0
        %1023 = vmatpush.bf16.msra.mxu0 0
        %1024 = vmatpush.bf16.msra.mxu0 0
        %1025 = vmatpush.bf16.msra.mxu0 0
        %1026 = vmatpush.bf16.msra.mxu0 0
        %1027 = vmatpush.bf16.msra.mxu0 0
        %1028 = vmatpush.bf16.msra.mxu0 0
        %1029 = vmatpush.bf16.msra.mxu0 %v1020
        %1030 = vmatmul.bf16.gmra.mxu0 %v1017
        %v1031 = vpop.f32.mrf.mxu0
        %v1032 = vadd.f32 0.0, %v1031
        %v1033 = vpop.f32.mrf.mxu0
        %1034 = vdwg.mxu0
        %v1036 = vsel %vm854, %v986, 0
        %v1039 = vsel %vm999, %v994, 0
        %1041 = vmatpush.bf16.msra.mxu0 0
        %1042 = vmatpush.bf16.msra.mxu0 0
        %1043 = vmatpush.bf16.msra.mxu0 0
        %1044 = vmatpush.bf16.msra.mxu0 0
        %1045 = vmatpush.bf16.msra.mxu0 0
        %1046 = vmatpush.bf16.msra.mxu0 0
        %1047 = vmatpush.bf16.msra.mxu0 0
        %1048 = vmatpush.bf16.msra.mxu0 %v1039
        %1049 = vmatmul.bf16.gmra.mxu0 %v1036
        %v1050 = vpop.f32.mrf.mxu0
        %v1051 = vadd.f32 0.0, %v1050
        %v1052 = vpop.f32.mrf.mxu0
        %1053 = vdwg.mxu0
        %v1055 = vsel %vm854, %v987, 0
        %v1058 = vsel %vm999, %v995, 0
        %1060 = vmatpush.bf16.msra.mxu0 0
        %1061 = vmatpush.bf16.msra.mxu0 0
        %1062 = vmatpush.bf16.msra.mxu0 0
        %1063 = vmatpush.bf16.msra.mxu0 0
        %1064 = vmatpush.bf16.msra.mxu0 0
        %1065 = vmatpush.bf16.msra.mxu0 0
        %1066 = vmatpush.bf16.msra.mxu0 0
        %1067 = vmatpush.bf16.msra.mxu0 %v1058
        %1068 = vmatmul.bf16.gmra.mxu0 %v1055
        %v1069 = vpop.f32.mrf.mxu0
        %v1070 = vadd.f32 0.0, %v1069
        %v1071 = vpop.f32.mrf.mxu0
        %1072 = vdwg.mxu0
        %v1073 = vpack.c.bf16 %v1013, %v1013
        %1074 = vst.msk [vmem:[#allocation5] sm:$0xf] %vm828, %v1073
        %v1075 = vpack.c.bf16 %v1032, %v1032
        %1077 = vrot.lane.b32.xlu0 %v1075, 8
        %v1078 = vpop.permute.xlu0 %1077
        %vm1080 = vcmask 126016
        %1081 = vst.msk [vmem:[#allocation5] sm:$0xf] %vm1080, %v1078
        %v1082 = vpack.c.bf16 %v1051, %v1051
        %1084 = vrot.lane.b32.xlu0 %v1082, 16
        %v1085 = vpop.permute.xlu0 %1084
        %vm1087 = vcmask 191616
        %1088 = vst.msk [vmem:[#allocation5] sm:$0xf] %vm1087, %v1085
        %v1089 = vpack.c.bf16 %v1070, %v1070
        %1091 = vrot.lane.b32.xlu0 %v1089, 24
        %v1092 = vpop.permute.xlu0 %1091
        %vm1094 = vcmask 257216
        %1095 = vst.msk [vmem:[#allocation5] sm:$0xf] %vm1094, %v1092
        %v1096 = vld [vmem:[#allocation5] sm:$0xf]
        %v1097 = vld [vmem:[#allocation9] sm:$0xf]
        %v1098 = vld [vmem:[#allocation9 + $0x4] sm:$0xf]
        %v1099 = vld [vmem:[#allocation9 + $0x8] sm:$0xf]
        %v1100 = vld [vmem:[#allocation9 + $0xc] sm:$0xf]
        %v1101 = vld [vmem:[%s9] sm:$0x1]
        %v1103 = vperm.slane %v1101, 0
        %v1109 = vunpack.c.l.b16 %v1097
        %v1110 = vunpack.c.l.b16 %v1098
        %v1111 = vunpack.c.l.b16 %v1099
        %v1112 = vunpack.c.l.b16 %v1100
        %v1113 = vpack.c.b16 %v1110, %v1109
        %v1114 = vpack.c.b16 %v1112, %v1111
        %v1118 = vsel %vm752, %v1096, 0
        %1120 = vmatpush.bf16.msra.mxu0 0
        %1121 = vmatpush.bf16.msra.mxu0 0
        %1122 = vmatpush.bf16.msra.mxu0 0
        %1123 = vmatpush.bf16.msra.mxu0 0
        %1124 = vmatpush.bf16.msra.mxu0 0
        %1125 = vmatpush.bf16.msra.mxu0 0
        %1126 = vmatpush.bf16.msra.mxu0 %v1114
        %1127 = vmatpush.bf16.msra.mxu0 %v1113
        %1128 = vmatmul.bf16.gmra.mxu0 %v1118
        %v1129 = vpop.f32.mrf.mxu0
        %v1130 = vadd.f32 %v1103, %v1129
        %v1131 = vpop.f32.mrf.mxu0
        %1132 = vdwg.mxu0
        %v1133 = vadd.f32 %v749, %v1130
        %v1134 = vld [vmem:[%s10] sm:$0x1]
        %v1135 = vld [vmem:[%s11] sm:$0x1]
        %v1136 = vsel %vm752, %v1133, 0.0
        %1137 = vadd.xlane.f32.xlu0 %v1136
        %v1138 = vpop.xlane.xlu0 %1137
        %v1139 = vmul.f32 %v1138, %v762
        %v1140 = vsub.f32 %v1133, %v1139
        %v1141 = vmul.f32 %v1140, %v1140
        %v1142 = vsel %vm752, %v1141, 0.0
        %1143 = vadd.xlane.f32.xlu0 %v1142
        %v1144 = vpop.xlane.xlu0 %1143
        %v1145 = vmul.f32 %v1144, %v762
        %v1146 = vadd.f32 %v1145, 1e-05
        %v1147 = vrsqrt.pop %v1146
        %v1148 = vmul.f32 %v1147, %v1146
        %v1149 = vmul.f32 %v1148, %v1147
        %v1150 = vmul.f32 0.5, %v1149
        %v1151 = vsub.f32 1.5, %v1150
        %v1152 = vmul.f32 %v1147, %v1151
        %vm1153 = vweird.f32 %v1146
        %vm1154 = vweird.f32 %v1147
        %vm1155 = vmor %vm1153, %vm1154
        %v1156 = vsel %vm1155, %v1147, %v1152
        %v1157 = vmul.f32 %v1140, %v1156
        %v1159 = vperm.slane %v1134, 0
        %v1161 = vmul.f32 %v1157, %v1159
        %v1163 = vperm.slane %v1135, 0
        %v1165 = vadd.f32 %v1161, %v1163
        %v1166 = vpack.c.bf16 %v1165, %v1165
        %v1167 = vld [vmem:[#allocation11] sm:$0xf]
        %v1168 = vld [vmem:[#allocation11 + $0x4] sm:$0xf]
        %v1169 = vld [vmem:[#allocation11 + $0x8] sm:$0xf]
        %v1170 = vld [vmem:[#allocation11 + $0xc] sm:$0xf]
        %v1171 = vld [vmem:[%s13] sm:$0x1]
        %v1173 = vperm.slane %v1171, 0
        %v1179 = vunpack.c.l.b16 %v1167
        %v1180 = vunpack.c.l.b16 %v1168
        %v1181 = vunpack.c.l.b16 %v1169
        %v1182 = vunpack.c.l.b16 %v1170
        %v1183 = vpack.c.b16 %v1180, %v1179
        %v1184 = vpack.c.b16 %v1182, %v1181
        %v1188 = vsel %vm752, %v1166, 0
        %1190 = vmatpush.bf16.msra.mxu0 0
        %1191 = vmatpush.bf16.msra.mxu0 0
        %1192 = vmatpush.bf16.msra.mxu0 0
        %1193 = vmatpush.bf16.msra.mxu0 0
        %1194 = vmatpush.bf16.msra.mxu0 0
        %1195 = vmatpush.bf16.msra.mxu0 0
        %1196 = vmatpush.bf16.msra.mxu0 %v1184
        %1197 = vmatpush.bf16.msra.mxu0 %v1183
        %1198 = vmatmul.bf16.gmra.mxu0 %v1188
        %v1199 = vpop.f32.mrf.mxu0
        %v1200 = vadd.f32 %v1173, %v1199
        %v1201 = vpop.f32.mrf.mxu0
        %1202 = vdwg.mxu0
        %v1203 = vmul.f32 %v1200, 0.5
        %v1204 = vmul.f32 %v1200, 0.044715
        %v1205 = vmul.f32 %v1204, %v1200
        %v1206 = vmul.f32 %v1205, %v1200
        %v1207 = vadd.f32 %v1200, %v1206
        %v1208 = vmul.f32 %v1207, 0.7978846
        %v1209 = vtanh.pop %v1208
        %v1210 = vadd.f32 %v1209, 1.0
        %v1211 = vmul.f32 %v1203, %v1210
        %v1212 = vpack.c.bf16 %v1211, %v1211
        %v1213 = vld [vmem:[%s14] sm:$0xf]
        %v1214 = vld [vmem:[%s14 + $0x4] sm:$0xf]
        %v1215 = vld [vmem:[%s14 + $0x8] sm:$0xf]
        %v1216 = vld [vmem:[%s14 + $0xc] sm:$0xf]
        %v1217 = vld [vmem:[%s14 + $0x10] sm:$0xf]
        %v1218 = vld [vmem:[%s14 + $0x14] sm:$0xf]
        %v1219 = vld [vmem:[%s14 + $0x18] sm:$0xf]
        %v1220 = vld [vmem:[%s14 + $0x1c] sm:$0xf]
        %v1221 = vld [vmem:[%s15] sm:$0x1]
        %v1223 = vperm.slane %v1221, 0
        %v1233 = vunpack.c.l.b16 %v1213
        %v1234 = vunpack.c.l.b16 %v1214
        %v1235 = vunpack.c.l.b16 %v1215
        %v1236 = vunpack.c.l.b16 %v1216
        %v1237 = vunpack.c.l.b16 %v1217
        %v1238 = vunpack.c.l.b16 %v1218
        %v1239 = vunpack.c.l.b16 %v1219
        %v1240 = vunpack.c.l.b16 %v1220
        %v1241 = vpack.c.b16 %v1234, %v1233
        %v1242 = vpack.c.b16 %v1236, %v1235
        %v1243 = vpack.c.b16 %v1238, %v1237
        %v1244 = vpack.c.b16 %v1240, %v1239
        %vm1249 = vcmask 523264
        %v1251 = vsel %vm1249, %v1212, 0
        %1253 = vmatpush.bf16.msra.mxu0 0
        %1254 = vmatpush.bf16.msra.mxu0 0
        %1255 = vmatpush.bf16.msra.mxu0 0
        %1256 = vmatpush.bf16.msra.mxu0 0
        %1257 = vmatpush.bf16.msra.mxu0 %v1244
        %1258 = vmatpush.bf16.msra.mxu0 %v1243
        %1259 = vmatpush.bf16.msra.mxu0 %v1242
        %1260 = vmatpush.bf16.msra.mxu0 %v1241
        %1261 = vmatmul.bf16.gmra.mxu0 %v1251
        %v1262 = vpop.f32.mrf.mxu0
        %v1263 = vadd.f32 %v1223, %v1262
        %v1264 = vpop.f32.mrf.mxu0
        %1265 = vdwg.mxu0
        %v1266 = vadd.f32 %v1133, %v1263
        %1267 = vst.msk [vmem:[%s614] sm:$0xff] %vm752, %v1266
        %s1268 = sand.u32 %s405, 1
        %s1269 = scalar_lea.sflag [#allocation8], %s1268
        %s1270 = sand.u32 %s405, 1
        %s1271 = smul.addr %s1270, 8
        %s1272 = scalar_lea.vmem [#allocation12], %s1271
        %s1273 = sand.u32 %s433, 1
        %s1274 = scalar_lea.sflag [#allocation14], %s1273
        %s1275 = sand.u32 %s433, 1
        %s1276 = smul.addr %s1275, 16
        %s1277 = scalar_lea.vmem [#allocation13], %s1276
        // Predicated region
        $region101: #{tpu_custom_call.1} parent=83 // pred_check
          %p1278 = pneg %p415
        $region102: #{tpu_custom_call.1} parent=83 // pred_check_branch
          %1280 = sbr.rel (%p1278) target = $region104
        $region103: #{tpu_custom_call.1} parent=83 // pred_region
          %1282 = vsyncadd %s1269, 0
          %s1283 = sadd.s32 %s42, %s41
          %s1284 = smul.addr %s1283, 8
          %s1285 = scalar_lea.hbm %s16, %s1284
          %s1287 = sshll.u32 %s1272, 4
          %s1288 = int_to_ptr.vmem [resolvable:$true] %s1287
          %s1289 = sshll.u32 %s1285, 4
          %s1290 = int_to_ptr.hbm [resolvable:$true] %s1289
          %1292 = dma.vmem_to_hbm [thread:$0]  %s1288, 128, %s1290, %s1269
        $region104: #{tpu_custom_call.1} parent=83 // pred_fallthru
          _
        // Predicated region
        $region105: #{tpu_custom_call.1} parent=83 // pred_check
          %p1293 = pneg %p443
        $region106: #{tpu_custom_call.1} parent=83 // pred_check_branch
          %1295 = sbr.rel (%p1293) target = $region108
        $region107: #{tpu_custom_call.1} parent=83 // pred_region
          %1297 = vsyncadd %s1274, 0
          %s1298 = smul.addr %s41, 4
          %s1299 = sadd.s32 %s42, %s1298
          %s1300 = smul.addr %s1299, 4
          %s1301 = scalar_lea.hbm %s17, %s1300
          %s1302 = sshll.u32 %s1277, 4
          %s1303 = int_to_ptr.vmem [resolvable:$true] %s1302
          %s1304 = sshll.u32 %s1301, 4
          %s1305 = int_to_ptr.hbm [resolvable:$true] %s1304
          %1310 = dma.vmem_to_hbm [thread:$0]  %s1303, 256, %s1305, %s1274, 64, 64, 4
        $region108: #{tpu_custom_call.1} parent=83 // pred_fallthru
          _
      $region84: #{tpu_custom_call.1} parent=5 // pred_fallthru
        _
      %p1311 = scmp.le.s32.totalorder 2, %s32
      // Predicated region
      $region109: #{tpu_custom_call.1} parent=5 // pred_check
        %p1312 = pneg %p1311
      $region110: #{tpu_custom_call.1} parent=5 // pred_check_branch
        %1314 = sbr.rel (%p1312) target = $region112
      $region111: #{tpu_custom_call.1} parent=5 // pred_region
        %s1315 = ssub.s32 %s32, 2
        // Predicated region
        $region113: #{tpu_custom_call.1} parent=111 // pred_check
          %p1316 = pneg %p421
        $region114: #{tpu_custom_call.1} parent=111 // pred_check_branch
          %1318 = sbr.rel (%p1316) target = $region116
        $region115: #{tpu_custom_call.1} parent=111 // pred_region
          %s1319 = sand.u32 %s406, 1
          %s1320 = scalar_lea.sflag [#allocation8], %s1319
          %s1321 = sand.u32 %s406, 1
          %s1322 = smul.addr %s1321, 8
          %s1323 = scalar_lea.vmem [#allocation12], %s1322
          %1325 = dma.done %s1320, 128
        $region116: #{tpu_custom_call.1} parent=111 // pred_fallthru
          _
        // Predicated region
        $region117: #{tpu_custom_call.1} parent=111 // pred_check
          %p1326 = pneg %p449
        $region118: #{tpu_custom_call.1} parent=111 // pred_check_branch
          %1328 = sbr.rel (%p1326) target = $region120
        $region119: #{tpu_custom_call.1} parent=111 // pred_region
          %s1329 = sand.u32 %s434, 1
          %s1330 = scalar_lea.sflag [#allocation14], %s1329
          %s1331 = sand.u32 %s434, 1
          %s1332 = smul.addr %s1331, 16
          %s1333 = scalar_lea.vmem [#allocation13], %s1332
          %1335 = dma.done %s1330, 256
        $region120: #{tpu_custom_call.1} parent=111 // pred_fallthru
          _
      $region112: #{tpu_custom_call.1} parent=5 // pred_fallthru
        _
    $region6: #{tpu_custom_call.1} parent=1 // loop_footer
      %s36 = sadd.s32 1, %s32
    $region7: #{tpu_custom_call.1} parent=1 // loop_footer_branch
      %31 = sbr.rel target = $region3
    $region8: #{tpu_custom_call.1} parent=1 // loop_exit
      _
    %1336 = vsyncpa [#allocation7], 1
    %s1337 = scalar_lea.sflag [#allocation7], 1
    %1338 = vsyncpa %s1337, 1
    %1339 = vsyncpa [#allocation10], 1
    %1340 = vsyncpa [#allocation8], 1
    %s1341 = scalar_lea.sflag [#allocation8], 1
    %1342 = vsyncpa %s1341, 1
    %1343 = vsyncpa [#allocation14], 1
    %s1344 = scalar_lea.sflag [#allocation14], 1
    %1345 = vsyncpa %s1344, 1

</llo_original>
